<compile_context>
chip_gen: v7x
topology: tpu7x:2x2x1
jax: 0.10.0
libtpu: 0.0.40
codegen_flags: <defaults>
</compile_context>

<pallas_src>
import math

import jax
import jax.numpy as jnp
from jax import lax
from jax.experimental import pallas as pl
from jax.experimental.pallas import tpu as pltpu

# ----------------------------- model config ---------------------------------
VOCAB_SIZE = 64
EMBEDDING_SIZE = 32
HIDDEN_SIZE = 32          # must equal EMBEDDING_SIZE for the skip connection
WINDOW_SIZE = 9           # sequence length is window_size - 1 = 8
SEQ_LEN = WINDOW_SIZE - 1
NUM_HEADS = 4
HEAD_DIM = HIDDEN_SIZE // NUM_HEADS
LN_EPS = 1e-5             # torch nn.LayerNorm default eps

LANE = 128                # lane-dense padded feature width
MAX_BLOCK_ROWS = 512      # max M = tb * SEQ_LEN rows per grid step

assert HIDDEN_SIZE == EMBEDDING_SIZE

# packed-weight row offsets inside the single (416, 128) weight tensor
ROW_TABLE = 0                         # word embedding table        (64, 128)
ROW_TW = ROW_TABLE + VOCAB_SIZE       # table @ [Wq|Wk|Wv]          (64, 128)
ROW_WO = ROW_TW + VOCAB_SIZE          # Wo   (real 32x32)           (32, 128)
ROW_W1 = ROW_WO + HIDDEN_SIZE         # W1   (padded)               (128,128)
ROW_W2 = ROW_W1 + LANE                # W2   (padded)               (128,128)
W_ROWS = ROW_W2 + LANE                # = 416

# packed-bias row indices inside the single (8, 128) bias tensor
B_QKV, B_O, B_LNG, B_LNB, B_1, B_2 = 0, 1, 2, 3, 4, 5
B_ROWS = 8
POS_ROWS = 2 * SEQ_LEN                # rows 0:8 = pos emb, rows 8:16 = pos@Wqkv


# ------------------------------- kernel -------------------------------------
def lm_kernel(ids_ref,     # (M, 1)       int32  word ids for this block
              pos_ref,     # (16, 128)    f32    [pos_emb ; pos @ Wqkv]  (padded)
              w_ref,       # (416, 128)   f32    packed weight matrices
              b_ref,       # (8, 128)     f32    packed biases / LN params
              out_ref):    # (M//2, 128)  f32    two tokens' logits per row
    half = out_ref.shape[0]             # M // 2               (static)
    m = half * 2                        # tb * SEQ_LEN
    tb = m // SEQ_LEN

    biases = b_ref[...]                 # (8, 128)
    pos_all = pos_ref[...]              # (16, 128)
    pos_x = pos_all[:SEQ_LEN, :]        # (8, 128)  position embeddings
    pos_qkv = pos_all[SEQ_LEN:, :]      # (8, 128)  pos @ [Wq|Wk|Wv]

    # --- embedding + fused QKV: two K=64 matmuls sharing the one-hot operand ---
    ids = ids_ref[...]                                            # (M, 1) int32
    onehot = (ids == lax.broadcasted_iota(jnp.int32, (m, VOCAB_SIZE), 1)
              ).astype(jnp.float32)                               # (M, V)
    table = w_ref[pl.ds(ROW_TABLE, VOCAB_SIZE), :]                # (64, 128)
    tw = w_ref[pl.ds(ROW_TW, VOCAB_SIZE), :]                      # (64, 128)
    x_w = jnp.dot(onehot, table, preferred_element_type=jnp.float32)   # (M,128)
    q_w = jnp.dot(onehot, tw, preferred_element_type=jnp.float32)      # (M,128)

    x = (x_w.reshape(tb, SEQ_LEN, LANE) + pos_x[None, :, :]).reshape(m, LANE)
    qkv = ((q_w.reshape(tb, SEQ_LEN, LANE) + pos_qkv[None, :, :]).reshape(m, LANE)
           + biases[B_QKV:B_QKV + 1, :])                          # (M, 128)

    # --- multi-head attention: heads batched into one softmax + one K=32 proj ---
    q3 = qkv[:, 0:HIDDEN_SIZE].reshape(tb, SEQ_LEN, HIDDEN_SIZE)
    k3 = qkv[:, HIDDEN_SIZE:2 * HIDDEN_SIZE].reshape(tb, SEQ_LEN, HIDDEN_SIZE)
    v3 = qkv[:, 2 * HIDDEN_SIZE:3 * HIDDEN_SIZE].reshape(tb, SEQ_LEN, HIDDEN_SIZE)

    scale = 1.0 / math.sqrt(HEAD_DIM)
    s_heads = [jnp.einsum('bsd,btd->bst',
                          q3[..., h * HEAD_DIM:(h + 1) * HEAD_DIM],
                          k3[..., h * HEAD_DIM:(h + 1) * HEAD_DIM],
                          preferred_element_type=jnp.float32)
               for h in range(NUM_HEADS)]
    s_all = jnp.concatenate(s_heads, axis=1) * scale              # (tb, H*S, S)
    s_max = jnp.max(s_all, axis=-1, keepdims=True)
    p_all = jnp.exp(s_all - s_max)
    p_all = p_all * pl.reciprocal(jnp.sum(p_all, axis=-1, keepdims=True),
                                  approx=True)                    # one softmax

    ctx_heads = [jnp.einsum('bst,btd->bsd',
                            p_all[:, h * SEQ_LEN:(h + 1) * SEQ_LEN, :],
                            v3[..., h * HEAD_DIM:(h + 1) * HEAD_DIM],
                            preferred_element_type=jnp.float32)
                 for h in range(NUM_HEADS)]
    ctx = jnp.concatenate(ctx_heads, axis=-1).reshape(m, HIDDEN_SIZE)   # (M, 32)

    w_o = w_ref[pl.ds(ROW_WO, HIDDEN_SIZE), :]                    # (32, 128)
    attn = (jnp.dot(ctx, w_o, preferred_element_type=jnp.float32)
            + biases[B_O:B_O + 1, :])                             # (M, 128)

    # --- residual + LayerNorm (over the 32 real features only) ---
    skip = attn + x                                               # pad cols are 0
    feat_mask = lax.broadcasted_iota(jnp.int32, (1, LANE), 1) < HIDDEN_SIZE
    mean = jnp.sum(skip, axis=-1, keepdims=True) * (1.0 / HIDDEN_SIZE)
    cen = jnp.where(feat_mask, skip - mean, 0.0)
    var = jnp.sum(cen * cen, axis=-1, keepdims=True) * (1.0 / HIDDEN_SIZE)
    normed = (cen * lax.rsqrt(var + LN_EPS) * biases[B_LNG:B_LNG + 1, :]
              + biases[B_LNB:B_LNB + 1, :])

    # --- classifier MLP: Linear -> ReLU -> Linear ---
    w_1 = w_ref[pl.ds(ROW_W1, LANE), :]
    h1 = jnp.maximum(jnp.dot(normed, w_1, preferred_element_type=jnp.float32)
                     + biases[B_1:B_1 + 1, :], 0.0)
    w_2 = w_ref[pl.ds(ROW_W2, LANE), :]
    logits = (jnp.dot(h1, w_2, preferred_element_type=jnp.float32)
              + biases[B_2:B_2 + 1, :])                           # (M, 128), cols 64: are 0

    # --- pack two tokens per 128-lane output row (halves the writeback) ---
    top = logits[:half, :]                                        # tokens [0, half)
    bot = logits[half:, :]                                        # tokens [half, M)
    out_ref[...] = top + pltpu.roll(bot, shift=VOCAB_SIZE, axis=1)


# ------------------------------ host helpers ---------------------------------
def _pad_to(x, rows, cols):
    x = jnp.asarray(x, jnp.float32)
    out = jnp.zeros((rows, cols), jnp.float32)
    return out.at[:x.shape[0], :x.shape[1]].set(x)


def _num_tensorcores():
    """Best-effort TensorCore count per device (v7x has 2, v5e/v6e have 1)."""
    try:
        kind = jax.devices()[0].device_kind.lower()
    except Exception:
        return 1
    return 2 if "v7" in kind else 1


def _plan_grid(batch, num_cores):
    """Pick (grid, tb, padded_batch): as few grid steps as possible (one per
    TensorCore), with M = tb*SEQ_LEN capped at MAX_BLOCK_ROWS and tb even so
    the packed (M/2, 128) output block stays 8-row aligned."""
    cap = max(2, MAX_BLOCK_ROWS // SEQ_LEN)          # batch rows per block
    grid = max(num_cores, -(-batch // cap))          # ceil(batch / cap)
    tb = -(-batch // grid)                           # ceil(batch / grid)
    if tb % 2:
        tb += 1
    return grid, tb, grid * tb


def prepare_params(params):
    """One-time packing of weights/biases/position tables (hoisted out of the
    per-call jit)."""
    w_qkv = jnp.concatenate([params["wq"], params["wk"], params["wv"]],
                            axis=1)                                  # (32, 96)
    table = jnp.asarray(params["word_embedding"], jnp.float32)        # (64, 32)
    tw = table @ w_qkv                                                # (64, 96)

    big_w = jnp.concatenate([
        _pad_to(table, VOCAB_SIZE, LANE),
        _pad_to(tw, VOCAB_SIZE, LANE),
        _pad_to(params["wo"], HIDDEN_SIZE, LANE),
        _pad_to(params["w1"], LANE, LANE),
        _pad_to(params["w2"], LANE, LANE),
    ], axis=0)
    assert big_w.shape == (W_ROWS, LANE)

    b_qkv = jnp.concatenate([params["bq"], params["bk"], params["bv"]], axis=1)
    rows = [b_qkv, params["bo"], params["ln_gamma"], params["ln_beta"],
            params["b1"], params["b2"]]
    big_b = jnp.concatenate([_pad_to(r, 1, LANE) for r in rows], axis=0)
    big_b = jnp.concatenate(
        [big_b, jnp.zeros((B_ROWS - big_b.shape[0], LANE), jnp.float32)], axis=0)

    pos = jnp.asarray(params["position_embedding"], jnp.float32)[:SEQ_LEN]  # (8,32)
    pos_qkv = pos @ w_qkv                                                    # (8,96)
    pos_pack = jnp.concatenate([_pad_to(pos, SEQ_LEN, LANE),
                                _pad_to(pos_qkv, SEQ_LEN, LANE)], axis=0)    # (16,128)

    return jax.device_put(big_w), jax.device_put(big_b), jax.device_put(pos_pack)


@jax.jit
def language_model_forward(word_ids, big_w, big_b, pos_pack):
    """word_ids: [B, S] int -> logits [B, S, V] fp32."""
    B, S = word_ids.shape
    assert S == SEQ_LEN

    grid, tb, b_pad = _plan_grid(B, _num_tensorcores())
    m = tb * SEQ_LEN                               # rows per block
    half = m // 2                                  # packed output rows per block

    ids = word_ids.astype(jnp.int32)
    if b_pad > B:
        ids = jnp.concatenate(
            [ids, jnp.zeros((b_pad - B, SEQ_LEN), jnp.int32)], axis=0)
    ids_flat = ids.reshape(b_pad * SEQ_LEN, 1)

    in_specs = [
        pl.BlockSpec((m, 1), lambda g: (g, 0)),            # word ids (per block)
        pl.BlockSpec((POS_ROWS, LANE), lambda g: (0, 0)),   # pos tables (shared)
        pl.BlockSpec((W_ROWS, LANE), lambda g: (0, 0)),     # packed weights (shared)
        pl.BlockSpec((B_ROWS, LANE), lambda g: (0, 0)),     # packed biases (shared)
    ]
    out_specs = pl.BlockSpec((half, LANE), lambda g: (g, 0))

    flops = int(2 * b_pad * SEQ_LEN * (2 * VOCAB_SIZE * LANE
                                       + HIDDEN_SIZE * LANE
                                       + 2 * LANE * LANE
                                       + 2 * SEQ_LEN * HIDDEN_SIZE))
    transcendentals = int(b_pad * SEQ_LEN * (NUM_HEADS * SEQ_LEN + 2))
    bytes_accessed = int(b_pad * SEQ_LEN * 4
                         + (POS_ROWS + W_ROWS + B_ROWS) * LANE * 4
                         + b_pad * SEQ_LEN * LANE * 2)      # packed logits out

    packed = pl.pallas_call(
        lm_kernel,
        out_shape=jax.ShapeDtypeStruct((b_pad * SEQ_LEN // 2, LANE), jnp.float32),
        grid_spec=pltpu.PrefetchScalarGridSpec(
            num_scalar_prefetch=0,
            grid=(grid,),
            in_specs=in_specs,
            out_specs=out_specs,
        ),
        compiler_params=pltpu.CompilerParams(
            dimension_semantics=("parallel",)),
        cost_estimate=pl.CostEstimate(flops=flops,
                                      transcendentals=transcendentals,
                                      bytes_accessed=bytes_accessed),
    )(ids_flat, pos_pack, big_w, big_b)

    # unpack: (b_pad*S/2, 128) -> (grid, half, 2, V) -> (b_pad, S, V)
    out = packed.reshape(grid, half, 2, VOCAB_SIZE)
    out = out.transpose(0, 2, 1, 3).reshape(b_pad, SEQ_LEN, VOCAB_SIZE)
    return out[:B]


# ------------------------ pure-JAX reference (for checking) ------------------
@jax.jit
def reference_forward(word_ids, params):
    B = word_ids.shape[0]
    pos_ids = jnp.arange(SEQ_LEN)
    x = (jnp.take(params["word_embedding"], word_ids, axis=0)
         + jnp.take(params["position_embedding"], pos_ids, axis=0)[None])
    q = x @ params["wq"] + params["bq"]
    k = x @ params["wk"] + params["bk"]
    v = x @ params["wv"] + params["bv"]

    def split(t):
        return t.reshape(B, SEQ_LEN, NUM_HEADS, HEAD_DIM).transpose(0, 2, 1, 3)

    qh, kh, vh = split(q), split(k), split(v)
    s = jnp.einsum('bhsd,bhtd->bhst', qh, kh) / (HEAD_DIM ** 0.5)
    p = jax.nn.softmax(s, axis=-1)
    ctx = jnp.einsum('bhst,bhtd->bhsd', p, vh).transpose(0, 2, 1, 3)
    ctx = ctx.reshape(B, SEQ_LEN, HIDDEN_SIZE)
    attn = ctx @ params["wo"] + params["bo"]
    skip = attn + x
    mean = skip.mean(-1, keepdims=True)
    var = ((skip - mean) ** 2).mean(-1, keepdims=True)
    normed = (skip - mean) * lax.rsqrt(var + LN_EPS) * params["ln_gamma"] + params["ln_beta"]
    h1 = jnp.maximum(normed @ params["w1"] + params["b1"], 0.0)
    return h1 @ params["w2"] + params["b2"]


# --------------------------- deterministic init ------------------------------
def init_params(key):
    ks = jax.random.split(key, 8)

    def dense(k, fan_in, fan_out):
        return (jax.random.normal(k, (fan_in, fan_out), jnp.float32)
                / jnp.sqrt(jnp.float32(fan_in)))

    D, H, V = EMBEDDING_SIZE, HIDDEN_SIZE, VOCAB_SIZE
    return {
        "word_embedding": jax.random.normal(ks[0], (V, D), jnp.float32) * 0.02,
        "position_embedding": jax.random.normal(ks[1], (WINDOW_SIZE, D),
                                                jnp.float32) * 0.02,
        "wq": dense(ks[2], D, H), "bq": jnp.zeros((1, H), jnp.float32),
        "wk": dense(ks[3], D, H), "bk": jnp.zeros((1, H), jnp.float32),
        "wv": dense(ks[4], D, H), "bv": jnp.zeros((1, H), jnp.float32),
        "wo": dense(ks[5], H, H), "bo": jnp.zeros((1, H), jnp.float32),
        "ln_gamma": jnp.ones((1, H), jnp.float32),
        "ln_beta": jnp.zeros((1, H), jnp.float32),
        "w1": dense(ks[6], H, H), "b1": jnp.zeros((1, H), jnp.float32),
        "w2": dense(ks[7], H, V), "b2": jnp.zeros((1, V), jnp.float32),
    }


# --------------------------------- main --------------------------------------
if __name__ == "__main__":
    key = jax.random.PRNGKey(0)
    k_param, k_ids = jax.random.split(key)

    params = init_params(k_param)
    big_w, big_b, pos_pack = prepare_params(params)   # packed once, outside jit

    batch = 4
    word_ids = jax.random.randint(k_ids, (batch, SEQ_LEN), 0, VOCAB_SIZE,
                                  dtype=jnp.int32)

    logits = language_model_forward(word_ids, big_w, big_b, pos_pack)
    jax.block_until_ready(logits)

    assert logits.shape == (batch, SEQ_LEN, VOCAB_SIZE)
    assert logits.dtype == jnp.float32
    assert bool(jnp.all(jnp.isfinite(logits)))

    ref = reference_forward(word_ids, params)
    max_err = float(jnp.max(jnp.abs(logits - ref)))
    assert max_err < 1e-2, f"mismatch vs reference: {max_err}"

    print("KERNEL_OK")
</pallas_src>

<mosaic_0001>
module attributes {stable_mosaic.version = 11 : i64} {
  func.func @lm_kernel(%arg0: i32, %arg1: memref<32x1xi32, #tpu.memory_space<vmem>>, %arg2: memref<16x128xf32, #tpu.memory_space<vmem>>, %arg3: memref<416x128xf32, #tpu.memory_space<vmem>>, %arg4: memref<8x128xf32, #tpu.memory_space<vmem>>, %arg5: memref<16x128xf32, #tpu.memory_space<vmem>>) attributes {dimension_semantics = [#tpu.dimension_semantics<parallel>], iteration_bounds = array<i64: 1>, scalar_prefetch = 0 : i64, scratch_operands = 0 : i64, tpu.core_type = #tpu.core_type<tc>, window_params = [{transform_indices = @transform_0, window_bounds = array<i64: 32, 1>}, {pipeline_mode = #tpu.pipeline_mode<synchronous>, transform_indices = @transform_1, window_bounds = array<i64: 16, 128>}, {pipeline_mode = #tpu.pipeline_mode<synchronous>, transform_indices = @transform_2, window_bounds = array<i64: 416, 128>}, {pipeline_mode = #tpu.pipeline_mode<synchronous>, transform_indices = @transform_3, window_bounds = array<i64: 8, 128>}, {transform_indices = @transform_4, window_bounds = array<i64: 16, 128>}]} {
    %c0 = arith.constant 0 : index
    %c0_0 = arith.constant 0 : index
    %0 = vector.load %arg4[%c0, %c0_0] : memref<8x128xf32, #tpu.memory_space<vmem>>, vector<8x128xf32>
    %c0_1 = arith.constant 0 : index
    %c0_2 = arith.constant 0 : index
    %1 = vector.load %arg2[%c0_1, %c0_2] : memref<16x128xf32, #tpu.memory_space<vmem>>, vector<16x128xf32>
    %2 = vector.extract_strided_slice %1 {offsets = [0, 0], sizes = [8, 128], strides = [1, 1]} : vector<16x128xf32> to vector<8x128xf32>
    %3 = vector.extract_strided_slice %1 {offsets = [8, 0], sizes = [8, 128], strides = [1, 1]} : vector<16x128xf32> to vector<8x128xf32>
    %c0_3 = arith.constant 0 : index
    %c0_4 = arith.constant 0 : index
    %4 = vector.load %arg1[%c0_3, %c0_4] : memref<32x1xi32, #tpu.memory_space<vmem>>, vector<32x1xi32>
    %5 = tpu.iota {dimensions = array<i32: 1>} : vector<32x64xi32>
    %6 = vector.broadcast %4 : vector<32x1xi32> to vector<32x64xi32>
    %7 = arith.cmpi eq, %6, %5 : vector<32x64xi32>
    %8 = arith.extui %7 : vector<32x64xi1> to vector<32x64xi32>
    %9 = arith.sitofp %8 : vector<32x64xi32> to vector<32x64xf32>
    %c0_5 = arith.constant 0 : index
    %c0_6 = arith.constant 0 : index
    %10 = vector.load %arg3[%c0_5, %c0_6] : memref<416x128xf32, #tpu.memory_space<vmem>>, vector<64x128xf32>
    %c64 = arith.constant 64 : index
    %c0_7 = arith.constant 0 : index
    %11 = vector.load %arg3[%c64, %c0_7] : memref<416x128xf32, #tpu.memory_space<vmem>>, vector<64x128xf32>
    %cst = arith.constant dense<0.000000e+00> : vector<32x128xf32>
    %12 = tpu.matmul %9, %10, %cst {dimension_numbers = #tpu.dot_dimension_numbers<[1], [0], [0], [1], [0, 0, 1, 1], [], []>} : vector<32x64xf32>, vector<64x128xf32>, vector<32x128xf32> -> vector<32x128xf32>
    %cst_8 = arith.constant dense<0.000000e+00> : vector<32x128xf32>
    %13 = tpu.matmul %9, %11, %cst_8 {dimension_numbers = #tpu.dot_dimension_numbers<[1], [0], [0], [1], [0, 0, 1, 1], [], []>} : vector<32x64xf32>, vector<64x128xf32>, vector<32x128xf32> -> vector<32x128xf32>
    %14 = vector.shape_cast %12 : vector<32x128xf32> to vector<4x8x128xf32>
    %15 = vector.shape_cast %2 : vector<8x128xf32> to vector<1x8x128xf32>
    %16 = vector.broadcast %15 : vector<1x8x128xf32> to vector<4x8x128xf32>
    %17 = arith.addf %14, %16 : vector<4x8x128xf32>
    %18 = vector.shape_cast %17 : vector<4x8x128xf32> to vector<32x128xf32>
    %19 = vector.shape_cast %13 : vector<32x128xf32> to vector<4x8x128xf32>
    %20 = vector.shape_cast %3 : vector<8x128xf32> to vector<1x8x128xf32>
    %21 = vector.broadcast %20 : vector<1x8x128xf32> to vector<4x8x128xf32>
    %22 = arith.addf %19, %21 : vector<4x8x128xf32>
    %23 = vector.shape_cast %22 : vector<4x8x128xf32> to vector<32x128xf32>
    %24 = vector.extract_strided_slice %0 {offsets = [0, 0], sizes = [1, 128], strides = [1, 1]} : vector<8x128xf32> to vector<1x128xf32>
    %25 = vector.broadcast %24 : vector<1x128xf32> to vector<32x128xf32>
    %26 = arith.addf %23, %25 : vector<32x128xf32>
    %27 = vector.extract_strided_slice %26 {offsets = [0, 0], sizes = [32, 32], strides = [1, 1]} : vector<32x128xf32> to vector<32x32xf32>
    %28 = vector.shape_cast %27 : vector<32x32xf32> to vector<4x8x32xf32>
    %29 = vector.extract_strided_slice %26 {offsets = [0, 32], sizes = [32, 32], strides = [1, 1]} : vector<32x128xf32> to vector<32x32xf32>
    %30 = vector.shape_cast %29 : vector<32x32xf32> to vector<4x8x32xf32>
    %31 = vector.extract_strided_slice %26 {offsets = [0, 64], sizes = [32, 32], strides = [1, 1]} : vector<32x128xf32> to vector<32x32xf32>
    %32 = vector.shape_cast %31 : vector<32x32xf32> to vector<4x8x32xf32>
    %33 = vector.extract_strided_slice %28 {offsets = [0, 0, 0], sizes = [4, 8, 8], strides = [1, 1, 1]} : vector<4x8x32xf32> to vector<4x8x8xf32>
    %34 = vector.extract_strided_slice %30 {offsets = [0, 0, 0], sizes = [4, 8, 8], strides = [1, 1, 1]} : vector<4x8x32xf32> to vector<4x8x8xf32>
    "tpu.trace_start"() <{level = 10 : i32, message = "bsd,btd->bst"}> : () -> ()
    %cst_9 = arith.constant dense<0.000000e+00> : vector<4x8x8xf32>
    %35 = tpu.matmul %33, %34, %cst_9 {dimension_numbers = #tpu.dot_dimension_numbers<[2], [2], [1], [1], [0, 0, 0, 1, 1, 1], [0], [0]>} : vector<4x8x8xf32>, vector<4x8x8xf32>, vector<4x8x8xf32> -> vector<4x8x8xf32>
    "tpu.trace_stop"() : () -> ()
    %36 = vector.extract_strided_slice %28 {offsets = [0, 0, 8], sizes = [4, 8, 8], strides = [1, 1, 1]} : vector<4x8x32xf32> to vector<4x8x8xf32>
    %37 = vector.extract_strided_slice %30 {offsets = [0, 0, 8], sizes = [4, 8, 8], strides = [1, 1, 1]} : vector<4x8x32xf32> to vector<4x8x8xf32>
    "tpu.trace_start"() <{level = 10 : i32, message = "bsd,btd->bst"}> : () -> ()
    %cst_10 = arith.constant dense<0.000000e+00> : vector<4x8x8xf32>
    %38 = tpu.matmul %36, %37, %cst_10 {dimension_numbers = #tpu.dot_dimension_numbers<[2], [2], [1], [1], [0, 0, 0, 1, 1, 1], [0], [0]>} : vector<4x8x8xf32>, vector<4x8x8xf32>, vector<4x8x8xf32> -> vector<4x8x8xf32>
    "tpu.trace_stop"() : () -> ()
    %39 = vector.extract_strided_slice %28 {offsets = [0, 0, 16], sizes = [4, 8, 8], strides = [1, 1, 1]} : vector<4x8x32xf32> to vector<4x8x8xf32>
    %40 = vector.extract_strided_slice %30 {offsets = [0, 0, 16], sizes = [4, 8, 8], strides = [1, 1, 1]} : vector<4x8x32xf32> to vector<4x8x8xf32>
    "tpu.trace_start"() <{level = 10 : i32, message = "bsd,btd->bst"}> : () -> ()
    %cst_11 = arith.constant dense<0.000000e+00> : vector<4x8x8xf32>
    %41 = tpu.matmul %39, %40, %cst_11 {dimension_numbers = #tpu.dot_dimension_numbers<[2], [2], [1], [1], [0, 0, 0, 1, 1, 1], [0], [0]>} : vector<4x8x8xf32>, vector<4x8x8xf32>, vector<4x8x8xf32> -> vector<4x8x8xf32>
    "tpu.trace_stop"() : () -> ()
    %42 = vector.extract_strided_slice %28 {offsets = [0, 0, 24], sizes = [4, 8, 8], strides = [1, 1, 1]} : vector<4x8x32xf32> to vector<4x8x8xf32>
    %43 = vector.extract_strided_slice %30 {offsets = [0, 0, 24], sizes = [4, 8, 8], strides = [1, 1, 1]} : vector<4x8x32xf32> to vector<4x8x8xf32>
    "tpu.trace_start"() <{level = 10 : i32, message = "bsd,btd->bst"}> : () -> ()
    %cst_12 = arith.constant dense<0.000000e+00> : vector<4x8x8xf32>
    %44 = tpu.matmul %42, %43, %cst_12 {dimension_numbers = #tpu.dot_dimension_numbers<[2], [2], [1], [1], [0, 0, 0, 1, 1, 1], [0], [0]>} : vector<4x8x8xf32>, vector<4x8x8xf32>, vector<4x8x8xf32> -> vector<4x8x8xf32>
    "tpu.trace_stop"() : () -> ()
    %45 = tpu.concatenate %35, %38, %41, %44 in 1 : vector<4x8x8xf32>, vector<4x8x8xf32>, vector<4x8x8xf32>, vector<4x8x8xf32> -> vector<4x32x8xf32>
    %cst_13 = arith.constant 0.353553385 : f32
    %46 = vector.broadcast %cst_13 : f32 to vector<4x32x8xf32>
    %47 = arith.mulf %45, %46 : vector<4x32x8xf32>
    %cst_14 = arith.constant dense<0xFF800000> : vector<4x32xf32>
    %48 = vector.multi_reduction <maximumf>, %47, %cst_14 [2] : vector<4x32x8xf32> to vector<4x32xf32>
    %49 = vector.shape_cast %48 : vector<4x32xf32> to vector<4x32x1xf32>
    %50 = vector.broadcast %49 : vector<4x32x1xf32> to vector<4x32x8xf32>
    %51 = arith.subf %47, %50 : vector<4x32x8xf32>
    %52 = math.exp %51 : vector<4x32x8xf32>
    %cst_15 = arith.constant dense<0.000000e+00> : vector<4x32xf32>
    %53 = vector.multi_reduction <add>, %52, %cst_15 [2] : vector<4x32x8xf32> to vector<4x32xf32>
    %54 = vector.shape_cast %53 : vector<4x32xf32> to vector<4x32x1xf32>
    %55 = tpu.reciprocal %54 {approx = true} : vector<4x32x1xf32> -> vector<4x32x1xf32>
    %56 = vector.broadcast %55 : vector<4x32x1xf32> to vector<4x32x8xf32>
    %57 = arith.mulf %52, %56 : vector<4x32x8xf32>
    %58 = vector.extract_strided_slice %57 {offsets = [0, 0, 0], sizes = [4, 8, 8], strides = [1, 1, 1]} : vector<4x32x8xf32> to vector<4x8x8xf32>
    %59 = vector.extract_strided_slice %32 {offsets = [0, 0, 0], sizes = [4, 8, 8], strides = [1, 1, 1]} : vector<4x8x32xf32> to vector<4x8x8xf32>
    "tpu.trace_start"() <{level = 10 : i32, message = "bst,btd->bsd"}> : () -> ()
    %cst_16 = arith.constant dense<0.000000e+00> : vector<4x8x8xf32>
    %60 = tpu.matmul %58, %59, %cst_16 {dimension_numbers = #tpu.dot_dimension_numbers<[2], [1], [1], [2], [0, 0, 0, 1, 1, 2], [0], [0]>} : vector<4x8x8xf32>, vector<4x8x8xf32>, vector<4x8x8xf32> -> vector<4x8x8xf32>
    "tpu.trace_stop"() : () -> ()
    %61 = vector.extract_strided_slice %57 {offsets = [0, 8, 0], sizes = [4, 8, 8], strides = [1, 1, 1]} : vector<4x32x8xf32> to vector<4x8x8xf32>
    %62 = vector.extract_strided_slice %32 {offsets = [0, 0, 8], sizes = [4, 8, 8], strides = [1, 1, 1]} : vector<4x8x32xf32> to vector<4x8x8xf32>
    "tpu.trace_start"() <{level = 10 : i32, message = "bst,btd->bsd"}> : () -> ()
    %cst_17 = arith.constant dense<0.000000e+00> : vector<4x8x8xf32>
    %63 = tpu.matmul %61, %62, %cst_17 {dimension_numbers = #tpu.dot_dimension_numbers<[2], [1], [1], [2], [0, 0, 0, 1, 1, 2], [0], [0]>} : vector<4x8x8xf32>, vector<4x8x8xf32>, vector<4x8x8xf32> -> vector<4x8x8xf32>
    "tpu.trace_stop"() : () -> ()
    %64 = vector.extract_strided_slice %57 {offsets = [0, 16, 0], sizes = [4, 8, 8], strides = [1, 1, 1]} : vector<4x32x8xf32> to vector<4x8x8xf32>
    %65 = vector.extract_strided_slice %32 {offsets = [0, 0, 16], sizes = [4, 8, 8], strides = [1, 1, 1]} : vector<4x8x32xf32> to vector<4x8x8xf32>
    "tpu.trace_start"() <{level = 10 : i32, message = "bst,btd->bsd"}> : () -> ()
    %cst_18 = arith.constant dense<0.000000e+00> : vector<4x8x8xf32>
    %66 = tpu.matmul %64, %65, %cst_18 {dimension_numbers = #tpu.dot_dimension_numbers<[2], [1], [1], [2], [0, 0, 0, 1, 1, 2], [0], [0]>} : vector<4x8x8xf32>, vector<4x8x8xf32>, vector<4x8x8xf32> -> vector<4x8x8xf32>
    "tpu.trace_stop"() : () -> ()
    %67 = vector.extract_strided_slice %57 {offsets = [0, 24, 0], sizes = [4, 8, 8], strides = [1, 1, 1]} : vector<4x32x8xf32> to vector<4x8x8xf32>
    %68 = vector.extract_strided_slice %32 {offsets = [0, 0, 24], sizes = [4, 8, 8], strides = [1, 1, 1]} : vector<4x8x32xf32> to vector<4x8x8xf32>
    "tpu.trace_start"() <{level = 10 : i32, message = "bst,btd->bsd"}> : () -> ()
    %cst_19 = arith.constant dense<0.000000e+00> : vector<4x8x8xf32>
    %69 = tpu.matmul %67, %68, %cst_19 {dimension_numbers = #tpu.dot_dimension_numbers<[2], [1], [1], [2], [0, 0, 0, 1, 1, 2], [0], [0]>} : vector<4x8x8xf32>, vector<4x8x8xf32>, vector<4x8x8xf32> -> vector<4x8x8xf32>
    "tpu.trace_stop"() : () -> ()
    %70 = tpu.concatenate %60, %63, %66, %69 in 2 : vector<4x8x8xf32>, vector<4x8x8xf32>, vector<4x8x8xf32>, vector<4x8x8xf32> -> vector<4x8x32xf32>
    %71 = vector.shape_cast %70 : vector<4x8x32xf32> to vector<32x32xf32>
    %c128 = arith.constant 128 : index
    %c0_20 = arith.constant 0 : index
    %72 = vector.load %arg3[%c128, %c0_20] : memref<416x128xf32, #tpu.memory_space<vmem>>, vector<32x128xf32>
    %cst_21 = arith.constant dense<0.000000e+00> : vector<32x128xf32>
    %73 = tpu.matmul %71, %72, %cst_21 {dimension_numbers = #tpu.dot_dimension_numbers<[1], [0], [0], [1], [0, 0, 1, 1], [], []>} : vector<32x32xf32>, vector<32x128xf32>, vector<32x128xf32> -> vector<32x128xf32>
    %74 = vector.extract_strided_slice %0 {offsets = [1, 0], sizes = [1, 128], strides = [1, 1]} : vector<8x128xf32> to vector<1x128xf32>
    %75 = vector.broadcast %74 : vector<1x128xf32> to vector<32x128xf32>
    %76 = arith.addf %73, %75 : vector<32x128xf32>
    %77 = arith.addf %76, %18 : vector<32x128xf32>
    %78 = tpu.iota {dimensions = array<i32: 1>} : vector<1x128xi32>
    %c32_i32 = arith.constant 32 : i32
    %79 = vector.broadcast %c32_i32 : i32 to vector<1x128xi32>
    %80 = arith.cmpi slt, %78, %79 : vector<1x128xi32>
    %cst_22 = arith.constant dense<0.000000e+00> : vector<32xf32>
    %81 = vector.multi_reduction <add>, %77, %cst_22 [1] : vector<32x128xf32> to vector<32xf32>
    %82 = vector.shape_cast %81 : vector<32xf32> to vector<32x1xf32>
    %cst_23 = arith.constant 3.125000e-02 : f32
    %83 = vector.broadcast %cst_23 : f32 to vector<32x1xf32>
    %84 = arith.mulf %82, %83 : vector<32x1xf32>
    %85 = vector.broadcast %84 : vector<32x1xf32> to vector<32x128xf32>
    %86 = arith.subf %77, %85 : vector<32x128xf32>
    %cst_24 = arith.constant 0.000000e+00 : f32
    %87 = vector.shape_cast %80 : vector<1x128xi1> to vector<1x128xi1>
    %88 = vector.broadcast %87 : vector<1x128xi1> to vector<32x128xi1>
    %89 = vector.broadcast %cst_24 : f32 to vector<32x128xf32>
    %90 = arith.select %88, %86, %89 : vector<32x128xi1>, vector<32x128xf32>
    %91 = arith.mulf %90, %90 : vector<32x128xf32>
    %cst_25 = arith.constant dense<0.000000e+00> : vector<32xf32>
    %92 = vector.multi_reduction <add>, %91, %cst_25 [1] : vector<32x128xf32> to vector<32xf32>
    %93 = vector.shape_cast %92 : vector<32xf32> to vector<32x1xf32>
    %cst_26 = arith.constant 3.125000e-02 : f32
    %94 = vector.broadcast %cst_26 : f32 to vector<32x1xf32>
    %95 = arith.mulf %93, %94 : vector<32x1xf32>
    %cst_27 = arith.constant 9.99999974E-6 : f32
    %96 = vector.broadcast %cst_27 : f32 to vector<32x1xf32>
    %97 = arith.addf %95, %96 : vector<32x1xf32>
    %98 = math.rsqrt %97 : vector<32x1xf32>
    %99 = vector.broadcast %98 : vector<32x1xf32> to vector<32x128xf32>
    %100 = arith.mulf %90, %99 : vector<32x128xf32>
    %101 = vector.extract_strided_slice %0 {offsets = [2, 0], sizes = [1, 128], strides = [1, 1]} : vector<8x128xf32> to vector<1x128xf32>
    %102 = vector.broadcast %101 : vector<1x128xf32> to vector<32x128xf32>
    %103 = arith.mulf %100, %102 : vector<32x128xf32>
    %104 = vector.extract_strided_slice %0 {offsets = [3, 0], sizes = [1, 128], strides = [1, 1]} : vector<8x128xf32> to vector<1x128xf32>
    %105 = vector.broadcast %104 : vector<1x128xf32> to vector<32x128xf32>
    %106 = arith.addf %103, %105 : vector<32x128xf32>
    %c160 = arith.constant 160 : index
    %c0_28 = arith.constant 0 : index
    %107 = vector.load %arg3[%c160, %c0_28] : memref<416x128xf32, #tpu.memory_space<vmem>>, vector<128x128xf32>
    %cst_29 = arith.constant dense<0.000000e+00> : vector<32x128xf32>
    %108 = tpu.matmul %106, %107, %cst_29 {dimension_numbers = #tpu.dot_dimension_numbers<[1], [0], [0], [1], [0, 0, 1, 1], [], []>} : vector<32x128xf32>, vector<128x128xf32>, vector<32x128xf32> -> vector<32x128xf32>
    %109 = vector.extract_strided_slice %0 {offsets = [4, 0], sizes = [1, 128], strides = [1, 1]} : vector<8x128xf32> to vector<1x128xf32>
    %110 = vector.broadcast %109 : vector<1x128xf32> to vector<32x128xf32>
    %111 = arith.addf %108, %110 : vector<32x128xf32>
    %cst_30 = arith.constant 0.000000e+00 : f32
    %112 = vector.broadcast %cst_30 : f32 to vector<32x128xf32>
    %113 = arith.maximumf %111, %112 : vector<32x128xf32>
    %c288 = arith.constant 288 : index
    %c0_31 = arith.constant 0 : index
    %114 = vector.load %arg3[%c288, %c0_31] : memref<416x128xf32, #tpu.memory_space<vmem>>, vector<128x128xf32>
    %cst_32 = arith.constant dense<0.000000e+00> : vector<32x128xf32>
    %115 = tpu.matmul %113, %114, %cst_32 {dimension_numbers = #tpu.dot_dimension_numbers<[1], [0], [0], [1], [0, 0, 1, 1], [], []>} : vector<32x128xf32>, vector<128x128xf32>, vector<32x128xf32> -> vector<32x128xf32>
    %116 = vector.extract_strided_slice %0 {offsets = [5, 0], sizes = [1, 128], strides = [1, 1]} : vector<8x128xf32> to vector<1x128xf32>
    %117 = vector.broadcast %116 : vector<1x128xf32> to vector<32x128xf32>
    %118 = arith.addf %115, %117 : vector<32x128xf32>
    %119 = vector.extract_strided_slice %118 {offsets = [0, 0], sizes = [16, 128], strides = [1, 1]} : vector<32x128xf32> to vector<16x128xf32>
    %120 = vector.extract_strided_slice %118 {offsets = [16, 0], sizes = [16, 128], strides = [1, 1]} : vector<32x128xf32> to vector<16x128xf32>
    %c64_i32 = arith.constant 64 : i32
    %121 = tpu.dynamic_rotate %120 by %c64_i32 dim 1 : vector<16x128xf32>, i32 -> vector<16x128xf32>
    %122 = arith.addf %119, %121 : vector<16x128xf32>
    %c0_33 = arith.constant 0 : index
    %c0_34 = arith.constant 0 : index
    %123 = vector.load %arg5[%c0_33, %c0_34] : memref<16x128xf32, #tpu.memory_space<vmem>>, vector<16x128xf32>
    tpu.vector_store %arg5[%c0_33, %c0_34], %122 {strides = array<i32>} : memref<16x128xf32, #tpu.memory_space<vmem>>, vector<16x128xf32>,
    return
  }
  func.func @transform_0(%arg0: i32) -> (i32, i32) {
    %c0_i32 = arith.constant 0 : i32
    %c0_i32_0 = arith.constant 0 : i32
    return %arg0, %c0_i32 : i32, i32
  }
  func.func @transform_1(%arg0: i32) -> (i32, i32) {
    %c0_i32 = arith.constant 0 : i32
    %c0_i32_0 = arith.constant 0 : i32
    %c0_i32_1 = arith.constant 0 : i32
    return %c0_i32, %c0_i32_0 : i32, i32
  }
  func.func @transform_2(%arg0: i32) -> (i32, i32) {
    %c0_i32 = arith.constant 0 : i32
    %c0_i32_0 = arith.constant 0 : i32
    %c0_i32_1 = arith.constant 0 : i32
    return %c0_i32, %c0_i32_0 : i32, i32
  }
  func.func @transform_3(%arg0: i32) -> (i32, i32) {
    %c0_i32 = arith.constant 0 : i32
    %c0_i32_0 = arith.constant 0 : i32
    %c0_i32_1 = arith.constant 0 : i32
    return %c0_i32, %c0_i32_0 : i32, i32
  }
  func.func @transform_4(%arg0: i32) -> (i32, i32) {
    %c0_i32 = arith.constant 0 : i32
    %c0_i32_0 = arith.constant 0 : i32
    return %arg0, %c0_i32 : i32, i32
  }
}

</mosaic_0001>

<llo_original>
// kernel: language_model_forward.1
$region0: #{language_model_forward.1}
  #allocation0 [shape = 'u32[]', space=smem, size = 0x4, offset = 0x4, fixed_abs, tag = 'smem constant byte address 0x4 - core index']
  #allocation1 [shape = 'u32[144,128]{1,0:T(1,128)}', space=vmem, size = 0x12000, scoped, tag = 'internal scratch']
  %s0 = inlined_call_operand.vmem [shape: s32[32,1], index: 0, kind: input, shape index: {}]
  %s1 = inlined_call_operand.vmem [shape: f32[16,128], index: 1, kind: input, shape index: {}]
  %s2 = inlined_call_operand.hbm [shape: f32[416,128], index: 2, kind: input, shape index: {}]
  %s3 = inlined_call_operand.vmem [shape: f32[8,128], index: 3, kind: input, shape index: {}]
  %s4 = inlined_call_operand.vmem [shape: f32[16,128], index: 4, kind: output, shape index: {}]
  %s5 = sld [smem:[#allocation0]]
  $region30: #{language_model_forward.1} parent=0
    _
  %s7 = ssub.s32 1, %s5
  %s8 = scalar_select 0, %s7, %s5
  $region1: #{language_model_forward.1} parent=0
    #allocation2 [shape = 'u8[212992]{0}', space=vmem, size = 0x34000, scoped, tag = 'input window, operand 2, single buffered']
    #allocation3 [shape = 's32[1]{0}', space=sflag, size = 0x4, scoped, tag = 'scoped memory for language_model_forward.1']
    %9 = vsyncpa [#allocation3], 0
    // Predicated region
    $region2: #{language_model_forward.1} parent=1 // pred_check
      _
    $region3: #{language_model_forward.1} parent=1 // pred_check_branch
      %11 = sbr.rel (0) target = $region5
    $region4: #{language_model_forward.1} parent=1 // pred_region
      _
    $region5: #{language_model_forward.1} parent=1 // pred_fallthru
      _
    // Predicated region
    $region6: #{language_model_forward.1} parent=1 // pred_check
      _
    $region7: #{language_model_forward.1} parent=1 // pred_check_branch
      %13 = sbr.rel (0) target = $region9
    $region8: #{language_model_forward.1} parent=1 // pred_region
      _
    $region9: #{language_model_forward.1} parent=1 // pred_fallthru
      _
    // Predicated region
    $region10: #{language_model_forward.1} parent=1 // pred_check
      _
    $region11: #{language_model_forward.1} parent=1 // pred_check_branch
      %15 = sbr.rel (0) target = $region13
    $region12: #{language_model_forward.1} parent=1 // pred_region
      %s17 = ssub.s32 6656, 6656
      %18 = vsyncadd [#allocation3], %s17
      %s19 = sshll.u32 [#allocation2], 4
      %s20 = int_to_ptr.vmem [resolvable:$true] %s19
      %25 = dma.hbm_to_vmem [thread:$0]  %s2, 6656, %s20, [#allocation3], 128, 128, 8
    $region13: #{language_model_forward.1} parent=1 // pred_fallthru
      _
    // Predicated region
    $region14: #{language_model_forward.1} parent=1 // pred_check
      _
    $region15: #{language_model_forward.1} parent=1 // pred_check_branch
      %27 = sbr.rel (0) target = $region17
    $region16: #{language_model_forward.1} parent=1 // pred_region
      _
    $region17: #{language_model_forward.1} parent=1 // pred_fallthru
      _
    // Predicated region
    $region18: #{language_model_forward.1} parent=1 // pred_check
      _
    $region19: #{language_model_forward.1} parent=1 // pred_check_branch
      %29 = sbr.rel (0) target = $region21
    $region20: #{language_model_forward.1} parent=1 // pred_region
      %30 = dma.done [#allocation3], 6656
    $region21: #{language_model_forward.1} parent=1 // pred_fallthru
      _
    %v31 = vld [vmem:[%s3] sm:$0xff]
    %v32 = vld [vmem:[%s1] sm:$0xff]
    %v33 = vld [vmem:[%s1 + $0x8] sm:$0xff]
    %v34 = vld [vmem:[%s0] sm:$0xff]
    %v35 = vld [vmem:[%s0 + $0x8] sm:$0xff]
    %v36 = vld [vmem:[%s0 + $0x10] sm:$0xff]
    %v37 = vld [vmem:[%s0 + $0x18] sm:$0xff]
    %v38 = vlaneseq
    %v39 = vand.u32 %v38, 127
    %40 = vset.pattern.permute.xlu0 0
    %41 = vperm.xlu0 %40, %v34
    %v42 = vpop.permute.xlu0 %41
    %43 = vset.pattern.permute.xlu0 0
    %44 = vperm.xlu0 %43, %v35
    %v45 = vpop.permute.xlu0 %44
    %46 = vset.pattern.permute.xlu0 0
    %47 = vperm.xlu0 %46, %v36
    %v48 = vpop.permute.xlu0 %47
    %49 = vset.pattern.permute.xlu0 0
    %50 = vperm.xlu0 %49, %v37
    %v51 = vpop.permute.xlu0 %50
    %vm52 = vcmp.eq.s32.totalorder %v42, %v39
    %vm53 = vcmp.eq.s32.totalorder %v45, %v39
    %vm54 = vcmp.eq.s32.totalorder %v48, %v39
    %vm55 = vcmp.eq.s32.totalorder %v51, %v39
    %v56 = vsel %vm52, 1, 0
    %v57 = vsel %vm53, 1, 0
    %v58 = vsel %vm54, 1, 0
    %v59 = vsel %vm55, 1, 0
    %v60 = vcvt.s32.f32 %v56
    %v61 = vcvt.s32.f32 %v57
    %v62 = vcvt.s32.f32 %v58
    %v63 = vcvt.s32.f32 %v59
    %v64 = vld [vmem:[#allocation2] sm:$0xff]
    %v65 = vld [vmem:[#allocation2 + $0x8] sm:$0xff]
    %v66 = vld [vmem:[#allocation2 + $0x10] sm:$0xff]
    %v67 = vld [vmem:[#allocation2 + $0x18] sm:$0xff]
    %v68 = vld [vmem:[#allocation2 + $0x20] sm:$0xff]
    %v69 = vld [vmem:[#allocation2 + $0x28] sm:$0xff]
    %v70 = vld [vmem:[#allocation2 + $0x30] sm:$0xff]
    %v71 = vld [vmem:[#allocation2 + $0x38] sm:$0xff]
    %v72 = vld [vmem:[#allocation2 + $0x40] sm:$0xff]
    %v73 = vld [vmem:[#allocation2 + $0x48] sm:$0xff]
    %v74 = vld [vmem:[#allocation2 + $0x50] sm:$0xff]
    %v75 = vld [vmem:[#allocation2 + $0x58] sm:$0xff]
    %v76 = vld [vmem:[#allocation2 + $0x60] sm:$0xff]
    %v77 = vld [vmem:[#allocation2 + $0x68] sm:$0xff]
    %v78 = vld [vmem:[#allocation2 + $0x70] sm:$0xff]
    %v79 = vld [vmem:[#allocation2 + $0x78] sm:$0xff]
    %vm80 = vcmask 523264
    %v82 = vsel %vm80, %v60, 0
    %v85 = vsel %vm80, %v61, 0
    %v88 = vsel %vm80, %v62, 0
    %v91 = vsel %vm80, %v63, 0
    %93 = vmatprep.subr.mxu0 0.0
    %94 = vmatpush1.msra.mxu0 %v64
    %95 = vmatprep.subr.mxu0 0.0
    %96 = vmatpush1.msra.mxu0 %v65
    %97 = vmatprep.subr.mxu0 0.0
    %98 = vmatpush1.msra.mxu0 %v66
    %99 = vmatprep.subr.mxu0 0.0
    %100 = vmatpush1.msra.mxu0 %v67
    %101 = vmatprep.subr.mxu0 0.0
    %102 = vmatpush1.msra.mxu0 %v68
    %103 = vmatprep.subr.mxu0 0.0
    %104 = vmatpush1.msra.mxu0 %v69
    %105 = vmatprep.subr.mxu0 0.0
    %106 = vmatpush1.msra.mxu0 %v70
    %107 = vmatprep.subr.mxu0 0.0
    %108 = vmatpush1.msra.mxu0 %v71
    %109 = vmatprep.subr.mxu0 0.0
    %110 = vmatpush1.msra.mxu0 0.0
    %111 = vmatprep.subr.mxu0 0.0
    %112 = vmatpush1.msra.mxu0 0.0
    %113 = vmatprep.subr.mxu0 0.0
    %114 = vmatpush1.msra.mxu0 0.0
    %115 = vmatprep.subr.mxu0 0.0
    %116 = vmatpush1.msra.mxu0 0.0
    %117 = vmatprep.subr.mxu0 0.0
    %118 = vmatpush1.msra.mxu0 0.0
    %119 = vmatprep.subr.mxu0 0.0
    %120 = vmatpush1.msra.mxu0 0.0
    %121 = vmatprep.subr.mxu0 0.0
    %122 = vmatpush1.msra.mxu0 0.0
    %123 = vmatprep.subr.mxu0 0.0
    %124 = vmatpush1.msra.mxu0 0.0
    %125 = vmatprep.subr.mxu0 0.0
    %126 = vmatpush1.msra.mxu0 0.0
    %127 = vmatprep.subr.mxu0 0.0
    %128 = vmatpush1.msra.mxu0 0.0
    %129 = vmatprep.subr.mxu0 0.0
    %130 = vmatpush1.msra.mxu0 0.0
    %131 = vmatprep.subr.mxu0 0.0
    %132 = vmatpush1.msra.mxu0 0.0
    %133 = vmatprep.subr.mxu0 0.0
    %134 = vmatpush1.msra.mxu0 0.0
    %135 = vmatprep.subr.mxu0 0.0
    %136 = vmatpush1.msra.mxu0 0.0
    %137 = vmatprep.subr.mxu0 0.0
    %138 = vmatpush1.msra.mxu0 0.0
    %139 = vmatprep.subr.mxu0 0.0
    %140 = vmatpush1.msra.mxu0 0.0
    %141 = vmatprep.subr.mxu0 0.0
    %142 = vmatpush1.msra.mxu0 0.0
    %143 = vmatprep.subr.mxu0 0.0
    %144 = vmatpush1.msra.mxu0 0.0
    %145 = vmatprep.subr.mxu0 0.0
    %146 = vmatpush1.msra.mxu0 0.0
    %147 = vmatprep.subr.mxu0 0.0
    %148 = vmatpush1.msra.mxu0 0.0
    %149 = vmatprep.subr.mxu0 0.0
    %150 = vmatpush1.msra.mxu0 0.0
    %151 = vmatprep.subr.mxu0 0.0
    %152 = vmatpush1.msra.mxu0 0.0
    %153 = vmatprep.subr.mxu0 0.0
    %154 = vmatpush1.msra.mxu0 0.0
    %155 = vmatprep.subr.mxu0 0.0
    %156 = vmatpush1.msra.mxu0 0.0
    %157 = vmatprep.mubr.f32.mxu0 0.0
    %158 = vmatmul.mubr.f32.gmra.mrb[0].mxu0 %v82
    %v159 = vpop.f32.mrb[0].mxu0
    %v160 = vadd.f32 0.0, %v159
    %v161 = vpop.f32.mrb[0].mxu0
    %162 = vmatprep.mubr.f32.mxu0 0.0
    %163 = vmatmul.mubr.f32.gmra.mrb[0].mxu0 %v85
    %v164 = vpop.f32.mrb[0].mxu0
    %v165 = vadd.f32 0.0, %v164
    %v166 = vpop.f32.mrb[0].mxu0
    %167 = vmatprep.mubr.f32.mxu0 0.0
    %168 = vmatmul.mubr.f32.gmra.mrb[0].mxu0 %v88
    %v169 = vpop.f32.mrb[0].mxu0
    %v170 = vadd.f32 0.0, %v169
    %v171 = vpop.f32.mrb[0].mxu0
    %172 = vmatprep.mubr.f32.mxu0 0.0
    %173 = vmatmul.mubr.f32.gmra.mrb[0].mxu0 %v91
    %v174 = vpop.f32.mrb[0].mxu0
    %v175 = vadd.f32 0.0, %v174
    %v176 = vpop.f32.mrb[0].mxu0
    %177 = vdwg.mxu0
    %178 = vmatprep.subr.mxu0 0.0
    %179 = vmatpush1.msra.mxu0 %v72
    %180 = vmatprep.subr.mxu0 0.0
    %181 = vmatpush1.msra.mxu0 %v73
    %182 = vmatprep.subr.mxu0 0.0
    %183 = vmatpush1.msra.mxu0 %v74
    %184 = vmatprep.subr.mxu0 0.0
    %185 = vmatpush1.msra.mxu0 %v75
    %186 = vmatprep.subr.mxu0 0.0
    %187 = vmatpush1.msra.mxu0 %v76
    %188 = vmatprep.subr.mxu0 0.0
    %189 = vmatpush1.msra.mxu0 %v77
    %190 = vmatprep.subr.mxu0 0.0
    %191 = vmatpush1.msra.mxu0 %v78
    %192 = vmatprep.subr.mxu0 0.0
    %193 = vmatpush1.msra.mxu0 %v79
    %194 = vmatprep.subr.mxu0 0.0
    %195 = vmatpush1.msra.mxu0 0.0
    %196 = vmatprep.subr.mxu0 0.0
    %197 = vmatpush1.msra.mxu0 0.0
    %198 = vmatprep.subr.mxu0 0.0
    %199 = vmatpush1.msra.mxu0 0.0
    %200 = vmatprep.subr.mxu0 0.0
    %201 = vmatpush1.msra.mxu0 0.0
    %202 = vmatprep.subr.mxu0 0.0
    %203 = vmatpush1.msra.mxu0 0.0
    %204 = vmatprep.subr.mxu0 0.0
    %205 = vmatpush1.msra.mxu0 0.0
    %206 = vmatprep.subr.mxu0 0.0
    %207 = vmatpush1.msra.mxu0 0.0
    %208 = vmatprep.subr.mxu0 0.0
    %209 = vmatpush1.msra.mxu0 0.0
    %210 = vmatprep.subr.mxu0 0.0
    %211 = vmatpush1.msra.mxu0 0.0
    %212 = vmatprep.subr.mxu0 0.0
    %213 = vmatpush1.msra.mxu0 0.0
    %214 = vmatprep.subr.mxu0 0.0
    %215 = vmatpush1.msra.mxu0 0.0
    %216 = vmatprep.subr.mxu0 0.0
    %217 = vmatpush1.msra.mxu0 0.0
    %218 = vmatprep.subr.mxu0 0.0
    %219 = vmatpush1.msra.mxu0 0.0
    %220 = vmatprep.subr.mxu0 0.0
    %221 = vmatpush1.msra.mxu0 0.0
    %222 = vmatprep.subr.mxu0 0.0
    %223 = vmatpush1.msra.mxu0 0.0
    %224 = vmatprep.subr.mxu0 0.0
    %225 = vmatpush1.msra.mxu0 0.0
    %226 = vmatprep.subr.mxu0 0.0
    %227 = vmatpush1.msra.mxu0 0.0
    %228 = vmatprep.subr.mxu0 0.0
    %229 = vmatpush1.msra.mxu0 0.0
    %230 = vmatprep.subr.mxu0 0.0
    %231 = vmatpush1.msra.mxu0 0.0
    %232 = vmatprep.subr.mxu0 0.0
    %233 = vmatpush1.msra.mxu0 0.0
    %234 = vmatprep.subr.mxu0 0.0
    %235 = vmatpush1.msra.mxu0 0.0
    %236 = vmatprep.subr.mxu0 0.0
    %237 = vmatpush1.msra.mxu0 0.0
    %238 = vmatprep.subr.mxu0 0.0
    %239 = vmatpush1.msra.mxu0 0.0
    %240 = vmatprep.subr.mxu0 0.0
    %241 = vmatpush1.msra.mxu0 0.0
    %242 = vmatprep.mubr.f32.mxu0 0.0
    %243 = vmatmul.mubr.f32.gmra.mrb[0].mxu0 %v82
    %v244 = vpop.f32.mrb[0].mxu0
    %v245 = vadd.f32 0.0, %v244
    %v246 = vpop.f32.mrb[0].mxu0
    %247 = vmatprep.mubr.f32.mxu0 0.0
    %248 = vmatmul.mubr.f32.gmra.mrb[0].mxu0 %v85
    %v249 = vpop.f32.mrb[0].mxu0
    %v250 = vadd.f32 0.0, %v249
    %v251 = vpop.f32.mrb[0].mxu0
    %252 = vmatprep.mubr.f32.mxu0 0.0
    %253 = vmatmul.mubr.f32.gmra.mrb[0].mxu0 %v88
    %v254 = vpop.f32.mrb[0].mxu0
    %v255 = vadd.f32 0.0, %v254
    %v256 = vpop.f32.mrb[0].mxu0
    %257 = vmatprep.mubr.f32.mxu0 0.0
    %258 = vmatmul.mubr.f32.gmra.mrb[0].mxu0 %v91
    %v259 = vpop.f32.mrb[0].mxu0
    %v260 = vadd.f32 0.0, %v259
    %v261 = vpop.f32.mrb[0].mxu0
    %262 = vdwg.mxu0
    %v263 = vadd.f32 %v160, %v32
    %v264 = vadd.f32 %v165, %v32
    %v265 = vadd.f32 %v170, %v32
    %v266 = vadd.f32 %v175, %v32
    %v267 = vadd.f32 %v245, %v33
    %v268 = vadd.f32 %v250, %v33
    %v269 = vadd.f32 %v255, %v33
    %v270 = vadd.f32 %v260, %v33
    %v271 = vlaneseq
    %v272 = vshrl.u32 %v271, 7
    %v273 = vsub.s32 0, %v272
    %v274 = vrot.slane %v31, %v273
    %v275 = vadd.f32 %v267, %v274
    %v276 = vadd.f32 %v268, %v274
    %v277 = vadd.f32 %v269, %v274
    %v278 = vadd.f32 %v270, %v274
    %280 = vrot.lane.b32.xlu0 %v275, 96
    %v281 = vpop.permute.xlu0 %280
    %vm282 = vcmask 64512
    %v283 = vsel %vm282, %v275, 0
    %v285 = vsel %vm282, %v281, 0
    %287 = vmatprep.subr.mxu0 0.0
    %288 = vmatpush1.xpose.msra.mxu0 %v285
    %289 = vmatprep.subr.mxu0 0.0
    %290 = vmatpush1.xpose.msra.mxu0 0.0
    %291 = vmatprep.subr.mxu0 0.0
    %292 = vmatpush1.xpose.msra.mxu0 0.0
    %293 = vmatprep.subr.mxu0 0.0
    %294 = vmatpush1.xpose.msra.mxu0 0.0
    %295 = vmatprep.subr.mxu0 0.0
    %296 = vmatpush1.xpose.msra.mxu0 0.0
    %297 = vmatprep.subr.mxu0 0.0
    %298 = vmatpush1.xpose.msra.mxu0 0.0
    %299 = vmatprep.subr.mxu0 0.0
    %300 = vmatpush1.xpose.msra.mxu0 0.0
    %301 = vmatprep.subr.mxu0 0.0
    %302 = vmatpush1.xpose.msra.mxu0 0.0
    %303 = vmatprep.subr.mxu0 0.0
    %304 = vmatpush1.xpose.msra.mxu0 0.0
    %305 = vmatprep.subr.mxu0 0.0
    %306 = vmatpush1.xpose.msra.mxu0 0.0
    %307 = vmatprep.subr.mxu0 0.0
    %308 = vmatpush1.xpose.msra.mxu0 0.0
    %309 = vmatprep.subr.mxu0 0.0
    %310 = vmatpush1.xpose.msra.mxu0 0.0
    %311 = vmatprep.subr.mxu0 0.0
    %312 = vmatpush1.xpose.msra.mxu0 0.0
    %313 = vmatprep.subr.mxu0 0.0
    %314 = vmatpush1.xpose.msra.mxu0 0.0
    %315 = vmatprep.subr.mxu0 0.0
    %316 = vmatpush1.xpose.msra.mxu0 0.0
    %317 = vmatprep.subr.mxu0 0.0
    %318 = vmatpush1.xpose.msra.mxu0 0.0
    %319 = vmatprep.subr.mxu0 0.0
    %320 = vmatpush1.xpose.msra.mxu0 0.0
    %321 = vmatprep.subr.mxu0 0.0
    %322 = vmatpush1.xpose.msra.mxu0 0.0
    %323 = vmatprep.subr.mxu0 0.0
    %324 = vmatpush1.xpose.msra.mxu0 0.0
    %325 = vmatprep.subr.mxu0 0.0
    %326 = vmatpush1.xpose.msra.mxu0 0.0
    %327 = vmatprep.subr.mxu0 0.0
    %328 = vmatpush1.xpose.msra.mxu0 0.0
    %329 = vmatprep.subr.mxu0 0.0
    %330 = vmatpush1.xpose.msra.mxu0 0.0
    %331 = vmatprep.subr.mxu0 0.0
    %332 = vmatpush1.xpose.msra.mxu0 0.0
    %333 = vmatprep.subr.mxu0 0.0
    %334 = vmatpush1.xpose.msra.mxu0 0.0
    %335 = vmatprep.subr.mxu0 0.0
    %336 = vmatpush1.xpose.msra.mxu0 0.0
    %337 = vmatprep.subr.mxu0 0.0
    %338 = vmatpush1.xpose.msra.mxu0 0.0
    %339 = vmatprep.subr.mxu0 0.0
    %340 = vmatpush1.xpose.msra.mxu0 0.0
    %341 = vmatprep.subr.mxu0 0.0
    %342 = vmatpush1.xpose.msra.mxu0 0.0
    %343 = vmatprep.subr.mxu0 0.0
    %344 = vmatpush1.xpose.msra.mxu0 0.0
    %345 = vmatprep.subr.mxu0 0.0
    %346 = vmatpush1.xpose.msra.mxu0 0.0
    %347 = vmatprep.subr.mxu0 0.0
    %348 = vmatpush1.xpose.msra.mxu0 0.0
    %349 = vmatprep.subr.mxu0 0.0
    %350 = vmatpush1.xpose.msra.mxu0 0.0
    %351 = vmatprep.mubr.f32.mxu0 0.0
    %352 = vmatmul.mubr.f32.gmra.mrb[0].mxu0 %v283
    %v353 = vpop.f32.mrb[0].mxu0
    %v354 = vadd.f32 0.0, %v353
    %v355 = vpop.f32.mrb[0].mxu0
    %356 = vdwg.mxu0
    %358 = vrot.lane.b32.xlu0 %v276, 96
    %v359 = vpop.permute.xlu0 %358
    %v360 = vsel %vm282, %v276, 0
    %v362 = vsel %vm282, %v359, 0
    %364 = vmatprep.subr.mxu0 0.0
    %365 = vmatpush1.xpose.msra.mxu0 %v362
    %366 = vmatprep.subr.mxu0 0.0
    %367 = vmatpush1.xpose.msra.mxu0 0.0
    %368 = vmatprep.subr.mxu0 0.0
    %369 = vmatpush1.xpose.msra.mxu0 0.0
    %370 = vmatprep.subr.mxu0 0.0
    %371 = vmatpush1.xpose.msra.mxu0 0.0
    %372 = vmatprep.subr.mxu0 0.0
    %373 = vmatpush1.xpose.msra.mxu0 0.0
    %374 = vmatprep.subr.mxu0 0.0
    %375 = vmatpush1.xpose.msra.mxu0 0.0
    %376 = vmatprep.subr.mxu0 0.0
    %377 = vmatpush1.xpose.msra.mxu0 0.0
    %378 = vmatprep.subr.mxu0 0.0
    %379 = vmatpush1.xpose.msra.mxu0 0.0
    %380 = vmatprep.subr.mxu0 0.0
    %381 = vmatpush1.xpose.msra.mxu0 0.0
    %382 = vmatprep.subr.mxu0 0.0
    %383 = vmatpush1.xpose.msra.mxu0 0.0
    %384 = vmatprep.subr.mxu0 0.0
    %385 = vmatpush1.xpose.msra.mxu0 0.0
    %386 = vmatprep.subr.mxu0 0.0
    %387 = vmatpush1.xpose.msra.mxu0 0.0
    %388 = vmatprep.subr.mxu0 0.0
    %389 = vmatpush1.xpose.msra.mxu0 0.0
    %390 = vmatprep.subr.mxu0 0.0
    %391 = vmatpush1.xpose.msra.mxu0 0.0
    %392 = vmatprep.subr.mxu0 0.0
    %393 = vmatpush1.xpose.msra.mxu0 0.0
    %394 = vmatprep.subr.mxu0 0.0
    %395 = vmatpush1.xpose.msra.mxu0 0.0
    %396 = vmatprep.subr.mxu0 0.0
    %397 = vmatpush1.xpose.msra.mxu0 0.0
    %398 = vmatprep.subr.mxu0 0.0
    %399 = vmatpush1.xpose.msra.mxu0 0.0
    %400 = vmatprep.subr.mxu0 0.0
    %401 = vmatpush1.xpose.msra.mxu0 0.0
    %402 = vmatprep.subr.mxu0 0.0
    %403 = vmatpush1.xpose.msra.mxu0 0.0
    %404 = vmatprep.subr.mxu0 0.0
    %405 = vmatpush1.xpose.msra.mxu0 0.0
    %406 = vmatprep.subr.mxu0 0.0
    %407 = vmatpush1.xpose.msra.mxu0 0.0
    %408 = vmatprep.subr.mxu0 0.0
    %409 = vmatpush1.xpose.msra.mxu0 0.0
    %410 = vmatprep.subr.mxu0 0.0
    %411 = vmatpush1.xpose.msra.mxu0 0.0
    %412 = vmatprep.subr.mxu0 0.0
    %413 = vmatpush1.xpose.msra.mxu0 0.0
    %414 = vmatprep.subr.mxu0 0.0
    %415 = vmatpush1.xpose.msra.mxu0 0.0
    %416 = vmatprep.subr.mxu0 0.0
    %417 = vmatpush1.xpose.msra.mxu0 0.0
    %418 = vmatprep.subr.mxu0 0.0
    %419 = vmatpush1.xpose.msra.mxu0 0.0
    %420 = vmatprep.subr.mxu0 0.0
    %421 = vmatpush1.xpose.msra.mxu0 0.0
    %422 = vmatprep.subr.mxu0 0.0
    %423 = vmatpush1.xpose.msra.mxu0 0.0
    %424 = vmatprep.subr.mxu0 0.0
    %425 = vmatpush1.xpose.msra.mxu0 0.0
    %426 = vmatprep.subr.mxu0 0.0
    %427 = vmatpush1.xpose.msra.mxu0 0.0
    %428 = vmatprep.mubr.f32.mxu0 0.0
    %429 = vmatmul.mubr.f32.gmra.mrb[0].mxu0 %v360
    %v430 = vpop.f32.mrb[0].mxu0
    %v431 = vadd.f32 0.0, %v430
    %v432 = vpop.f32.mrb[0].mxu0
    %433 = vdwg.mxu0
    %435 = vrot.lane.b32.xlu0 %v277, 96
    %v436 = vpop.permute.xlu0 %435
    %v437 = vsel %vm282, %v277, 0
    %v439 = vsel %vm282, %v436, 0
    %441 = vmatprep.subr.mxu0 0.0
    %442 = vmatpush1.xpose.msra.mxu0 %v439
    %443 = vmatprep.subr.mxu0 0.0
    %444 = vmatpush1.xpose.msra.mxu0 0.0
    %445 = vmatprep.subr.mxu0 0.0
    %446 = vmatpush1.xpose.msra.mxu0 0.0
    %447 = vmatprep.subr.mxu0 0.0
    %448 = vmatpush1.xpose.msra.mxu0 0.0
    %449 = vmatprep.subr.mxu0 0.0
    %450 = vmatpush1.xpose.msra.mxu0 0.0
    %451 = vmatprep.subr.mxu0 0.0
    %452 = vmatpush1.xpose.msra.mxu0 0.0
    %453 = vmatprep.subr.mxu0 0.0
    %454 = vmatpush1.xpose.msra.mxu0 0.0
    %455 = vmatprep.subr.mxu0 0.0
    %456 = vmatpush1.xpose.msra.mxu0 0.0
    %457 = vmatprep.subr.mxu0 0.0
    %458 = vmatpush1.xpose.msra.mxu0 0.0
    %459 = vmatprep.subr.mxu0 0.0
    %460 = vmatpush1.xpose.msra.mxu0 0.0
    %461 = vmatprep.subr.mxu0 0.0
    %462 = vmatpush1.xpose.msra.mxu0 0.0
    %463 = vmatprep.subr.mxu0 0.0
    %464 = vmatpush1.xpose.msra.mxu0 0.0
    %465 = vmatprep.subr.mxu0 0.0
    %466 = vmatpush1.xpose.msra.mxu0 0.0
    %467 = vmatprep.subr.mxu0 0.0
    %468 = vmatpush1.xpose.msra.mxu0 0.0
    %469 = vmatprep.subr.mxu0 0.0
    %470 = vmatpush1.xpose.msra.mxu0 0.0
    %471 = vmatprep.subr.mxu0 0.0
    %472 = vmatpush1.xpose.msra.mxu0 0.0
    %473 = vmatprep.subr.mxu0 0.0
    %474 = vmatpush1.xpose.msra.mxu0 0.0
    %475 = vmatprep.subr.mxu0 0.0
    %476 = vmatpush1.xpose.msra.mxu0 0.0
    %477 = vmatprep.subr.mxu0 0.0
    %478 = vmatpush1.xpose.msra.mxu0 0.0
    %479 = vmatprep.subr.mxu0 0.0
    %480 = vmatpush1.xpose.msra.mxu0 0.0
    %481 = vmatprep.subr.mxu0 0.0
    %482 = vmatpush1.xpose.msra.mxu0 0.0
    %483 = vmatprep.subr.mxu0 0.0
    %484 = vmatpush1.xpose.msra.mxu0 0.0
    %485 = vmatprep.subr.mxu0 0.0
    %486 = vmatpush1.xpose.msra.mxu0 0.0
    %487 = vmatprep.subr.mxu0 0.0
    %488 = vmatpush1.xpose.msra.mxu0 0.0
    %489 = vmatprep.subr.mxu0 0.0
    %490 = vmatpush1.xpose.msra.mxu0 0.0
    %491 = vmatprep.subr.mxu0 0.0
    %492 = vmatpush1.xpose.msra.mxu0 0.0
    %493 = vmatprep.subr.mxu0 0.0
    %494 = vmatpush1.xpose.msra.mxu0 0.0
    %495 = vmatprep.subr.mxu0 0.0
    %496 = vmatpush1.xpose.msra.mxu0 0.0
    %497 = vmatprep.subr.mxu0 0.0
    %498 = vmatpush1.xpose.msra.mxu0 0.0
    %499 = vmatprep.subr.mxu0 0.0
    %500 = vmatpush1.xpose.msra.mxu0 0.0
    %501 = vmatprep.subr.mxu0 0.0
    %502 = vmatpush1.xpose.msra.mxu0 0.0
    %503 = vmatprep.subr.mxu0 0.0
    %504 = vmatpush1.xpose.msra.mxu0 0.0
    %505 = vmatprep.mubr.f32.mxu0 0.0
    %506 = vmatmul.mubr.f32.gmra.mrb[0].mxu0 %v437
    %v507 = vpop.f32.mrb[0].mxu0
    %v508 = vadd.f32 0.0, %v507
    %v509 = vpop.f32.mrb[0].mxu0
    %510 = vdwg.mxu0
    %512 = vrot.lane.b32.xlu0 %v278, 96
    %v513 = vpop.permute.xlu0 %512
    %v514 = vsel %vm282, %v278, 0
    %v516 = vsel %vm282, %v513, 0
    %518 = vmatprep.subr.mxu0 0.0
    %519 = vmatpush1.xpose.msra.mxu0 %v516
    %520 = vmatprep.subr.mxu0 0.0
    %521 = vmatpush1.xpose.msra.mxu0 0.0
    %522 = vmatprep.subr.mxu0 0.0
    %523 = vmatpush1.xpose.msra.mxu0 0.0
    %524 = vmatprep.subr.mxu0 0.0
    %525 = vmatpush1.xpose.msra.mxu0 0.0
    %526 = vmatprep.subr.mxu0 0.0
    %527 = vmatpush1.xpose.msra.mxu0 0.0
    %528 = vmatprep.subr.mxu0 0.0
    %529 = vmatpush1.xpose.msra.mxu0 0.0
    %530 = vmatprep.subr.mxu0 0.0
    %531 = vmatpush1.xpose.msra.mxu0 0.0
    %532 = vmatprep.subr.mxu0 0.0
    %533 = vmatpush1.xpose.msra.mxu0 0.0
    %534 = vmatprep.subr.mxu0 0.0
    %535 = vmatpush1.xpose.msra.mxu0 0.0
    %536 = vmatprep.subr.mxu0 0.0
    %537 = vmatpush1.xpose.msra.mxu0 0.0
    %538 = vmatprep.subr.mxu0 0.0
    %539 = vmatpush1.xpose.msra.mxu0 0.0
    %540 = vmatprep.subr.mxu0 0.0
    %541 = vmatpush1.xpose.msra.mxu0 0.0
    %542 = vmatprep.subr.mxu0 0.0
    %543 = vmatpush1.xpose.msra.mxu0 0.0
    %544 = vmatprep.subr.mxu0 0.0
    %545 = vmatpush1.xpose.msra.mxu0 0.0
    %546 = vmatprep.subr.mxu0 0.0
    %547 = vmatpush1.xpose.msra.mxu0 0.0
    %548 = vmatprep.subr.mxu0 0.0
    %549 = vmatpush1.xpose.msra.mxu0 0.0
    %550 = vmatprep.subr.mxu0 0.0
    %551 = vmatpush1.xpose.msra.mxu0 0.0
    %552 = vmatprep.subr.mxu0 0.0
    %553 = vmatpush1.xpose.msra.mxu0 0.0
    %554 = vmatprep.subr.mxu0 0.0
    %555 = vmatpush1.xpose.msra.mxu0 0.0
    %556 = vmatprep.subr.mxu0 0.0
    %557 = vmatpush1.xpose.msra.mxu0 0.0
    %558 = vmatprep.subr.mxu0 0.0
    %559 = vmatpush1.xpose.msra.mxu0 0.0
    %560 = vmatprep.subr.mxu0 0.0
    %561 = vmatpush1.xpose.msra.mxu0 0.0
    %562 = vmatprep.subr.mxu0 0.0
    %563 = vmatpush1.xpose.msra.mxu0 0.0
    %564 = vmatprep.subr.mxu0 0.0
    %565 = vmatpush1.xpose.msra.mxu0 0.0
    %566 = vmatprep.subr.mxu0 0.0
    %567 = vmatpush1.xpose.msra.mxu0 0.0
    %568 = vmatprep.subr.mxu0 0.0
    %569 = vmatpush1.xpose.msra.mxu0 0.0
    %570 = vmatprep.subr.mxu0 0.0
    %571 = vmatpush1.xpose.msra.mxu0 0.0
    %572 = vmatprep.subr.mxu0 0.0
    %573 = vmatpush1.xpose.msra.mxu0 0.0
    %574 = vmatprep.subr.mxu0 0.0
    %575 = vmatpush1.xpose.msra.mxu0 0.0
    %576 = vmatprep.subr.mxu0 0.0
    %577 = vmatpush1.xpose.msra.mxu0 0.0
    %578 = vmatprep.subr.mxu0 0.0
    %579 = vmatpush1.xpose.msra.mxu0 0.0
    %580 = vmatprep.subr.mxu0 0.0
    %581 = vmatpush1.xpose.msra.mxu0 0.0
    %582 = vmatprep.mubr.f32.mxu0 0.0
    %583 = vmatmul.mubr.f32.gmra.mrb[0].mxu0 %v514
    %v584 = vpop.f32.mrb[0].mxu0
    %v585 = vadd.f32 0.0, %v584
    %v586 = vpop.f32.mrb[0].mxu0
    %587 = vdwg.mxu0
    %588 = vrot.lane.b32.xlu0 %v275, 120
    %v589 = vpop.permute.xlu0 %588
    %590 = vrot.lane.b32.xlu0 %v275, 88
    %v591 = vpop.permute.xlu0 %590
    %v592 = vsel %vm282, %v589, 0
    %v594 = vsel %vm282, %v591, 0
    %596 = vmatprep.subr.mxu0 0.0
    %597 = vmatpush1.xpose.msra.mxu0 %v594
    %598 = vmatprep.subr.mxu0 0.0
    %599 = vmatpush1.xpose.msra.mxu0 0.0
    %600 = vmatprep.subr.mxu0 0.0
    %601 = vmatpush1.xpose.msra.mxu0 0.0
    %602 = vmatprep.subr.mxu0 0.0
    %603 = vmatpush1.xpose.msra.mxu0 0.0
    %604 = vmatprep.subr.mxu0 0.0
    %605 = vmatpush1.xpose.msra.mxu0 0.0
    %606 = vmatprep.subr.mxu0 0.0
    %607 = vmatpush1.xpose.msra.mxu0 0.0
    %608 = vmatprep.subr.mxu0 0.0
    %609 = vmatpush1.xpose.msra.mxu0 0.0
    %610 = vmatprep.subr.mxu0 0.0
    %611 = vmatpush1.xpose.msra.mxu0 0.0
    %612 = vmatprep.subr.mxu0 0.0
    %613 = vmatpush1.xpose.msra.mxu0 0.0
    %614 = vmatprep.subr.mxu0 0.0
    %615 = vmatpush1.xpose.msra.mxu0 0.0
    %616 = vmatprep.subr.mxu0 0.0
    %617 = vmatpush1.xpose.msra.mxu0 0.0
    %618 = vmatprep.subr.mxu0 0.0
    %619 = vmatpush1.xpose.msra.mxu0 0.0
    %620 = vmatprep.subr.mxu0 0.0
    %621 = vmatpush1.xpose.msra.mxu0 0.0
    %622 = vmatprep.subr.mxu0 0.0
    %623 = vmatpush1.xpose.msra.mxu0 0.0
    %624 = vmatprep.subr.mxu0 0.0
    %625 = vmatpush1.xpose.msra.mxu0 0.0
    %626 = vmatprep.subr.mxu0 0.0
    %627 = vmatpush1.xpose.msra.mxu0 0.0
    %628 = vmatprep.subr.mxu0 0.0
    %629 = vmatpush1.xpose.msra.mxu0 0.0
    %630 = vmatprep.subr.mxu0 0.0
    %631 = vmatpush1.xpose.msra.mxu0 0.0
    %632 = vmatprep.subr.mxu0 0.0
    %633 = vmatpush1.xpose.msra.mxu0 0.0
    %634 = vmatprep.subr.mxu0 0.0
    %635 = vmatpush1.xpose.msra.mxu0 0.0
    %636 = vmatprep.subr.mxu0 0.0
    %637 = vmatpush1.xpose.msra.mxu0 0.0
    %638 = vmatprep.subr.mxu0 0.0
    %639 = vmatpush1.xpose.msra.mxu0 0.0
    %640 = vmatprep.subr.mxu0 0.0
    %641 = vmatpush1.xpose.msra.mxu0 0.0
    %642 = vmatprep.subr.mxu0 0.0
    %643 = vmatpush1.xpose.msra.mxu0 0.0
    %644 = vmatprep.subr.mxu0 0.0
    %645 = vmatpush1.xpose.msra.mxu0 0.0
    %646 = vmatprep.subr.mxu0 0.0
    %647 = vmatpush1.xpose.msra.mxu0 0.0
    %648 = vmatprep.subr.mxu0 0.0
    %649 = vmatpush1.xpose.msra.mxu0 0.0
    %650 = vmatprep.subr.mxu0 0.0
    %651 = vmatpush1.xpose.msra.mxu0 0.0
    %652 = vmatprep.subr.mxu0 0.0
    %653 = vmatpush1.xpose.msra.mxu0 0.0
    %654 = vmatprep.subr.mxu0 0.0
    %655 = vmatpush1.xpose.msra.mxu0 0.0
    %656 = vmatprep.subr.mxu0 0.0
    %657 = vmatpush1.xpose.msra.mxu0 0.0
    %658 = vmatprep.subr.mxu0 0.0
    %659 = vmatpush1.xpose.msra.mxu0 0.0
    %660 = vmatprep.mubr.f32.mxu0 0.0
    %661 = vmatmul.mubr.f32.gmra.mrb[0].mxu0 %v592
    %v662 = vpop.f32.mrb[0].mxu0
    %v663 = vadd.f32 0.0, %v662
    %v664 = vpop.f32.mrb[0].mxu0
    %665 = vdwg.mxu0
    %666 = vrot.lane.b32.xlu0 %v276, 120
    %v667 = vpop.permute.xlu0 %666
    %668 = vrot.lane.b32.xlu0 %v276, 88
    %v669 = vpop.permute.xlu0 %668
    %v670 = vsel %vm282, %v667, 0
    %v672 = vsel %vm282, %v669, 0
    %674 = vmatprep.subr.mxu0 0.0
    %675 = vmatpush1.xpose.msra.mxu0 %v672
    %676 = vmatprep.subr.mxu0 0.0
    %677 = vmatpush1.xpose.msra.mxu0 0.0
    %678 = vmatprep.subr.mxu0 0.0
    %679 = vmatpush1.xpose.msra.mxu0 0.0
    %680 = vmatprep.subr.mxu0 0.0
    %681 = vmatpush1.xpose.msra.mxu0 0.0
    %682 = vmatprep.subr.mxu0 0.0
    %683 = vmatpush1.xpose.msra.mxu0 0.0
    %684 = vmatprep.subr.mxu0 0.0
    %685 = vmatpush1.xpose.msra.mxu0 0.0
    %686 = vmatprep.subr.mxu0 0.0
    %687 = vmatpush1.xpose.msra.mxu0 0.0
    %688 = vmatprep.subr.mxu0 0.0
    %689 = vmatpush1.xpose.msra.mxu0 0.0
    %690 = vmatprep.subr.mxu0 0.0
    %691 = vmatpush1.xpose.msra.mxu0 0.0
    %692 = vmatprep.subr.mxu0 0.0
    %693 = vmatpush1.xpose.msra.mxu0 0.0
    %694 = vmatprep.subr.mxu0 0.0
    %695 = vmatpush1.xpose.msra.mxu0 0.0
    %696 = vmatprep.subr.mxu0 0.0
    %697 = vmatpush1.xpose.msra.mxu0 0.0
    %698 = vmatprep.subr.mxu0 0.0
    %699 = vmatpush1.xpose.msra.mxu0 0.0
    %700 = vmatprep.subr.mxu0 0.0
    %701 = vmatpush1.xpose.msra.mxu0 0.0
    %702 = vmatprep.subr.mxu0 0.0
    %703 = vmatpush1.xpose.msra.mxu0 0.0
    %704 = vmatprep.subr.mxu0 0.0
    %705 = vmatpush1.xpose.msra.mxu0 0.0
    %706 = vmatprep.subr.mxu0 0.0
    %707 = vmatpush1.xpose.msra.mxu0 0.0
    %708 = vmatprep.subr.mxu0 0.0
    %709 = vmatpush1.xpose.msra.mxu0 0.0
    %710 = vmatprep.subr.mxu0 0.0
    %711 = vmatpush1.xpose.msra.mxu0 0.0
    %712 = vmatprep.subr.mxu0 0.0
    %713 = vmatpush1.xpose.msra.mxu0 0.0
    %714 = vmatprep.subr.mxu0 0.0
    %715 = vmatpush1.xpose.msra.mxu0 0.0
    %716 = vmatprep.subr.mxu0 0.0
    %717 = vmatpush1.xpose.msra.mxu0 0.0
    %718 = vmatprep.subr.mxu0 0.0
    %719 = vmatpush1.xpose.msra.mxu0 0.0
    %720 = vmatprep.subr.mxu0 0.0
    %721 = vmatpush1.xpose.msra.mxu0 0.0
    %722 = vmatprep.subr.mxu0 0.0
    %723 = vmatpush1.xpose.msra.mxu0 0.0
    %724 = vmatprep.subr.mxu0 0.0
    %725 = vmatpush1.xpose.msra.mxu0 0.0
    %726 = vmatprep.subr.mxu0 0.0
    %727 = vmatpush1.xpose.msra.mxu0 0.0
    %728 = vmatprep.subr.mxu0 0.0
    %729 = vmatpush1.xpose.msra.mxu0 0.0
    %730 = vmatprep.subr.mxu0 0.0
    %731 = vmatpush1.xpose.msra.mxu0 0.0
    %732 = vmatprep.subr.mxu0 0.0
    %733 = vmatpush1.xpose.msra.mxu0 0.0
    %734 = vmatprep.subr.mxu0 0.0
    %735 = vmatpush1.xpose.msra.mxu0 0.0
    %736 = vmatprep.subr.mxu0 0.0
    %737 = vmatpush1.xpose.msra.mxu0 0.0
    %738 = vmatprep.mubr.f32.mxu0 0.0
    %739 = vmatmul.mubr.f32.gmra.mrb[0].mxu0 %v670
    %v740 = vpop.f32.mrb[0].mxu0
    %v741 = vadd.f32 0.0, %v740
    %v742 = vpop.f32.mrb[0].mxu0
    %743 = vdwg.mxu0
    %744 = vrot.lane.b32.xlu0 %v277, 120
    %v745 = vpop.permute.xlu0 %744
    %746 = vrot.lane.b32.xlu0 %v277, 88
    %v747 = vpop.permute.xlu0 %746
    %v748 = vsel %vm282, %v745, 0
    %v750 = vsel %vm282, %v747, 0
    %752 = vmatprep.subr.mxu0 0.0
    %753 = vmatpush1.xpose.msra.mxu0 %v750
    %754 = vmatprep.subr.mxu0 0.0
    %755 = vmatpush1.xpose.msra.mxu0 0.0
    %756 = vmatprep.subr.mxu0 0.0
    %757 = vmatpush1.xpose.msra.mxu0 0.0
    %758 = vmatprep.subr.mxu0 0.0
    %759 = vmatpush1.xpose.msra.mxu0 0.0
    %760 = vmatprep.subr.mxu0 0.0
    %761 = vmatpush1.xpose.msra.mxu0 0.0
    %762 = vmatprep.subr.mxu0 0.0
    %763 = vmatpush1.xpose.msra.mxu0 0.0
    %764 = vmatprep.subr.mxu0 0.0
    %765 = vmatpush1.xpose.msra.mxu0 0.0
    %766 = vmatprep.subr.mxu0 0.0
    %767 = vmatpush1.xpose.msra.mxu0 0.0
    %768 = vmatprep.subr.mxu0 0.0
    %769 = vmatpush1.xpose.msra.mxu0 0.0
    %770 = vmatprep.subr.mxu0 0.0
    %771 = vmatpush1.xpose.msra.mxu0 0.0
    %772 = vmatprep.subr.mxu0 0.0
    %773 = vmatpush1.xpose.msra.mxu0 0.0
    %774 = vmatprep.subr.mxu0 0.0
    %775 = vmatpush1.xpose.msra.mxu0 0.0
    %776 = vmatprep.subr.mxu0 0.0
    %777 = vmatpush1.xpose.msra.mxu0 0.0
    %778 = vmatprep.subr.mxu0 0.0
    %779 = vmatpush1.xpose.msra.mxu0 0.0
    %780 = vmatprep.subr.mxu0 0.0
    %781 = vmatpush1.xpose.msra.mxu0 0.0
    %782 = vmatprep.subr.mxu0 0.0
    %783 = vmatpush1.xpose.msra.mxu0 0.0
    %784 = vmatprep.subr.mxu0 0.0
    %785 = vmatpush1.xpose.msra.mxu0 0.0
    %786 = vmatprep.subr.mxu0 0.0
    %787 = vmatpush1.xpose.msra.mxu0 0.0
    %788 = vmatprep.subr.mxu0 0.0
    %789 = vmatpush1.xpose.msra.mxu0 0.0
    %790 = vmatprep.subr.mxu0 0.0
    %791 = vmatpush1.xpose.msra.mxu0 0.0
    %792 = vmatprep.subr.mxu0 0.0
    %793 = vmatpush1.xpose.msra.mxu0 0.0
    %794 = vmatprep.subr.mxu0 0.0
    %795 = vmatpush1.xpose.msra.mxu0 0.0
    %796 = vmatprep.subr.mxu0 0.0
    %797 = vmatpush1.xpose.msra.mxu0 0.0
    %798 = vmatprep.subr.mxu0 0.0
    %799 = vmatpush1.xpose.msra.mxu0 0.0
    %800 = vmatprep.subr.mxu0 0.0
    %801 = vmatpush1.xpose.msra.mxu0 0.0
    %802 = vmatprep.subr.mxu0 0.0
    %803 = vmatpush1.xpose.msra.mxu0 0.0
    %804 = vmatprep.subr.mxu0 0.0
    %805 = vmatpush1.xpose.msra.mxu0 0.0
    %806 = vmatprep.subr.mxu0 0.0
    %807 = vmatpush1.xpose.msra.mxu0 0.0
    %808 = vmatprep.subr.mxu0 0.0
    %809 = vmatpush1.xpose.msra.mxu0 0.0
    %810 = vmatprep.subr.mxu0 0.0
    %811 = vmatpush1.xpose.msra.mxu0 0.0
    %812 = vmatprep.subr.mxu0 0.0
    %813 = vmatpush1.xpose.msra.mxu0 0.0
    %814 = vmatprep.subr.mxu0 0.0
    %815 = vmatpush1.xpose.msra.mxu0 0.0
    %816 = vmatprep.mubr.f32.mxu0 0.0
    %817 = vmatmul.mubr.f32.gmra.mrb[0].mxu0 %v748
    %v818 = vpop.f32.mrb[0].mxu0
    %v819 = vadd.f32 0.0, %v818
    %v820 = vpop.f32.mrb[0].mxu0
    %821 = vdwg.mxu0
    %822 = vrot.lane.b32.xlu0 %v278, 120
    %v823 = vpop.permute.xlu0 %822
    %824 = vrot.lane.b32.xlu0 %v278, 88
    %v825 = vpop.permute.xlu0 %824
    %v826 = vsel %vm282, %v823, 0
    %v828 = vsel %vm282, %v825, 0
    %830 = vmatprep.subr.mxu0 0.0
    %831 = vmatpush1.xpose.msra.mxu0 %v828
    %832 = vmatprep.subr.mxu0 0.0
    %833 = vmatpush1.xpose.msra.mxu0 0.0
    %834 = vmatprep.subr.mxu0 0.0
    %835 = vmatpush1.xpose.msra.mxu0 0.0
    %836 = vmatprep.subr.mxu0 0.0
    %837 = vmatpush1.xpose.msra.mxu0 0.0
    %838 = vmatprep.subr.mxu0 0.0
    %839 = vmatpush1.xpose.msra.mxu0 0.0
    %840 = vmatprep.subr.mxu0 0.0
    %841 = vmatpush1.xpose.msra.mxu0 0.0
    %842 = vmatprep.subr.mxu0 0.0
    %843 = vmatpush1.xpose.msra.mxu0 0.0
    %844 = vmatprep.subr.mxu0 0.0
    %845 = vmatpush1.xpose.msra.mxu0 0.0
    %846 = vmatprep.subr.mxu0 0.0
    %847 = vmatpush1.xpose.msra.mxu0 0.0
    %848 = vmatprep.subr.mxu0 0.0
    %849 = vmatpush1.xpose.msra.mxu0 0.0
    %850 = vmatprep.subr.mxu0 0.0
    %851 = vmatpush1.xpose.msra.mxu0 0.0
    %852 = vmatprep.subr.mxu0 0.0
    %853 = vmatpush1.xpose.msra.mxu0 0.0
    %854 = vmatprep.subr.mxu0 0.0
    %855 = vmatpush1.xpose.msra.mxu0 0.0
    %856 = vmatprep.subr.mxu0 0.0
    %857 = vmatpush1.xpose.msra.mxu0 0.0
    %858 = vmatprep.subr.mxu0 0.0
    %859 = vmatpush1.xpose.msra.mxu0 0.0
    %860 = vmatprep.subr.mxu0 0.0
    %861 = vmatpush1.xpose.msra.mxu0 0.0
    %862 = vmatprep.subr.mxu0 0.0
    %863 = vmatpush1.xpose.msra.mxu0 0.0
    %864 = vmatprep.subr.mxu0 0.0
    %865 = vmatpush1.xpose.msra.mxu0 0.0
    %866 = vmatprep.subr.mxu0 0.0
    %867 = vmatpush1.xpose.msra.mxu0 0.0
    %868 = vmatprep.subr.mxu0 0.0
    %869 = vmatpush1.xpose.msra.mxu0 0.0
    %870 = vmatprep.subr.mxu0 0.0
    %871 = vmatpush1.xpose.msra.mxu0 0.0
    %872 = vmatprep.subr.mxu0 0.0
    %873 = vmatpush1.xpose.msra.mxu0 0.0
    %874 = vmatprep.subr.mxu0 0.0
    %875 = vmatpush1.xpose.msra.mxu0 0.0
    %876 = vmatprep.subr.mxu0 0.0
    %877 = vmatpush1.xpose.msra.mxu0 0.0
    %878 = vmatprep.subr.mxu0 0.0
    %879 = vmatpush1.xpose.msra.mxu0 0.0
    %880 = vmatprep.subr.mxu0 0.0
    %881 = vmatpush1.xpose.msra.mxu0 0.0
    %882 = vmatprep.subr.mxu0 0.0
    %883 = vmatpush1.xpose.msra.mxu0 0.0
    %884 = vmatprep.subr.mxu0 0.0
    %885 = vmatpush1.xpose.msra.mxu0 0.0
    %886 = vmatprep.subr.mxu0 0.0
    %887 = vmatpush1.xpose.msra.mxu0 0.0
    %888 = vmatprep.subr.mxu0 0.0
    %889 = vmatpush1.xpose.msra.mxu0 0.0
    %890 = vmatprep.subr.mxu0 0.0
    %891 = vmatpush1.xpose.msra.mxu0 0.0
    %892 = vmatprep.subr.mxu0 0.0
    %893 = vmatpush1.xpose.msra.mxu0 0.0
    %894 = vmatprep.mubr.f32.mxu0 0.0
    %895 = vmatmul.mubr.f32.gmra.mrb[0].mxu0 %v826
    %v896 = vpop.f32.mrb[0].mxu0
    %v897 = vadd.f32 0.0, %v896
    %v898 = vpop.f32.mrb[0].mxu0
    %899 = vdwg.mxu0
    %900 = vrot.lane.b32.xlu0 %v275, 112
    %v901 = vpop.permute.xlu0 %900
    %902 = vrot.lane.b32.xlu0 %v275, 80
    %v903 = vpop.permute.xlu0 %902
    %v904 = vsel %vm282, %v901, 0
    %v906 = vsel %vm282, %v903, 0
    %908 = vmatprep.subr.mxu0 0.0
    %909 = vmatpush1.xpose.msra.mxu0 %v906
    %910 = vmatprep.subr.mxu0 0.0
    %911 = vmatpush1.xpose.msra.mxu0 0.0
    %912 = vmatprep.subr.mxu0 0.0
    %913 = vmatpush1.xpose.msra.mxu0 0.0
    %914 = vmatprep.subr.mxu0 0.0
    %915 = vmatpush1.xpose.msra.mxu0 0.0
    %916 = vmatprep.subr.mxu0 0.0
    %917 = vmatpush1.xpose.msra.mxu0 0.0
    %918 = vmatprep.subr.mxu0 0.0
    %919 = vmatpush1.xpose.msra.mxu0 0.0
    %920 = vmatprep.subr.mxu0 0.0
    %921 = vmatpush1.xpose.msra.mxu0 0.0
    %922 = vmatprep.subr.mxu0 0.0
    %923 = vmatpush1.xpose.msra.mxu0 0.0
    %924 = vmatprep.subr.mxu0 0.0
    %925 = vmatpush1.xpose.msra.mxu0 0.0
    %926 = vmatprep.subr.mxu0 0.0
    %927 = vmatpush1.xpose.msra.mxu0 0.0
    %928 = vmatprep.subr.mxu0 0.0
    %929 = vmatpush1.xpose.msra.mxu0 0.0
    %930 = vmatprep.subr.mxu0 0.0
    %931 = vmatpush1.xpose.msra.mxu0 0.0
    %932 = vmatprep.subr.mxu0 0.0
    %933 = vmatpush1.xpose.msra.mxu0 0.0
    %934 = vmatprep.subr.mxu0 0.0
    %935 = vmatpush1.xpose.msra.mxu0 0.0
    %936 = vmatprep.subr.mxu0 0.0
    %937 = vmatpush1.xpose.msra.mxu0 0.0
    %938 = vmatprep.subr.mxu0 0.0
    %939 = vmatpush1.xpose.msra.mxu0 0.0
    %940 = vmatprep.subr.mxu0 0.0
    %941 = vmatpush1.xpose.msra.mxu0 0.0
    %942 = vmatprep.subr.mxu0 0.0
    %943 = vmatpush1.xpose.msra.mxu0 0.0
    %944 = vmatprep.subr.mxu0 0.0
    %945 = vmatpush1.xpose.msra.mxu0 0.0
    %946 = vmatprep.subr.mxu0 0.0
    %947 = vmatpush1.xpose.msra.mxu0 0.0
    %948 = vmatprep.subr.mxu0 0.0
    %949 = vmatpush1.xpose.msra.mxu0 0.0
    %950 = vmatprep.subr.mxu0 0.0
    %951 = vmatpush1.xpose.msra.mxu0 0.0
    %952 = vmatprep.subr.mxu0 0.0
    %953 = vmatpush1.xpose.msra.mxu0 0.0
    %954 = vmatprep.subr.mxu0 0.0
    %955 = vmatpush1.xpose.msra.mxu0 0.0
    %956 = vmatprep.subr.mxu0 0.0
    %957 = vmatpush1.xpose.msra.mxu0 0.0
    %958 = vmatprep.subr.mxu0 0.0
    %959 = vmatpush1.xpose.msra.mxu0 0.0
    %960 = vmatprep.subr.mxu0 0.0
    %961 = vmatpush1.xpose.msra.mxu0 0.0
    %962 = vmatprep.subr.mxu0 0.0
    %963 = vmatpush1.xpose.msra.mxu0 0.0
    %964 = vmatprep.subr.mxu0 0.0
    %965 = vmatpush1.xpose.msra.mxu0 0.0
    %966 = vmatprep.subr.mxu0 0.0
    %967 = vmatpush1.xpose.msra.mxu0 0.0
    %968 = vmatprep.subr.mxu0 0.0
    %969 = vmatpush1.xpose.msra.mxu0 0.0
    %970 = vmatprep.subr.mxu0 0.0
    %971 = vmatpush1.xpose.msra.mxu0 0.0
    %972 = vmatprep.mubr.f32.mxu0 0.0
    %973 = vmatmul.mubr.f32.gmra.mrb[0].mxu0 %v904
    %v974 = vpop.f32.mrb[0].mxu0
    %v975 = vadd.f32 0.0, %v974
    %v976 = vpop.f32.mrb[0].mxu0
    %977 = vdwg.mxu0
    %978 = vrot.lane.b32.xlu0 %v276, 112
    %v979 = vpop.permute.xlu0 %978
    %980 = vrot.lane.b32.xlu0 %v276, 80
    %v981 = vpop.permute.xlu0 %980
    %v982 = vsel %vm282, %v979, 0
    %v984 = vsel %vm282, %v981, 0
    %986 = vmatprep.subr.mxu0 0.0
    %987 = vmatpush1.xpose.msra.mxu0 %v984
    %988 = vmatprep.subr.mxu0 0.0
    %989 = vmatpush1.xpose.msra.mxu0 0.0
    %990 = vmatprep.subr.mxu0 0.0
    %991 = vmatpush1.xpose.msra.mxu0 0.0
    %992 = vmatprep.subr.mxu0 0.0
    %993 = vmatpush1.xpose.msra.mxu0 0.0
    %994 = vmatprep.subr.mxu0 0.0
    %995 = vmatpush1.xpose.msra.mxu0 0.0
    %996 = vmatprep.subr.mxu0 0.0
    %997 = vmatpush1.xpose.msra.mxu0 0.0
    %998 = vmatprep.subr.mxu0 0.0
    %999 = vmatpush1.xpose.msra.mxu0 0.0
    %1000 = vmatprep.subr.mxu0 0.0
    %1001 = vmatpush1.xpose.msra.mxu0 0.0
    %1002 = vmatprep.subr.mxu0 0.0
    %1003 = vmatpush1.xpose.msra.mxu0 0.0
    %1004 = vmatprep.subr.mxu0 0.0
    %1005 = vmatpush1.xpose.msra.mxu0 0.0
    %1006 = vmatprep.subr.mxu0 0.0
    %1007 = vmatpush1.xpose.msra.mxu0 0.0
    %1008 = vmatprep.subr.mxu0 0.0
    %1009 = vmatpush1.xpose.msra.mxu0 0.0
    %1010 = vmatprep.subr.mxu0 0.0
    %1011 = vmatpush1.xpose.msra.mxu0 0.0
    %1012 = vmatprep.subr.mxu0 0.0
    %1013 = vmatpush1.xpose.msra.mxu0 0.0
    %1014 = vmatprep.subr.mxu0 0.0
    %1015 = vmatpush1.xpose.msra.mxu0 0.0
    %1016 = vmatprep.subr.mxu0 0.0
    %1017 = vmatpush1.xpose.msra.mxu0 0.0
    %1018 = vmatprep.subr.mxu0 0.0
    %1019 = vmatpush1.xpose.msra.mxu0 0.0
    %1020 = vmatprep.subr.mxu0 0.0
    %1021 = vmatpush1.xpose.msra.mxu0 0.0
    %1022 = vmatprep.subr.mxu0 0.0
    %1023 = vmatpush1.xpose.msra.mxu0 0.0
    %1024 = vmatprep.subr.mxu0 0.0
    %1025 = vmatpush1.xpose.msra.mxu0 0.0
    %1026 = vmatprep.subr.mxu0 0.0
    %1027 = vmatpush1.xpose.msra.mxu0 0.0
    %1028 = vmatprep.subr.mxu0 0.0
    %1029 = vmatpush1.xpose.msra.mxu0 0.0
    %1030 = vmatprep.subr.mxu0 0.0
    %1031 = vmatpush1.xpose.msra.mxu0 0.0
    %1032 = vmatprep.subr.mxu0 0.0
    %1033 = vmatpush1.xpose.msra.mxu0 0.0
    %1034 = vmatprep.subr.mxu0 0.0
    %1035 = vmatpush1.xpose.msra.mxu0 0.0
    %1036 = vmatprep.subr.mxu0 0.0
    %1037 = vmatpush1.xpose.msra.mxu0 0.0
    %1038 = vmatprep.subr.mxu0 0.0
    %1039 = vmatpush1.xpose.msra.mxu0 0.0
    %1040 = vmatprep.subr.mxu0 0.0
    %1041 = vmatpush1.xpose.msra.mxu0 0.0
    %1042 = vmatprep.subr.mxu0 0.0
    %1043 = vmatpush1.xpose.msra.mxu0 0.0
    %1044 = vmatprep.subr.mxu0 0.0
    %1045 = vmatpush1.xpose.msra.mxu0 0.0
    %1046 = vmatprep.subr.mxu0 0.0
    %1047 = vmatpush1.xpose.msra.mxu0 0.0
    %1048 = vmatprep.subr.mxu0 0.0
    %1049 = vmatpush1.xpose.msra.mxu0 0.0
    %1050 = vmatprep.mubr.f32.mxu0 0.0
    %1051 = vmatmul.mubr.f32.gmra.mrb[0].mxu0 %v982
    %v1052 = vpop.f32.mrb[0].mxu0
    %v1053 = vadd.f32 0.0, %v1052
    %v1054 = vpop.f32.mrb[0].mxu0
    %1055 = vdwg.mxu0
    %1056 = vrot.lane.b32.xlu0 %v277, 112
    %v1057 = vpop.permute.xlu0 %1056
    %1058 = vrot.lane.b32.xlu0 %v277, 80
    %v1059 = vpop.permute.xlu0 %1058
    %v1060 = vsel %vm282, %v1057, 0
    %v1062 = vsel %vm282, %v1059, 0
    %1064 = vmatprep.subr.mxu0 0.0
    %1065 = vmatpush1.xpose.msra.mxu0 %v1062
    %1066 = vmatprep.subr.mxu0 0.0
    %1067 = vmatpush1.xpose.msra.mxu0 0.0
    %1068 = vmatprep.subr.mxu0 0.0
    %1069 = vmatpush1.xpose.msra.mxu0 0.0
    %1070 = vmatprep.subr.mxu0 0.0
    %1071 = vmatpush1.xpose.msra.mxu0 0.0
    %1072 = vmatprep.subr.mxu0 0.0
    %1073 = vmatpush1.xpose.msra.mxu0 0.0
    %1074 = vmatprep.subr.mxu0 0.0
    %1075 = vmatpush1.xpose.msra.mxu0 0.0
    %1076 = vmatprep.subr.mxu0 0.0
    %1077 = vmatpush1.xpose.msra.mxu0 0.0
    %1078 = vmatprep.subr.mxu0 0.0
    %1079 = vmatpush1.xpose.msra.mxu0 0.0
    %1080 = vmatprep.subr.mxu0 0.0
    %1081 = vmatpush1.xpose.msra.mxu0 0.0
    %1082 = vmatprep.subr.mxu0 0.0
    %1083 = vmatpush1.xpose.msra.mxu0 0.0
    %1084 = vmatprep.subr.mxu0 0.0
    %1085 = vmatpush1.xpose.msra.mxu0 0.0
    %1086 = vmatprep.subr.mxu0 0.0
    %1087 = vmatpush1.xpose.msra.mxu0 0.0
    %1088 = vmatprep.subr.mxu0 0.0
    %1089 = vmatpush1.xpose.msra.mxu0 0.0
    %1090 = vmatprep.subr.mxu0 0.0
    %1091 = vmatpush1.xpose.msra.mxu0 0.0
    %1092 = vmatprep.subr.mxu0 0.0
    %1093 = vmatpush1.xpose.msra.mxu0 0.0
    %1094 = vmatprep.subr.mxu0 0.0
    %1095 = vmatpush1.xpose.msra.mxu0 0.0
    %1096 = vmatprep.subr.mxu0 0.0
    %1097 = vmatpush1.xpose.msra.mxu0 0.0
    %1098 = vmatprep.subr.mxu0 0.0
    %1099 = vmatpush1.xpose.msra.mxu0 0.0
    %1100 = vmatprep.subr.mxu0 0.0
    %1101 = vmatpush1.xpose.msra.mxu0 0.0
    %1102 = vmatprep.subr.mxu0 0.0
    %1103 = vmatpush1.xpose.msra.mxu0 0.0
    %1104 = vmatprep.subr.mxu0 0.0
    %1105 = vmatpush1.xpose.msra.mxu0 0.0
    %1106 = vmatprep.subr.mxu0 0.0
    %1107 = vmatpush1.xpose.msra.mxu0 0.0
    %1108 = vmatprep.subr.mxu0 0.0
    %1109 = vmatpush1.xpose.msra.mxu0 0.0
    %1110 = vmatprep.subr.mxu0 0.0
    %1111 = vmatpush1.xpose.msra.mxu0 0.0
    %1112 = vmatprep.subr.mxu0 0.0
    %1113 = vmatpush1.xpose.msra.mxu0 0.0
    %1114 = vmatprep.subr.mxu0 0.0
    %1115 = vmatpush1.xpose.msra.mxu0 0.0
    %1116 = vmatprep.subr.mxu0 0.0
    %1117 = vmatpush1.xpose.msra.mxu0 0.0
    %1118 = vmatprep.subr.mxu0 0.0
    %1119 = vmatpush1.xpose.msra.mxu0 0.0
    %1120 = vmatprep.subr.mxu0 0.0
    %1121 = vmatpush1.xpose.msra.mxu0 0.0
    %1122 = vmatprep.subr.mxu0 0.0
    %1123 = vmatpush1.xpose.msra.mxu0 0.0
    %1124 = vmatprep.subr.mxu0 0.0
    %1125 = vmatpush1.xpose.msra.mxu0 0.0
    %1126 = vmatprep.subr.mxu0 0.0
    %1127 = vmatpush1.xpose.msra.mxu0 0.0
    %1128 = vmatprep.mubr.f32.mxu0 0.0
    %1129 = vmatmul.mubr.f32.gmra.mrb[0].mxu0 %v1060
    %v1130 = vpop.f32.mrb[0].mxu0
    %v1131 = vadd.f32 0.0, %v1130
    %v1132 = vpop.f32.mrb[0].mxu0
    %1133 = vdwg.mxu0
    %1134 = vrot.lane.b32.xlu0 %v278, 112
    %v1135 = vpop.permute.xlu0 %1134
    %1136 = vrot.lane.b32.xlu0 %v278, 80
    %v1137 = vpop.permute.xlu0 %1136
    %v1138 = vsel %vm282, %v1135, 0
    %v1140 = vsel %vm282, %v1137, 0
    %1142 = vmatprep.subr.mxu0 0.0
    %1143 = vmatpush1.xpose.msra.mxu0 %v1140
    %1144 = vmatprep.subr.mxu0 0.0
    %1145 = vmatpush1.xpose.msra.mxu0 0.0
    %1146 = vmatprep.subr.mxu0 0.0
    %1147 = vmatpush1.xpose.msra.mxu0 0.0
    %1148 = vmatprep.subr.mxu0 0.0
    %1149 = vmatpush1.xpose.msra.mxu0 0.0
    %1150 = vmatprep.subr.mxu0 0.0
    %1151 = vmatpush1.xpose.msra.mxu0 0.0
    %1152 = vmatprep.subr.mxu0 0.0
    %1153 = vmatpush1.xpose.msra.mxu0 0.0
    %1154 = vmatprep.subr.mxu0 0.0
    %1155 = vmatpush1.xpose.msra.mxu0 0.0
    %1156 = vmatprep.subr.mxu0 0.0
    %1157 = vmatpush1.xpose.msra.mxu0 0.0
    %1158 = vmatprep.subr.mxu0 0.0
    %1159 = vmatpush1.xpose.msra.mxu0 0.0
    %1160 = vmatprep.subr.mxu0 0.0
    %1161 = vmatpush1.xpose.msra.mxu0 0.0
    %1162 = vmatprep.subr.mxu0 0.0
    %1163 = vmatpush1.xpose.msra.mxu0 0.0
    %1164 = vmatprep.subr.mxu0 0.0
    %1165 = vmatpush1.xpose.msra.mxu0 0.0
    %1166 = vmatprep.subr.mxu0 0.0
    %1167 = vmatpush1.xpose.msra.mxu0 0.0
    %1168 = vmatprep.subr.mxu0 0.0
    %1169 = vmatpush1.xpose.msra.mxu0 0.0
    %1170 = vmatprep.subr.mxu0 0.0
    %1171 = vmatpush1.xpose.msra.mxu0 0.0
    %1172 = vmatprep.subr.mxu0 0.0
    %1173 = vmatpush1.xpose.msra.mxu0 0.0
    %1174 = vmatprep.subr.mxu0 0.0
    %1175 = vmatpush1.xpose.msra.mxu0 0.0
    %1176 = vmatprep.subr.mxu0 0.0
    %1177 = vmatpush1.xpose.msra.mxu0 0.0
    %1178 = vmatprep.subr.mxu0 0.0
    %1179 = vmatpush1.xpose.msra.mxu0 0.0
    %1180 = vmatprep.subr.mxu0 0.0
    %1181 = vmatpush1.xpose.msra.mxu0 0.0
    %1182 = vmatprep.subr.mxu0 0.0
    %1183 = vmatpush1.xpose.msra.mxu0 0.0
    %1184 = vmatprep.subr.mxu0 0.0
    %1185 = vmatpush1.xpose.msra.mxu0 0.0
    %1186 = vmatprep.subr.mxu0 0.0
    %1187 = vmatpush1.xpose.msra.mxu0 0.0
    %1188 = vmatprep.subr.mxu0 0.0
    %1189 = vmatpush1.xpose.msra.mxu0 0.0
    %1190 = vmatprep.subr.mxu0 0.0
    %1191 = vmatpush1.xpose.msra.mxu0 0.0
    %1192 = vmatprep.subr.mxu0 0.0
    %1193 = vmatpush1.xpose.msra.mxu0 0.0
    %1194 = vmatprep.subr.mxu0 0.0
    %1195 = vmatpush1.xpose.msra.mxu0 0.0
    %1196 = vmatprep.subr.mxu0 0.0
    %1197 = vmatpush1.xpose.msra.mxu0 0.0
    %1198 = vmatprep.subr.mxu0 0.0
    %1199 = vmatpush1.xpose.msra.mxu0 0.0
    %1200 = vmatprep.subr.mxu0 0.0
    %1201 = vmatpush1.xpose.msra.mxu0 0.0
    %1202 = vmatprep.subr.mxu0 0.0
    %1203 = vmatpush1.xpose.msra.mxu0 0.0
    %1204 = vmatprep.subr.mxu0 0.0
    %1205 = vmatpush1.xpose.msra.mxu0 0.0
    %1206 = vmatprep.mubr.f32.mxu0 0.0
    %1207 = vmatmul.mubr.f32.gmra.mrb[0].mxu0 %v1138
    %v1208 = vpop.f32.mrb[0].mxu0
    %v1209 = vadd.f32 0.0, %v1208
    %v1210 = vpop.f32.mrb[0].mxu0
    %1211 = vdwg.mxu0
    %1212 = vrot.lane.b32.xlu0 %v275, 104
    %v1213 = vpop.permute.xlu0 %1212
    %1214 = vrot.lane.b32.xlu0 %v275, 72
    %v1215 = vpop.permute.xlu0 %1214
    %v1216 = vsel %vm282, %v1213, 0
    %v1218 = vsel %vm282, %v1215, 0
    %1220 = vmatprep.subr.mxu0 0.0
    %1221 = vmatpush1.xpose.msra.mxu0 %v1218
    %1222 = vmatprep.subr.mxu0 0.0
    %1223 = vmatpush1.xpose.msra.mxu0 0.0
    %1224 = vmatprep.subr.mxu0 0.0
    %1225 = vmatpush1.xpose.msra.mxu0 0.0
    %1226 = vmatprep.subr.mxu0 0.0
    %1227 = vmatpush1.xpose.msra.mxu0 0.0
    %1228 = vmatprep.subr.mxu0 0.0
    %1229 = vmatpush1.xpose.msra.mxu0 0.0
    %1230 = vmatprep.subr.mxu0 0.0
    %1231 = vmatpush1.xpose.msra.mxu0 0.0
    %1232 = vmatprep.subr.mxu0 0.0
    %1233 = vmatpush1.xpose.msra.mxu0 0.0
    %1234 = vmatprep.subr.mxu0 0.0
    %1235 = vmatpush1.xpose.msra.mxu0 0.0
    %1236 = vmatprep.subr.mxu0 0.0
    %1237 = vmatpush1.xpose.msra.mxu0 0.0
    %1238 = vmatprep.subr.mxu0 0.0
    %1239 = vmatpush1.xpose.msra.mxu0 0.0
    %1240 = vmatprep.subr.mxu0 0.0
    %1241 = vmatpush1.xpose.msra.mxu0 0.0
    %1242 = vmatprep.subr.mxu0 0.0
    %1243 = vmatpush1.xpose.msra.mxu0 0.0
    %1244 = vmatprep.subr.mxu0 0.0
    %1245 = vmatpush1.xpose.msra.mxu0 0.0
    %1246 = vmatprep.subr.mxu0 0.0
    %1247 = vmatpush1.xpose.msra.mxu0 0.0
    %1248 = vmatprep.subr.mxu0 0.0
    %1249 = vmatpush1.xpose.msra.mxu0 0.0
    %1250 = vmatprep.subr.mxu0 0.0
    %1251 = vmatpush1.xpose.msra.mxu0 0.0
    %1252 = vmatprep.subr.mxu0 0.0
    %1253 = vmatpush1.xpose.msra.mxu0 0.0
    %1254 = vmatprep.subr.mxu0 0.0
    %1255 = vmatpush1.xpose.msra.mxu0 0.0
    %1256 = vmatprep.subr.mxu0 0.0
    %1257 = vmatpush1.xpose.msra.mxu0 0.0
    %1258 = vmatprep.subr.mxu0 0.0
    %1259 = vmatpush1.xpose.msra.mxu0 0.0
    %1260 = vmatprep.subr.mxu0 0.0
    %1261 = vmatpush1.xpose.msra.mxu0 0.0
    %1262 = vmatprep.subr.mxu0 0.0
    %1263 = vmatpush1.xpose.msra.mxu0 0.0
    %1264 = vmatprep.subr.mxu0 0.0
    %1265 = vmatpush1.xpose.msra.mxu0 0.0
    %1266 = vmatprep.subr.mxu0 0.0
    %1267 = vmatpush1.xpose.msra.mxu0 0.0
    %1268 = vmatprep.subr.mxu0 0.0
    %1269 = vmatpush1.xpose.msra.mxu0 0.0
    %1270 = vmatprep.subr.mxu0 0.0
    %1271 = vmatpush1.xpose.msra.mxu0 0.0
    %1272 = vmatprep.subr.mxu0 0.0
    %1273 = vmatpush1.xpose.msra.mxu0 0.0
    %1274 = vmatprep.subr.mxu0 0.0
    %1275 = vmatpush1.xpose.msra.mxu0 0.0
    %1276 = vmatprep.subr.mxu0 0.0
    %1277 = vmatpush1.xpose.msra.mxu0 0.0
    %1278 = vmatprep.subr.mxu0 0.0
    %1279 = vmatpush1.xpose.msra.mxu0 0.0
    %1280 = vmatprep.subr.mxu0 0.0
    %1281 = vmatpush1.xpose.msra.mxu0 0.0
    %1282 = vmatprep.subr.mxu0 0.0
    %1283 = vmatpush1.xpose.msra.mxu0 0.0
    %1284 = vmatprep.mubr.f32.mxu0 0.0
    %1285 = vmatmul.mubr.f32.gmra.mrb[0].mxu0 %v1216
    %v1286 = vpop.f32.mrb[0].mxu0
    %v1287 = vadd.f32 0.0, %v1286
    %v1288 = vpop.f32.mrb[0].mxu0
    %1289 = vdwg.mxu0
    %1290 = vrot.lane.b32.xlu0 %v276, 104
    %v1291 = vpop.permute.xlu0 %1290
    %1292 = vrot.lane.b32.xlu0 %v276, 72
    %v1293 = vpop.permute.xlu0 %1292
    %v1294 = vsel %vm282, %v1291, 0
    %v1296 = vsel %vm282, %v1293, 0
    %1298 = vmatprep.subr.mxu0 0.0
    %1299 = vmatpush1.xpose.msra.mxu0 %v1296
    %1300 = vmatprep.subr.mxu0 0.0
    %1301 = vmatpush1.xpose.msra.mxu0 0.0
    %1302 = vmatprep.subr.mxu0 0.0
    %1303 = vmatpush1.xpose.msra.mxu0 0.0
    %1304 = vmatprep.subr.mxu0 0.0
    %1305 = vmatpush1.xpose.msra.mxu0 0.0
    %1306 = vmatprep.subr.mxu0 0.0
    %1307 = vmatpush1.xpose.msra.mxu0 0.0
    %1308 = vmatprep.subr.mxu0 0.0
    %1309 = vmatpush1.xpose.msra.mxu0 0.0
    %1310 = vmatprep.subr.mxu0 0.0
    %1311 = vmatpush1.xpose.msra.mxu0 0.0
    %1312 = vmatprep.subr.mxu0 0.0
    %1313 = vmatpush1.xpose.msra.mxu0 0.0
    %1314 = vmatprep.subr.mxu0 0.0
    %1315 = vmatpush1.xpose.msra.mxu0 0.0
    %1316 = vmatprep.subr.mxu0 0.0
    %1317 = vmatpush1.xpose.msra.mxu0 0.0
    %1318 = vmatprep.subr.mxu0 0.0
    %1319 = vmatpush1.xpose.msra.mxu0 0.0
    %1320 = vmatprep.subr.mxu0 0.0
    %1321 = vmatpush1.xpose.msra.mxu0 0.0
    %1322 = vmatprep.subr.mxu0 0.0
    %1323 = vmatpush1.xpose.msra.mxu0 0.0
    %1324 = vmatprep.subr.mxu0 0.0
    %1325 = vmatpush1.xpose.msra.mxu0 0.0
    %1326 = vmatprep.subr.mxu0 0.0
    %1327 = vmatpush1.xpose.msra.mxu0 0.0
    %1328 = vmatprep.subr.mxu0 0.0
    %1329 = vmatpush1.xpose.msra.mxu0 0.0
    %1330 = vmatprep.subr.mxu0 0.0
    %1331 = vmatpush1.xpose.msra.mxu0 0.0
    %1332 = vmatprep.subr.mxu0 0.0
    %1333 = vmatpush1.xpose.msra.mxu0 0.0
    %1334 = vmatprep.subr.mxu0 0.0
    %1335 = vmatpush1.xpose.msra.mxu0 0.0
    %1336 = vmatprep.subr.mxu0 0.0
    %1337 = vmatpush1.xpose.msra.mxu0 0.0
    %1338 = vmatprep.subr.mxu0 0.0
    %1339 = vmatpush1.xpose.msra.mxu0 0.0
    %1340 = vmatprep.subr.mxu0 0.0
    %1341 = vmatpush1.xpose.msra.mxu0 0.0
    %1342 = vmatprep.subr.mxu0 0.0
    %1343 = vmatpush1.xpose.msra.mxu0 0.0
    %1344 = vmatprep.subr.mxu0 0.0
    %1345 = vmatpush1.xpose.msra.mxu0 0.0
    %1346 = vmatprep.subr.mxu0 0.0
    %1347 = vmatpush1.xpose.msra.mxu0 0.0
    %1348 = vmatprep.subr.mxu0 0.0
    %1349 = vmatpush1.xpose.msra.mxu0 0.0
    %1350 = vmatprep.subr.mxu0 0.0
    %1351 = vmatpush1.xpose.msra.mxu0 0.0
    %1352 = vmatprep.subr.mxu0 0.0
    %1353 = vmatpush1.xpose.msra.mxu0 0.0
    %1354 = vmatprep.subr.mxu0 0.0
    %1355 = vmatpush1.xpose.msra.mxu0 0.0
    %1356 = vmatprep.subr.mxu0 0.0
    %1357 = vmatpush1.xpose.msra.mxu0 0.0
    %1358 = vmatprep.subr.mxu0 0.0
    %1359 = vmatpush1.xpose.msra.mxu0 0.0
    %1360 = vmatprep.subr.mxu0 0.0
    %1361 = vmatpush1.xpose.msra.mxu0 0.0
    %1362 = vmatprep.mubr.f32.mxu0 0.0
    %1363 = vmatmul.mubr.f32.gmra.mrb[0].mxu0 %v1294
    %v1364 = vpop.f32.mrb[0].mxu0
    %v1365 = vadd.f32 0.0, %v1364
    %v1366 = vpop.f32.mrb[0].mxu0
    %1367 = vdwg.mxu0
    %1368 = vrot.lane.b32.xlu0 %v277, 104
    %v1369 = vpop.permute.xlu0 %1368
    %1370 = vrot.lane.b32.xlu0 %v277, 72
    %v1371 = vpop.permute.xlu0 %1370
    %v1372 = vsel %vm282, %v1369, 0
    %v1374 = vsel %vm282, %v1371, 0
    %1376 = vmatprep.subr.mxu0 0.0
    %1377 = vmatpush1.xpose.msra.mxu0 %v1374
    %1378 = vmatprep.subr.mxu0 0.0
    %1379 = vmatpush1.xpose.msra.mxu0 0.0
    %1380 = vmatprep.subr.mxu0 0.0
    %1381 = vmatpush1.xpose.msra.mxu0 0.0
    %1382 = vmatprep.subr.mxu0 0.0
    %1383 = vmatpush1.xpose.msra.mxu0 0.0
    %1384 = vmatprep.subr.mxu0 0.0
    %1385 = vmatpush1.xpose.msra.mxu0 0.0
    %1386 = vmatprep.subr.mxu0 0.0
    %1387 = vmatpush1.xpose.msra.mxu0 0.0
    %1388 = vmatprep.subr.mxu0 0.0
    %1389 = vmatpush1.xpose.msra.mxu0 0.0
    %1390 = vmatprep.subr.mxu0 0.0
    %1391 = vmatpush1.xpose.msra.mxu0 0.0
    %1392 = vmatprep.subr.mxu0 0.0
    %1393 = vmatpush1.xpose.msra.mxu0 0.0
    %1394 = vmatprep.subr.mxu0 0.0
    %1395 = vmatpush1.xpose.msra.mxu0 0.0
    %1396 = vmatprep.subr.mxu0 0.0
    %1397 = vmatpush1.xpose.msra.mxu0 0.0
    %1398 = vmatprep.subr.mxu0 0.0
    %1399 = vmatpush1.xpose.msra.mxu0 0.0
    %1400 = vmatprep.subr.mxu0 0.0
    %1401 = vmatpush1.xpose.msra.mxu0 0.0
    %1402 = vmatprep.subr.mxu0 0.0
    %1403 = vmatpush1.xpose.msra.mxu0 0.0
    %1404 = vmatprep.subr.mxu0 0.0
    %1405 = vmatpush1.xpose.msra.mxu0 0.0
    %1406 = vmatprep.subr.mxu0 0.0
    %1407 = vmatpush1.xpose.msra.mxu0 0.0
    %1408 = vmatprep.subr.mxu0 0.0
    %1409 = vmatpush1.xpose.msra.mxu0 0.0
    %1410 = vmatprep.subr.mxu0 0.0
    %1411 = vmatpush1.xpose.msra.mxu0 0.0
    %1412 = vmatprep.subr.mxu0 0.0
    %1413 = vmatpush1.xpose.msra.mxu0 0.0
    %1414 = vmatprep.subr.mxu0 0.0
    %1415 = vmatpush1.xpose.msra.mxu0 0.0
    %1416 = vmatprep.subr.mxu0 0.0
    %1417 = vmatpush1.xpose.msra.mxu0 0.0
    %1418 = vmatprep.subr.mxu0 0.0
    %1419 = vmatpush1.xpose.msra.mxu0 0.0
    %1420 = vmatprep.subr.mxu0 0.0
    %1421 = vmatpush1.xpose.msra.mxu0 0.0
    %1422 = vmatprep.subr.mxu0 0.0
    %1423 = vmatpush1.xpose.msra.mxu0 0.0
    %1424 = vmatprep.subr.mxu0 0.0
    %1425 = vmatpush1.xpose.msra.mxu0 0.0
    %1426 = vmatprep.subr.mxu0 0.0
    %1427 = vmatpush1.xpose.msra.mxu0 0.0
    %1428 = vmatprep.subr.mxu0 0.0
    %1429 = vmatpush1.xpose.msra.mxu0 0.0
    %1430 = vmatprep.subr.mxu0 0.0
    %1431 = vmatpush1.xpose.msra.mxu0 0.0
    %1432 = vmatprep.subr.mxu0 0.0
    %1433 = vmatpush1.xpose.msra.mxu0 0.0
    %1434 = vmatprep.subr.mxu0 0.0
    %1435 = vmatpush1.xpose.msra.mxu0 0.0
    %1436 = vmatprep.subr.mxu0 0.0
    %1437 = vmatpush1.xpose.msra.mxu0 0.0
    %1438 = vmatprep.subr.mxu0 0.0
    %1439 = vmatpush1.xpose.msra.mxu0 0.0
    %1440 = vmatprep.mubr.f32.mxu0 0.0
    %1441 = vmatmul.mubr.f32.gmra.mrb[0].mxu0 %v1372
    %v1442 = vpop.f32.mrb[0].mxu0
    %v1443 = vadd.f32 0.0, %v1442
    %v1444 = vpop.f32.mrb[0].mxu0
    %1445 = vdwg.mxu0
    %1446 = vrot.lane.b32.xlu0 %v278, 104
    %v1447 = vpop.permute.xlu0 %1446
    %1448 = vrot.lane.b32.xlu0 %v278, 72
    %v1449 = vpop.permute.xlu0 %1448
    %v1450 = vsel %vm282, %v1447, 0
    %v1452 = vsel %vm282, %v1449, 0
    %1454 = vmatprep.subr.mxu0 0.0
    %1455 = vmatpush1.xpose.msra.mxu0 %v1452
    %1456 = vmatprep.subr.mxu0 0.0
    %1457 = vmatpush1.xpose.msra.mxu0 0.0
    %1458 = vmatprep.subr.mxu0 0.0
    %1459 = vmatpush1.xpose.msra.mxu0 0.0
    %1460 = vmatprep.subr.mxu0 0.0
    %1461 = vmatpush1.xpose.msra.mxu0 0.0
    %1462 = vmatprep.subr.mxu0 0.0
    %1463 = vmatpush1.xpose.msra.mxu0 0.0
    %1464 = vmatprep.subr.mxu0 0.0
    %1465 = vmatpush1.xpose.msra.mxu0 0.0
    %1466 = vmatprep.subr.mxu0 0.0
    %1467 = vmatpush1.xpose.msra.mxu0 0.0
    %1468 = vmatprep.subr.mxu0 0.0
    %1469 = vmatpush1.xpose.msra.mxu0 0.0
    %1470 = vmatprep.subr.mxu0 0.0
    %1471 = vmatpush1.xpose.msra.mxu0 0.0
    %1472 = vmatprep.subr.mxu0 0.0
    %1473 = vmatpush1.xpose.msra.mxu0 0.0
    %1474 = vmatprep.subr.mxu0 0.0
    %1475 = vmatpush1.xpose.msra.mxu0 0.0
    %1476 = vmatprep.subr.mxu0 0.0
    %1477 = vmatpush1.xpose.msra.mxu0 0.0
    %1478 = vmatprep.subr.mxu0 0.0
    %1479 = vmatpush1.xpose.msra.mxu0 0.0
    %1480 = vmatprep.subr.mxu0 0.0
    %1481 = vmatpush1.xpose.msra.mxu0 0.0
    %1482 = vmatprep.subr.mxu0 0.0
    %1483 = vmatpush1.xpose.msra.mxu0 0.0
    %1484 = vmatprep.subr.mxu0 0.0
    %1485 = vmatpush1.xpose.msra.mxu0 0.0
    %1486 = vmatprep.subr.mxu0 0.0
    %1487 = vmatpush1.xpose.msra.mxu0 0.0
    %1488 = vmatprep.subr.mxu0 0.0
    %1489 = vmatpush1.xpose.msra.mxu0 0.0
    %1490 = vmatprep.subr.mxu0 0.0
    %1491 = vmatpush1.xpose.msra.mxu0 0.0
    %1492 = vmatprep.subr.mxu0 0.0
    %1493 = vmatpush1.xpose.msra.mxu0 0.0
    %1494 = vmatprep.subr.mxu0 0.0
    %1495 = vmatpush1.xpose.msra.mxu0 0.0
    %1496 = vmatprep.subr.mxu0 0.0
    %1497 = vmatpush1.xpose.msra.mxu0 0.0
    %1498 = vmatprep.subr.mxu0 0.0
    %1499 = vmatpush1.xpose.msra.mxu0 0.0
    %1500 = vmatprep.subr.mxu0 0.0
    %1501 = vmatpush1.xpose.msra.mxu0 0.0
    %1502 = vmatprep.subr.mxu0 0.0
    %1503 = vmatpush1.xpose.msra.mxu0 0.0
    %1504 = vmatprep.subr.mxu0 0.0
    %1505 = vmatpush1.xpose.msra.mxu0 0.0
    %1506 = vmatprep.subr.mxu0 0.0
    %1507 = vmatpush1.xpose.msra.mxu0 0.0
    %1508 = vmatprep.subr.mxu0 0.0
    %1509 = vmatpush1.xpose.msra.mxu0 0.0
    %1510 = vmatprep.subr.mxu0 0.0
    %1511 = vmatpush1.xpose.msra.mxu0 0.0
    %1512 = vmatprep.subr.mxu0 0.0
    %1513 = vmatpush1.xpose.msra.mxu0 0.0
    %1514 = vmatprep.subr.mxu0 0.0
    %1515 = vmatpush1.xpose.msra.mxu0 0.0
    %1516 = vmatprep.subr.mxu0 0.0
    %1517 = vmatpush1.xpose.msra.mxu0 0.0
    %1518 = vmatprep.mubr.f32.mxu0 0.0
    %1519 = vmatmul.mubr.f32.gmra.mrb[0].mxu0 %v1450
    %v1520 = vpop.f32.mrb[0].mxu0
    %v1521 = vadd.f32 0.0, %v1520
    %v1522 = vpop.f32.mrb[0].mxu0
    %1523 = vdwg.mxu0
    %v1524 = vmul.f32 %v354, 0.35355338
    %v1525 = vmul.f32 %v663, 0.35355338
    %v1526 = vmul.f32 %v975, 0.35355338
    %v1527 = vmul.f32 %v1287, 0.35355338
    %v1528 = vmul.f32 %v431, 0.35355338
    %v1529 = vmul.f32 %v741, 0.35355338
    %v1530 = vmul.f32 %v1053, 0.35355338
    %v1531 = vmul.f32 %v1365, 0.35355338
    %v1532 = vmul.f32 %v508, 0.35355338
    %v1533 = vmul.f32 %v819, 0.35355338
    %v1534 = vmul.f32 %v1131, 0.35355338
    %v1535 = vmul.f32 %v1443, 0.35355338
    %v1536 = vmul.f32 %v585, 0.35355338
    %v1537 = vmul.f32 %v897, 0.35355338
    %v1538 = vmul.f32 %v1209, 0.35355338
    %v1539 = vmul.f32 %v1521, 0.35355338
    %v1540 = vsel %vm282, %v1524, -inf
    %1541 = vmax.xlane.f32.xlu0 %v1540
    %v1542 = vpop.xlane.xlu0 %1541
    %v1543 = vsel %vm282, %v1525, -inf
    %1544 = vmax.xlane.f32.xlu0 %v1543
    %v1545 = vpop.xlane.xlu0 %1544
    %v1546 = vsel %vm282, %v1526, -inf
    %1547 = vmax.xlane.f32.xlu0 %v1546
    %v1548 = vpop.xlane.xlu0 %1547
    %v1549 = vsel %vm282, %v1527, -inf
    %1550 = vmax.xlane.f32.xlu0 %v1549
    %v1551 = vpop.xlane.xlu0 %1550
    %v1552 = vsel %vm282, %v1528, -inf
    %1553 = vmax.xlane.f32.xlu0 %v1552
    %v1554 = vpop.xlane.xlu0 %1553
    %v1555 = vsel %vm282, %v1529, -inf
    %1556 = vmax.xlane.f32.xlu0 %v1555
    %v1557 = vpop.xlane.xlu0 %1556
    %v1558 = vsel %vm282, %v1530, -inf
    %1559 = vmax.xlane.f32.xlu0 %v1558
    %v1560 = vpop.xlane.xlu0 %1559
    %v1561 = vsel %vm282, %v1531, -inf
    %1562 = vmax.xlane.f32.xlu0 %v1561
    %v1563 = vpop.xlane.xlu0 %1562
    %v1564 = vsel %vm282, %v1532, -inf
    %1565 = vmax.xlane.f32.xlu0 %v1564
    %v1566 = vpop.xlane.xlu0 %1565
    %v1567 = vsel %vm282, %v1533, -inf
    %1568 = vmax.xlane.f32.xlu0 %v1567
    %v1569 = vpop.xlane.xlu0 %1568
    %v1570 = vsel %vm282, %v1534, -inf
    %1571 = vmax.xlane.f32.xlu0 %v1570
    %v1572 = vpop.xlane.xlu0 %1571
    %v1573 = vsel %vm282, %v1535, -inf
    %1574 = vmax.xlane.f32.xlu0 %v1573
    %v1575 = vpop.xlane.xlu0 %1574
    %v1576 = vsel %vm282, %v1536, -inf
    %1577 = vmax.xlane.f32.xlu0 %v1576
    %v1578 = vpop.xlane.xlu0 %1577
    %v1579 = vsel %vm282, %v1537, -inf
    %1580 = vmax.xlane.f32.xlu0 %v1579
    %v1581 = vpop.xlane.xlu0 %1580
    %v1582 = vsel %vm282, %v1538, -inf
    %1583 = vmax.xlane.f32.xlu0 %v1582
    %v1584 = vpop.xlane.xlu0 %1583
    %v1585 = vsel %vm282, %v1539, -inf
    %1586 = vmax.xlane.f32.xlu0 %v1585
    %v1587 = vpop.xlane.xlu0 %1586
    %v1588 = vsub.f32 %v1524, %v1542
    %v1589 = vsub.f32 %v1525, %v1545
    %v1590 = vsub.f32 %v1526, %v1548
    %v1591 = vsub.f32 %v1527, %v1551
    %v1592 = vsub.f32 %v1528, %v1554
    %v1593 = vsub.f32 %v1529, %v1557
    %v1594 = vsub.f32 %v1530, %v1560
    %v1595 = vsub.f32 %v1531, %v1563
    %v1596 = vsub.f32 %v1532, %v1566
    %v1597 = vsub.f32 %v1533, %v1569
    %v1598 = vsub.f32 %v1534, %v1572
    %v1599 = vsub.f32 %v1535, %v1575
    %v1600 = vsub.f32 %v1536, %v1578
    %v1601 = vsub.f32 %v1537, %v1581
    %v1602 = vsub.f32 %v1538, %v1584
    %v1603 = vsub.f32 %v1539, %v1587
    %v1604 = vmul.f32 %v1588, 1.442695
    %v1605 = vpow.pop %v1604
    %v1606 = vmul.f32 %v1589, 1.442695
    %v1607 = vpow.pop %v1606
    %v1608 = vmul.f32 %v1590, 1.442695
    %v1609 = vpow.pop %v1608
    %v1610 = vmul.f32 %v1591, 1.442695
    %v1611 = vpow.pop %v1610
    %v1612 = vmul.f32 %v1592, 1.442695
    %v1613 = vpow.pop %v1612
    %v1614 = vmul.f32 %v1593, 1.442695
    %v1615 = vpow.pop %v1614
    %v1616 = vmul.f32 %v1594, 1.442695
    %v1617 = vpow.pop %v1616
    %v1618 = vmul.f32 %v1595, 1.442695
    %v1619 = vpow.pop %v1618
    %v1620 = vmul.f32 %v1596, 1.442695
    %v1621 = vpow.pop %v1620
    %v1622 = vmul.f32 %v1597, 1.442695
    %v1623 = vpow.pop %v1622
    %v1624 = vmul.f32 %v1598, 1.442695
    %v1625 = vpow.pop %v1624
    %v1626 = vmul.f32 %v1599, 1.442695
    %v1627 = vpow.pop %v1626
    %v1628 = vmul.f32 %v1600, 1.442695
    %v1629 = vpow.pop %v1628
    %v1630 = vmul.f32 %v1601, 1.442695
    %v1631 = vpow.pop %v1630
    %v1632 = vmul.f32 %v1602, 1.442695
    %v1633 = vpow.pop %v1632
    %v1634 = vmul.f32 %v1603, 1.442695
    %v1635 = vpow.pop %v1634
    %v1636 = vsel %vm282, %v1605, 0.0
    %1637 = vadd.xlane.f32.xlu0 %v1636
    %v1638 = vpop.xlane.xlu0 %1637
    %v1639 = vsel %vm282, %v1607, 0.0
    %1640 = vadd.xlane.f32.xlu0 %v1639
    %v1641 = vpop.xlane.xlu0 %1640
    %v1642 = vsel %vm282, %v1609, 0.0
    %1643 = vadd.xlane.f32.xlu0 %v1642
    %v1644 = vpop.xlane.xlu0 %1643
    %v1645 = vsel %vm282, %v1611, 0.0
    %1646 = vadd.xlane.f32.xlu0 %v1645
    %v1647 = vpop.xlane.xlu0 %1646
    %v1648 = vsel %vm282, %v1613, 0.0
    %1649 = vadd.xlane.f32.xlu0 %v1648
    %v1650 = vpop.xlane.xlu0 %1649
    %v1651 = vsel %vm282, %v1615, 0.0
    %1652 = vadd.xlane.f32.xlu0 %v1651
    %v1653 = vpop.xlane.xlu0 %1652
    %v1654 = vsel %vm282, %v1617, 0.0
    %1655 = vadd.xlane.f32.xlu0 %v1654
    %v1656 = vpop.xlane.xlu0 %1655
    %v1657 = vsel %vm282, %v1619, 0.0
    %1658 = vadd.xlane.f32.xlu0 %v1657
    %v1659 = vpop.xlane.xlu0 %1658
    %v1660 = vsel %vm282, %v1621, 0.0
    %1661 = vadd.xlane.f32.xlu0 %v1660
    %v1662 = vpop.xlane.xlu0 %1661
    %v1663 = vsel %vm282, %v1623, 0.0
    %1664 = vadd.xlane.f32.xlu0 %v1663
    %v1665 = vpop.xlane.xlu0 %1664
    %v1666 = vsel %vm282, %v1625, 0.0
    %1667 = vadd.xlane.f32.xlu0 %v1666
    %v1668 = vpop.xlane.xlu0 %1667
    %v1669 = vsel %vm282, %v1627, 0.0
    %1670 = vadd.xlane.f32.xlu0 %v1669
    %v1671 = vpop.xlane.xlu0 %1670
    %v1672 = vsel %vm282, %v1629, 0.0
    %1673 = vadd.xlane.f32.xlu0 %v1672
    %v1674 = vpop.xlane.xlu0 %1673
    %v1675 = vsel %vm282, %v1631, 0.0
    %1676 = vadd.xlane.f32.xlu0 %v1675
    %v1677 = vpop.xlane.xlu0 %1676
    %v1678 = vsel %vm282, %v1633, 0.0
    %1679 = vadd.xlane.f32.xlu0 %v1678
    %v1680 = vpop.xlane.xlu0 %1679
    %v1681 = vsel %vm282, %v1635, 0.0
    %1682 = vadd.xlane.f32.xlu0 %v1681
    %v1683 = vpop.xlane.xlu0 %1682
    %v1684 = vrcp.pop %v1638
    %v1685 = vrcp.pop %v1641
    %v1686 = vrcp.pop %v1644
    %v1687 = vrcp.pop %v1647
    %v1688 = vrcp.pop %v1650
    %v1689 = vrcp.pop %v1653
    %v1690 = vrcp.pop %v1656
    %v1691 = vrcp.pop %v1659
    %v1692 = vrcp.pop %v1662
    %v1693 = vrcp.pop %v1665
    %v1694 = vrcp.pop %v1668
    %v1695 = vrcp.pop %v1671
    %v1696 = vrcp.pop %v1674
    %v1697 = vrcp.pop %v1677
    %v1698 = vrcp.pop %v1680
    %v1699 = vrcp.pop %v1683
    %v1700 = vmul.f32 %v1605, %v1684
    %v1701 = vmul.f32 %v1607, %v1685
    %v1702 = vmul.f32 %v1609, %v1686
    %v1703 = vmul.f32 %v1611, %v1687
    %v1704 = vmul.f32 %v1613, %v1688
    %v1705 = vmul.f32 %v1615, %v1689
    %v1706 = vmul.f32 %v1617, %v1690
    %v1707 = vmul.f32 %v1619, %v1691
    %v1708 = vmul.f32 %v1621, %v1692
    %v1709 = vmul.f32 %v1623, %v1693
    %v1710 = vmul.f32 %v1625, %v1694
    %v1711 = vmul.f32 %v1627, %v1695
    %v1712 = vmul.f32 %v1629, %v1696
    %v1713 = vmul.f32 %v1631, %v1697
    %v1714 = vmul.f32 %v1633, %v1698
    %v1715 = vmul.f32 %v1635, %v1699
    %1716 = vrot.lane.b32.xlu0 %v275, 64
    %v1717 = vpop.permute.xlu0 %1716
    %v1720 = vsel %vm282, %v1700, 0
    %1722 = vmatprep.subr.mxu0 0.0
    %1723 = vmatpush1.msra.mxu0 %v1717
    %1724 = vmatprep.subr.mxu0 0.0
    %1725 = vmatpush1.msra.mxu0 0.0
    %1726 = vmatprep.subr.mxu0 0.0
    %1727 = vmatpush1.msra.mxu0 0.0
    %1728 = vmatprep.subr.mxu0 0.0
    %1729 = vmatpush1.msra.mxu0 0.0
    %1730 = vmatprep.subr.mxu0 0.0
    %1731 = vmatpush1.msra.mxu0 0.0
    %1732 = vmatprep.subr.mxu0 0.0
    %1733 = vmatpush1.msra.mxu0 0.0
    %1734 = vmatprep.subr.mxu0 0.0
    %1735 = vmatpush1.msra.mxu0 0.0
    %1736 = vmatprep.subr.mxu0 0.0
    %1737 = vmatpush1.msra.mxu0 0.0
    %1738 = vmatprep.subr.mxu0 0.0
    %1739 = vmatpush1.msra.mxu0 0.0
    %1740 = vmatprep.subr.mxu0 0.0
    %1741 = vmatpush1.msra.mxu0 0.0
    %1742 = vmatprep.subr.mxu0 0.0
    %1743 = vmatpush1.msra.mxu0 0.0
    %1744 = vmatprep.subr.mxu0 0.0
    %1745 = vmatpush1.msra.mxu0 0.0
    %1746 = vmatprep.subr.mxu0 0.0
    %1747 = vmatpush1.msra.mxu0 0.0
    %1748 = vmatprep.subr.mxu0 0.0
    %1749 = vmatpush1.msra.mxu0 0.0
    %1750 = vmatprep.subr.mxu0 0.0
    %1751 = vmatpush1.msra.mxu0 0.0
    %1752 = vmatprep.subr.mxu0 0.0
    %1753 = vmatpush1.msra.mxu0 0.0
    %1754 = vmatprep.subr.mxu0 0.0
    %1755 = vmatpush1.msra.mxu0 0.0
    %1756 = vmatprep.subr.mxu0 0.0
    %1757 = vmatpush1.msra.mxu0 0.0
    %1758 = vmatprep.subr.mxu0 0.0
    %1759 = vmatpush1.msra.mxu0 0.0
    %1760 = vmatprep.subr.mxu0 0.0
    %1761 = vmatpush1.msra.mxu0 0.0
    %1762 = vmatprep.subr.mxu0 0.0
    %1763 = vmatpush1.msra.mxu0 0.0
    %1764 = vmatprep.subr.mxu0 0.0
    %1765 = vmatpush1.msra.mxu0 0.0
    %1766 = vmatprep.subr.mxu0 0.0
    %1767 = vmatpush1.msra.mxu0 0.0
    %1768 = vmatprep.subr.mxu0 0.0
    %1769 = vmatpush1.msra.mxu0 0.0
    %1770 = vmatprep.subr.mxu0 0.0
    %1771 = vmatpush1.msra.mxu0 0.0
    %1772 = vmatprep.subr.mxu0 0.0
    %1773 = vmatpush1.msra.mxu0 0.0
    %1774 = vmatprep.subr.mxu0 0.0
    %1775 = vmatpush1.msra.mxu0 0.0
    %1776 = vmatprep.subr.mxu0 0.0
    %1777 = vmatpush1.msra.mxu0 0.0
    %1778 = vmatprep.subr.mxu0 0.0
    %1779 = vmatpush1.msra.mxu0 0.0
    %1780 = vmatprep.subr.mxu0 0.0
    %1781 = vmatpush1.msra.mxu0 0.0
    %1782 = vmatprep.subr.mxu0 0.0
    %1783 = vmatpush1.msra.mxu0 0.0
    %1784 = vmatprep.subr.mxu0 0.0
    %1785 = vmatpush1.msra.mxu0 0.0
    %1786 = vmatprep.mubr.f32.mxu0 0.0
    %1787 = vmatmul.mubr.f32.gmra.mrb[0].mxu0 %v1720
    %v1788 = vpop.f32.mrb[0].mxu0
    %v1789 = vadd.f32 0.0, %v1788
    %v1790 = vpop.f32.mrb[0].mxu0
    %1791 = vdwg.mxu0
    %1792 = vrot.lane.b32.xlu0 %v276, 64
    %v1793 = vpop.permute.xlu0 %1792
    %v1796 = vsel %vm282, %v1704, 0
    %1798 = vmatprep.subr.mxu0 0.0
    %1799 = vmatpush1.msra.mxu0 %v1793
    %1800 = vmatprep.subr.mxu0 0.0
    %1801 = vmatpush1.msra.mxu0 0.0
    %1802 = vmatprep.subr.mxu0 0.0
    %1803 = vmatpush1.msra.mxu0 0.0
    %1804 = vmatprep.subr.mxu0 0.0
    %1805 = vmatpush1.msra.mxu0 0.0
    %1806 = vmatprep.subr.mxu0 0.0
    %1807 = vmatpush1.msra.mxu0 0.0
    %1808 = vmatprep.subr.mxu0 0.0
    %1809 = vmatpush1.msra.mxu0 0.0
    %1810 = vmatprep.subr.mxu0 0.0
    %1811 = vmatpush1.msra.mxu0 0.0
    %1812 = vmatprep.subr.mxu0 0.0
    %1813 = vmatpush1.msra.mxu0 0.0
    %1814 = vmatprep.subr.mxu0 0.0
    %1815 = vmatpush1.msra.mxu0 0.0
    %1816 = vmatprep.subr.mxu0 0.0
    %1817 = vmatpush1.msra.mxu0 0.0
    %1818 = vmatprep.subr.mxu0 0.0
    %1819 = vmatpush1.msra.mxu0 0.0
    %1820 = vmatprep.subr.mxu0 0.0
    %1821 = vmatpush1.msra.mxu0 0.0
    %1822 = vmatprep.subr.mxu0 0.0
    %1823 = vmatpush1.msra.mxu0 0.0
    %1824 = vmatprep.subr.mxu0 0.0
    %1825 = vmatpush1.msra.mxu0 0.0
    %1826 = vmatprep.subr.mxu0 0.0
    %1827 = vmatpush1.msra.mxu0 0.0
    %1828 = vmatprep.subr.mxu0 0.0
    %1829 = vmatpush1.msra.mxu0 0.0
    %1830 = vmatprep.subr.mxu0 0.0
    %1831 = vmatpush1.msra.mxu0 0.0
    %1832 = vmatprep.subr.mxu0 0.0
    %1833 = vmatpush1.msra.mxu0 0.0
    %1834 = vmatprep.subr.mxu0 0.0
    %1835 = vmatpush1.msra.mxu0 0.0
    %1836 = vmatprep.subr.mxu0 0.0
    %1837 = vmatpush1.msra.mxu0 0.0
    %1838 = vmatprep.subr.mxu0 0.0
    %1839 = vmatpush1.msra.mxu0 0.0
    %1840 = vmatprep.subr.mxu0 0.0
    %1841 = vmatpush1.msra.mxu0 0.0
    %1842 = vmatprep.subr.mxu0 0.0
    %1843 = vmatpush1.msra.mxu0 0.0
    %1844 = vmatprep.subr.mxu0 0.0
    %1845 = vmatpush1.msra.mxu0 0.0
    %1846 = vmatprep.subr.mxu0 0.0
    %1847 = vmatpush1.msra.mxu0 0.0
    %1848 = vmatprep.subr.mxu0 0.0
    %1849 = vmatpush1.msra.mxu0 0.0
    %1850 = vmatprep.subr.mxu0 0.0
    %1851 = vmatpush1.msra.mxu0 0.0
    %1852 = vmatprep.subr.mxu0 0.0
    %1853 = vmatpush1.msra.mxu0 0.0
    %1854 = vmatprep.subr.mxu0 0.0
    %1855 = vmatpush1.msra.mxu0 0.0
    %1856 = vmatprep.subr.mxu0 0.0
    %1857 = vmatpush1.msra.mxu0 0.0
    %1858 = vmatprep.subr.mxu0 0.0
    %1859 = vmatpush1.msra.mxu0 0.0
    %1860 = vmatprep.subr.mxu0 0.0
    %1861 = vmatpush1.msra.mxu0 0.0
    %1862 = vmatprep.mubr.f32.mxu0 0.0
    %1863 = vmatmul.mubr.f32.gmra.mrb[0].mxu0 %v1796
    %v1864 = vpop.f32.mrb[0].mxu0
    %v1865 = vadd.f32 0.0, %v1864
    %v1866 = vpop.f32.mrb[0].mxu0
    %1867 = vdwg.mxu0
    %1868 = vrot.lane.b32.xlu0 %v277, 64
    %v1869 = vpop.permute.xlu0 %1868
    %v1872 = vsel %vm282, %v1708, 0
    %1874 = vmatprep.subr.mxu0 0.0
    %1875 = vmatpush1.msra.mxu0 %v1869
    %1876 = vmatprep.subr.mxu0 0.0
    %1877 = vmatpush1.msra.mxu0 0.0
    %1878 = vmatprep.subr.mxu0 0.0
    %1879 = vmatpush1.msra.mxu0 0.0
    %1880 = vmatprep.subr.mxu0 0.0
    %1881 = vmatpush1.msra.mxu0 0.0
    %1882 = vmatprep.subr.mxu0 0.0
    %1883 = vmatpush1.msra.mxu0 0.0
    %1884 = vmatprep.subr.mxu0 0.0
    %1885 = vmatpush1.msra.mxu0 0.0
    %1886 = vmatprep.subr.mxu0 0.0
    %1887 = vmatpush1.msra.mxu0 0.0
    %1888 = vmatprep.subr.mxu0 0.0
    %1889 = vmatpush1.msra.mxu0 0.0
    %1890 = vmatprep.subr.mxu0 0.0
    %1891 = vmatpush1.msra.mxu0 0.0
    %1892 = vmatprep.subr.mxu0 0.0
    %1893 = vmatpush1.msra.mxu0 0.0
    %1894 = vmatprep.subr.mxu0 0.0
    %1895 = vmatpush1.msra.mxu0 0.0
    %1896 = vmatprep.subr.mxu0 0.0
    %1897 = vmatpush1.msra.mxu0 0.0
    %1898 = vmatprep.subr.mxu0 0.0
    %1899 = vmatpush1.msra.mxu0 0.0
    %1900 = vmatprep.subr.mxu0 0.0
    %1901 = vmatpush1.msra.mxu0 0.0
    %1902 = vmatprep.subr.mxu0 0.0
    %1903 = vmatpush1.msra.mxu0 0.0
    %1904 = vmatprep.subr.mxu0 0.0
    %1905 = vmatpush1.msra.mxu0 0.0
    %1906 = vmatprep.subr.mxu0 0.0
    %1907 = vmatpush1.msra.mxu0 0.0
    %1908 = vmatprep.subr.mxu0 0.0
    %1909 = vmatpush1.msra.mxu0 0.0
    %1910 = vmatprep.subr.mxu0 0.0
    %1911 = vmatpush1.msra.mxu0 0.0
    %1912 = vmatprep.subr.mxu0 0.0
    %1913 = vmatpush1.msra.mxu0 0.0
    %1914 = vmatprep.subr.mxu0 0.0
    %1915 = vmatpush1.msra.mxu0 0.0
    %1916 = vmatprep.subr.mxu0 0.0
    %1917 = vmatpush1.msra.mxu0 0.0
    %1918 = vmatprep.subr.mxu0 0.0
    %1919 = vmatpush1.msra.mxu0 0.0
    %1920 = vmatprep.subr.mxu0 0.0
    %1921 = vmatpush1.msra.mxu0 0.0
    %1922 = vmatprep.subr.mxu0 0.0
    %1923 = vmatpush1.msra.mxu0 0.0
    %1924 = vmatprep.subr.mxu0 0.0
    %1925 = vmatpush1.msra.mxu0 0.0
    %1926 = vmatprep.subr.mxu0 0.0
    %1927 = vmatpush1.msra.mxu0 0.0
    %1928 = vmatprep.subr.mxu0 0.0
    %1929 = vmatpush1.msra.mxu0 0.0
    %1930 = vmatprep.subr.mxu0 0.0
    %1931 = vmatpush1.msra.mxu0 0.0
    %1932 = vmatprep.subr.mxu0 0.0
    %1933 = vmatpush1.msra.mxu0 0.0
    %1934 = vmatprep.subr.mxu0 0.0
    %1935 = vmatpush1.msra.mxu0 0.0
    %1936 = vmatprep.subr.mxu0 0.0
    %1937 = vmatpush1.msra.mxu0 0.0
    %1938 = vmatprep.mubr.f32.mxu0 0.0
    %1939 = vmatmul.mubr.f32.gmra.mrb[0].mxu0 %v1872
    %v1940 = vpop.f32.mrb[0].mxu0
    %v1941 = vadd.f32 0.0, %v1940
    %v1942 = vpop.f32.mrb[0].mxu0
    %1943 = vdwg.mxu0
    %1944 = vrot.lane.b32.xlu0 %v278, 64
    %v1945 = vpop.permute.xlu0 %1944
    %v1948 = vsel %vm282, %v1712, 0
    %1950 = vmatprep.subr.mxu0 0.0
    %1951 = vmatpush1.msra.mxu0 %v1945
    %1952 = vmatprep.subr.mxu0 0.0
    %1953 = vmatpush1.msra.mxu0 0.0
    %1954 = vmatprep.subr.mxu0 0.0
    %1955 = vmatpush1.msra.mxu0 0.0
    %1956 = vmatprep.subr.mxu0 0.0
    %1957 = vmatpush1.msra.mxu0 0.0
    %1958 = vmatprep.subr.mxu0 0.0
    %1959 = vmatpush1.msra.mxu0 0.0
    %1960 = vmatprep.subr.mxu0 0.0
    %1961 = vmatpush1.msra.mxu0 0.0
    %1962 = vmatprep.subr.mxu0 0.0
    %1963 = vmatpush1.msra.mxu0 0.0
    %1964 = vmatprep.subr.mxu0 0.0
    %1965 = vmatpush1.msra.mxu0 0.0
    %1966 = vmatprep.subr.mxu0 0.0
    %1967 = vmatpush1.msra.mxu0 0.0
    %1968 = vmatprep.subr.mxu0 0.0
    %1969 = vmatpush1.msra.mxu0 0.0
    %1970 = vmatprep.subr.mxu0 0.0
    %1971 = vmatpush1.msra.mxu0 0.0
    %1972 = vmatprep.subr.mxu0 0.0
    %1973 = vmatpush1.msra.mxu0 0.0
    %1974 = vmatprep.subr.mxu0 0.0
    %1975 = vmatpush1.msra.mxu0 0.0
    %1976 = vmatprep.subr.mxu0 0.0
    %1977 = vmatpush1.msra.mxu0 0.0
    %1978 = vmatprep.subr.mxu0 0.0
    %1979 = vmatpush1.msra.mxu0 0.0
    %1980 = vmatprep.subr.mxu0 0.0
    %1981 = vmatpush1.msra.mxu0 0.0
    %1982 = vmatprep.subr.mxu0 0.0
    %1983 = vmatpush1.msra.mxu0 0.0
    %1984 = vmatprep.subr.mxu0 0.0
    %1985 = vmatpush1.msra.mxu0 0.0
    %1986 = vmatprep.subr.mxu0 0.0
    %1987 = vmatpush1.msra.mxu0 0.0
    %1988 = vmatprep.subr.mxu0 0.0
    %1989 = vmatpush1.msra.mxu0 0.0
    %1990 = vmatprep.subr.mxu0 0.0
    %1991 = vmatpush1.msra.mxu0 0.0
    %1992 = vmatprep.subr.mxu0 0.0
    %1993 = vmatpush1.msra.mxu0 0.0
    %1994 = vmatprep.subr.mxu0 0.0
    %1995 = vmatpush1.msra.mxu0 0.0
    %1996 = vmatprep.subr.mxu0 0.0
    %1997 = vmatpush1.msra.mxu0 0.0
    %1998 = vmatprep.subr.mxu0 0.0
    %1999 = vmatpush1.msra.mxu0 0.0
    %2000 = vmatprep.subr.mxu0 0.0
    %2001 = vmatpush1.msra.mxu0 0.0
    %2002 = vmatprep.subr.mxu0 0.0
    %2003 = vmatpush1.msra.mxu0 0.0
    %2004 = vmatprep.subr.mxu0 0.0
    %2005 = vmatpush1.msra.mxu0 0.0
    %2006 = vmatprep.subr.mxu0 0.0
    %2007 = vmatpush1.msra.mxu0 0.0
    %2008 = vmatprep.subr.mxu0 0.0
    %2009 = vmatpush1.msra.mxu0 0.0
    %2010 = vmatprep.subr.mxu0 0.0
    %2011 = vmatpush1.msra.mxu0 0.0
    %2012 = vmatprep.subr.mxu0 0.0
    %2013 = vmatpush1.msra.mxu0 0.0
    %2014 = vmatprep.mubr.f32.mxu0 0.0
    %2015 = vmatmul.mubr.f32.gmra.mrb[0].mxu0 %v1948
    %v2016 = vpop.f32.mrb[0].mxu0
    %v2017 = vadd.f32 0.0, %v2016
    %v2018 = vpop.f32.mrb[0].mxu0
    %2019 = vdwg.mxu0
    %2020 = vrot.lane.b32.xlu0 %v275, 56
    %v2021 = vpop.permute.xlu0 %2020
    %v2024 = vsel %vm282, %v1701, 0
    %2026 = vmatprep.subr.mxu0 0.0
    %2027 = vmatpush1.msra.mxu0 %v2021
    %2028 = vmatprep.subr.mxu0 0.0
    %2029 = vmatpush1.msra.mxu0 0.0
    %2030 = vmatprep.subr.mxu0 0.0
    %2031 = vmatpush1.msra.mxu0 0.0
    %2032 = vmatprep.subr.mxu0 0.0
    %2033 = vmatpush1.msra.mxu0 0.0
    %2034 = vmatprep.subr.mxu0 0.0
    %2035 = vmatpush1.msra.mxu0 0.0
    %2036 = vmatprep.subr.mxu0 0.0
    %2037 = vmatpush1.msra.mxu0 0.0
    %2038 = vmatprep.subr.mxu0 0.0
    %2039 = vmatpush1.msra.mxu0 0.0
    %2040 = vmatprep.subr.mxu0 0.0
    %2041 = vmatpush1.msra.mxu0 0.0
    %2042 = vmatprep.subr.mxu0 0.0
    %2043 = vmatpush1.msra.mxu0 0.0
    %2044 = vmatprep.subr.mxu0 0.0
    %2045 = vmatpush1.msra.mxu0 0.0
    %2046 = vmatprep.subr.mxu0 0.0
    %2047 = vmatpush1.msra.mxu0 0.0
    %2048 = vmatprep.subr.mxu0 0.0
    %2049 = vmatpush1.msra.mxu0 0.0
    %2050 = vmatprep.subr.mxu0 0.0
    %2051 = vmatpush1.msra.mxu0 0.0
    %2052 = vmatprep.subr.mxu0 0.0
    %2053 = vmatpush1.msra.mxu0 0.0
    %2054 = vmatprep.subr.mxu0 0.0
    %2055 = vmatpush1.msra.mxu0 0.0
    %2056 = vmatprep.subr.mxu0 0.0
    %2057 = vmatpush1.msra.mxu0 0.0
    %2058 = vmatprep.subr.mxu0 0.0
    %2059 = vmatpush1.msra.mxu0 0.0
    %2060 = vmatprep.subr.mxu0 0.0
    %2061 = vmatpush1.msra.mxu0 0.0
    %2062 = vmatprep.subr.mxu0 0.0
    %2063 = vmatpush1.msra.mxu0 0.0
    %2064 = vmatprep.subr.mxu0 0.0
    %2065 = vmatpush1.msra.mxu0 0.0
    %2066 = vmatprep.subr.mxu0 0.0
    %2067 = vmatpush1.msra.mxu0 0.0
    %2068 = vmatprep.subr.mxu0 0.0
    %2069 = vmatpush1.msra.mxu0 0.0
    %2070 = vmatprep.subr.mxu0 0.0
    %2071 = vmatpush1.msra.mxu0 0.0
    %2072 = vmatprep.subr.mxu0 0.0
    %2073 = vmatpush1.msra.mxu0 0.0
    %2074 = vmatprep.subr.mxu0 0.0
    %2075 = vmatpush1.msra.mxu0 0.0
    %2076 = vmatprep.subr.mxu0 0.0
    %2077 = vmatpush1.msra.mxu0 0.0
    %2078 = vmatprep.subr.mxu0 0.0
    %2079 = vmatpush1.msra.mxu0 0.0
    %2080 = vmatprep.subr.mxu0 0.0
    %2081 = vmatpush1.msra.mxu0 0.0
    %2082 = vmatprep.subr.mxu0 0.0
    %2083 = vmatpush1.msra.mxu0 0.0
    %2084 = vmatprep.subr.mxu0 0.0
    %2085 = vmatpush1.msra.mxu0 0.0
    %2086 = vmatprep.subr.mxu0 0.0
    %2087 = vmatpush1.msra.mxu0 0.0
    %2088 = vmatprep.subr.mxu0 0.0
    %2089 = vmatpush1.msra.mxu0 0.0
    %2090 = vmatprep.mubr.f32.mxu0 0.0
    %2091 = vmatmul.mubr.f32.gmra.mrb[0].mxu0 %v2024
    %v2092 = vpop.f32.mrb[0].mxu0
    %v2093 = vadd.f32 0.0, %v2092
    %v2094 = vpop.f32.mrb[0].mxu0
    %2095 = vdwg.mxu0
    %2096 = vrot.lane.b32.xlu0 %v276, 56
    %v2097 = vpop.permute.xlu0 %2096
    %v2100 = vsel %vm282, %v1705, 0
    %2102 = vmatprep.subr.mxu0 0.0
    %2103 = vmatpush1.msra.mxu0 %v2097
    %2104 = vmatprep.subr.mxu0 0.0
    %2105 = vmatpush1.msra.mxu0 0.0
    %2106 = vmatprep.subr.mxu0 0.0
    %2107 = vmatpush1.msra.mxu0 0.0
    %2108 = vmatprep.subr.mxu0 0.0
    %2109 = vmatpush1.msra.mxu0 0.0
    %2110 = vmatprep.subr.mxu0 0.0
    %2111 = vmatpush1.msra.mxu0 0.0
    %2112 = vmatprep.subr.mxu0 0.0
    %2113 = vmatpush1.msra.mxu0 0.0
    %2114 = vmatprep.subr.mxu0 0.0
    %2115 = vmatpush1.msra.mxu0 0.0
    %2116 = vmatprep.subr.mxu0 0.0
    %2117 = vmatpush1.msra.mxu0 0.0
    %2118 = vmatprep.subr.mxu0 0.0
    %2119 = vmatpush1.msra.mxu0 0.0
    %2120 = vmatprep.subr.mxu0 0.0
    %2121 = vmatpush1.msra.mxu0 0.0
    %2122 = vmatprep.subr.mxu0 0.0
    %2123 = vmatpush1.msra.mxu0 0.0
    %2124 = vmatprep.subr.mxu0 0.0
    %2125 = vmatpush1.msra.mxu0 0.0
    %2126 = vmatprep.subr.mxu0 0.0
    %2127 = vmatpush1.msra.mxu0 0.0
    %2128 = vmatprep.subr.mxu0 0.0
    %2129 = vmatpush1.msra.mxu0 0.0
    %2130 = vmatprep.subr.mxu0 0.0
    %2131 = vmatpush1.msra.mxu0 0.0
    %2132 = vmatprep.subr.mxu0 0.0
    %2133 = vmatpush1.msra.mxu0 0.0
    %2134 = vmatprep.subr.mxu0 0.0
    %2135 = vmatpush1.msra.mxu0 0.0
    %2136 = vmatprep.subr.mxu0 0.0
    %2137 = vmatpush1.msra.mxu0 0.0
    %2138 = vmatprep.subr.mxu0 0.0
    %2139 = vmatpush1.msra.mxu0 0.0
    %2140 = vmatprep.subr.mxu0 0.0
    %2141 = vmatpush1.msra.mxu0 0.0
    %2142 = vmatprep.subr.mxu0 0.0
    %2143 = vmatpush1.msra.mxu0 0.0
    %2144 = vmatprep.subr.mxu0 0.0
    %2145 = vmatpush1.msra.mxu0 0.0
    %2146 = vmatprep.subr.mxu0 0.0
    %2147 = vmatpush1.msra.mxu0 0.0
    %2148 = vmatprep.subr.mxu0 0.0
    %2149 = vmatpush1.msra.mxu0 0.0
    %2150 = vmatprep.subr.mxu0 0.0
    %2151 = vmatpush1.msra.mxu0 0.0
    %2152 = vmatprep.subr.mxu0 0.0
    %2153 = vmatpush1.msra.mxu0 0.0
    %2154 = vmatprep.subr.mxu0 0.0
    %2155 = vmatpush1.msra.mxu0 0.0
    %2156 = vmatprep.subr.mxu0 0.0
    %2157 = vmatpush1.msra.mxu0 0.0
    %2158 = vmatprep.subr.mxu0 0.0
    %2159 = vmatpush1.msra.mxu0 0.0
    %2160 = vmatprep.subr.mxu0 0.0
    %2161 = vmatpush1.msra.mxu0 0.0
    %2162 = vmatprep.subr.mxu0 0.0
    %2163 = vmatpush1.msra.mxu0 0.0
    %2164 = vmatprep.subr.mxu0 0.0
    %2165 = vmatpush1.msra.mxu0 0.0
    %2166 = vmatprep.mubr.f32.mxu0 0.0
    %2167 = vmatmul.mubr.f32.gmra.mrb[0].mxu0 %v2100
    %v2168 = vpop.f32.mrb[0].mxu0
    %v2169 = vadd.f32 0.0, %v2168
    %v2170 = vpop.f32.mrb[0].mxu0
    %2171 = vdwg.mxu0
    %2172 = vrot.lane.b32.xlu0 %v277, 56
    %v2173 = vpop.permute.xlu0 %2172
    %v2176 = vsel %vm282, %v1709, 0
    %2178 = vmatprep.subr.mxu0 0.0
    %2179 = vmatpush1.msra.mxu0 %v2173
    %2180 = vmatprep.subr.mxu0 0.0
    %2181 = vmatpush1.msra.mxu0 0.0
    %2182 = vmatprep.subr.mxu0 0.0
    %2183 = vmatpush1.msra.mxu0 0.0
    %2184 = vmatprep.subr.mxu0 0.0
    %2185 = vmatpush1.msra.mxu0 0.0
    %2186 = vmatprep.subr.mxu0 0.0
    %2187 = vmatpush1.msra.mxu0 0.0
    %2188 = vmatprep.subr.mxu0 0.0
    %2189 = vmatpush1.msra.mxu0 0.0
    %2190 = vmatprep.subr.mxu0 0.0
    %2191 = vmatpush1.msra.mxu0 0.0
    %2192 = vmatprep.subr.mxu0 0.0
    %2193 = vmatpush1.msra.mxu0 0.0
    %2194 = vmatprep.subr.mxu0 0.0
    %2195 = vmatpush1.msra.mxu0 0.0
    %2196 = vmatprep.subr.mxu0 0.0
    %2197 = vmatpush1.msra.mxu0 0.0
    %2198 = vmatprep.subr.mxu0 0.0
    %2199 = vmatpush1.msra.mxu0 0.0
    %2200 = vmatprep.subr.mxu0 0.0
    %2201 = vmatpush1.msra.mxu0 0.0
    %2202 = vmatprep.subr.mxu0 0.0
    %2203 = vmatpush1.msra.mxu0 0.0
    %2204 = vmatprep.subr.mxu0 0.0
    %2205 = vmatpush1.msra.mxu0 0.0
    %2206 = vmatprep.subr.mxu0 0.0
    %2207 = vmatpush1.msra.mxu0 0.0
    %2208 = vmatprep.subr.mxu0 0.0
    %2209 = vmatpush1.msra.mxu0 0.0
    %2210 = vmatprep.subr.mxu0 0.0
    %2211 = vmatpush1.msra.mxu0 0.0
    %2212 = vmatprep.subr.mxu0 0.0
    %2213 = vmatpush1.msra.mxu0 0.0
    %2214 = vmatprep.subr.mxu0 0.0
    %2215 = vmatpush1.msra.mxu0 0.0
    %2216 = vmatprep.subr.mxu0 0.0
    %2217 = vmatpush1.msra.mxu0 0.0
    %2218 = vmatprep.subr.mxu0 0.0
    %2219 = vmatpush1.msra.mxu0 0.0
    %2220 = vmatprep.subr.mxu0 0.0
    %2221 = vmatpush1.msra.mxu0 0.0
    %2222 = vmatprep.subr.mxu0 0.0
    %2223 = vmatpush1.msra.mxu0 0.0
    %2224 = vmatprep.subr.mxu0 0.0
    %2225 = vmatpush1.msra.mxu0 0.0
    %2226 = vmatprep.subr.mxu0 0.0
    %2227 = vmatpush1.msra.mxu0 0.0
    %2228 = vmatprep.subr.mxu0 0.0
    %2229 = vmatpush1.msra.mxu0 0.0
    %2230 = vmatprep.subr.mxu0 0.0
    %2231 = vmatpush1.msra.mxu0 0.0
    %2232 = vmatprep.subr.mxu0 0.0
    %2233 = vmatpush1.msra.mxu0 0.0
    %2234 = vmatprep.subr.mxu0 0.0
    %2235 = vmatpush1.msra.mxu0 0.0
    %2236 = vmatprep.subr.mxu0 0.0
    %2237 = vmatpush1.msra.mxu0 0.0
    %2238 = vmatprep.subr.mxu0 0.0
    %2239 = vmatpush1.msra.mxu0 0.0
    %2240 = vmatprep.subr.mxu0 0.0
    %2241 = vmatpush1.msra.mxu0 0.0
    %2242 = vmatprep.mubr.f32.mxu0 0.0
    %2243 = vmatmul.mubr.f32.gmra.mrb[0].mxu0 %v2176
    %v2244 = vpop.f32.mrb[0].mxu0
    %v2245 = vadd.f32 0.0, %v2244
    %v2246 = vpop.f32.mrb[0].mxu0
    %2247 = vdwg.mxu0
    %2248 = vrot.lane.b32.xlu0 %v278, 56
    %v2249 = vpop.permute.xlu0 %2248
    %v2252 = vsel %vm282, %v1713, 0
    %2254 = vmatprep.subr.mxu0 0.0
    %2255 = vmatpush1.msra.mxu0 %v2249
    %2256 = vmatprep.subr.mxu0 0.0
    %2257 = vmatpush1.msra.mxu0 0.0
    %2258 = vmatprep.subr.mxu0 0.0
    %2259 = vmatpush1.msra.mxu0 0.0
    %2260 = vmatprep.subr.mxu0 0.0
    %2261 = vmatpush1.msra.mxu0 0.0
    %2262 = vmatprep.subr.mxu0 0.0
    %2263 = vmatpush1.msra.mxu0 0.0
    %2264 = vmatprep.subr.mxu0 0.0
    %2265 = vmatpush1.msra.mxu0 0.0
    %2266 = vmatprep.subr.mxu0 0.0
    %2267 = vmatpush1.msra.mxu0 0.0
    %2268 = vmatprep.subr.mxu0 0.0
    %2269 = vmatpush1.msra.mxu0 0.0
    %2270 = vmatprep.subr.mxu0 0.0
    %2271 = vmatpush1.msra.mxu0 0.0
    %2272 = vmatprep.subr.mxu0 0.0
    %2273 = vmatpush1.msra.mxu0 0.0
    %2274 = vmatprep.subr.mxu0 0.0
    %2275 = vmatpush1.msra.mxu0 0.0
    %2276 = vmatprep.subr.mxu0 0.0
    %2277 = vmatpush1.msra.mxu0 0.0
    %2278 = vmatprep.subr.mxu0 0.0
    %2279 = vmatpush1.msra.mxu0 0.0
    %2280 = vmatprep.subr.mxu0 0.0
    %2281 = vmatpush1.msra.mxu0 0.0
    %2282 = vmatprep.subr.mxu0 0.0
    %2283 = vmatpush1.msra.mxu0 0.0
    %2284 = vmatprep.subr.mxu0 0.0
    %2285 = vmatpush1.msra.mxu0 0.0
    %2286 = vmatprep.subr.mxu0 0.0
    %2287 = vmatpush1.msra.mxu0 0.0
    %2288 = vmatprep.subr.mxu0 0.0
    %2289 = vmatpush1.msra.mxu0 0.0
    %2290 = vmatprep.subr.mxu0 0.0
    %2291 = vmatpush1.msra.mxu0 0.0
    %2292 = vmatprep.subr.mxu0 0.0
    %2293 = vmatpush1.msra.mxu0 0.0
    %2294 = vmatprep.subr.mxu0 0.0
    %2295 = vmatpush1.msra.mxu0 0.0
    %2296 = vmatprep.subr.mxu0 0.0
    %2297 = vmatpush1.msra.mxu0 0.0
    %2298 = vmatprep.subr.mxu0 0.0
    %2299 = vmatpush1.msra.mxu0 0.0
    %2300 = vmatprep.subr.mxu0 0.0
    %2301 = vmatpush1.msra.mxu0 0.0
    %2302 = vmatprep.subr.mxu0 0.0
    %2303 = vmatpush1.msra.mxu0 0.0
    %2304 = vmatprep.subr.mxu0 0.0
    %2305 = vmatpush1.msra.mxu0 0.0
    %2306 = vmatprep.subr.mxu0 0.0
    %2307 = vmatpush1.msra.mxu0 0.0
    %2308 = vmatprep.subr.mxu0 0.0
    %2309 = vmatpush1.msra.mxu0 0.0
    %2310 = vmatprep.subr.mxu0 0.0
    %2311 = vmatpush1.msra.mxu0 0.0
    %2312 = vmatprep.subr.mxu0 0.0
    %2313 = vmatpush1.msra.mxu0 0.0
    %2314 = vmatprep.subr.mxu0 0.0
    %2315 = vmatpush1.msra.mxu0 0.0
    %2316 = vmatprep.subr.mxu0 0.0
    %2317 = vmatpush1.msra.mxu0 0.0
    %2318 = vmatprep.mubr.f32.mxu0 0.0
    %2319 = vmatmul.mubr.f32.gmra.mrb[0].mxu0 %v2252
    %v2320 = vpop.f32.mrb[0].mxu0
    %v2321 = vadd.f32 0.0, %v2320
    %v2322 = vpop.f32.mrb[0].mxu0
    %2323 = vdwg.mxu0
    %2324 = vrot.lane.b32.xlu0 %v275, 48
    %v2325 = vpop.permute.xlu0 %2324
    %v2328 = vsel %vm282, %v1702, 0
    %2330 = vmatprep.subr.mxu0 0.0
    %2331 = vmatpush1.msra.mxu0 %v2325
    %2332 = vmatprep.subr.mxu0 0.0
    %2333 = vmatpush1.msra.mxu0 0.0
    %2334 = vmatprep.subr.mxu0 0.0
    %2335 = vmatpush1.msra.mxu0 0.0
    %2336 = vmatprep.subr.mxu0 0.0
    %2337 = vmatpush1.msra.mxu0 0.0
    %2338 = vmatprep.subr.mxu0 0.0
    %2339 = vmatpush1.msra.mxu0 0.0
    %2340 = vmatprep.subr.mxu0 0.0
    %2341 = vmatpush1.msra.mxu0 0.0
    %2342 = vmatprep.subr.mxu0 0.0
    %2343 = vmatpush1.msra.mxu0 0.0
    %2344 = vmatprep.subr.mxu0 0.0
    %2345 = vmatpush1.msra.mxu0 0.0
    %2346 = vmatprep.subr.mxu0 0.0
    %2347 = vmatpush1.msra.mxu0 0.0
    %2348 = vmatprep.subr.mxu0 0.0
    %2349 = vmatpush1.msra.mxu0 0.0
    %2350 = vmatprep.subr.mxu0 0.0
    %2351 = vmatpush1.msra.mxu0 0.0
    %2352 = vmatprep.subr.mxu0 0.0
    %2353 = vmatpush1.msra.mxu0 0.0
    %2354 = vmatprep.subr.mxu0 0.0
    %2355 = vmatpush1.msra.mxu0 0.0
    %2356 = vmatprep.subr.mxu0 0.0
    %2357 = vmatpush1.msra.mxu0 0.0
    %2358 = vmatprep.subr.mxu0 0.0
    %2359 = vmatpush1.msra.mxu0 0.0
    %2360 = vmatprep.subr.mxu0 0.0
    %2361 = vmatpush1.msra.mxu0 0.0
    %2362 = vmatprep.subr.mxu0 0.0
    %2363 = vmatpush1.msra.mxu0 0.0
    %2364 = vmatprep.subr.mxu0 0.0
    %2365 = vmatpush1.msra.mxu0 0.0
    %2366 = vmatprep.subr.mxu0 0.0
    %2367 = vmatpush1.msra.mxu0 0.0
    %2368 = vmatprep.subr.mxu0 0.0
    %2369 = vmatpush1.msra.mxu0 0.0
    %2370 = vmatprep.subr.mxu0 0.0
    %2371 = vmatpush1.msra.mxu0 0.0
    %2372 = vmatprep.subr.mxu0 0.0
    %2373 = vmatpush1.msra.mxu0 0.0
    %2374 = vmatprep.subr.mxu0 0.0
    %2375 = vmatpush1.msra.mxu0 0.0
    %2376 = vmatprep.subr.mxu0 0.0
    %2377 = vmatpush1.msra.mxu0 0.0
    %2378 = vmatprep.subr.mxu0 0.0
    %2379 = vmatpush1.msra.mxu0 0.0
    %2380 = vmatprep.subr.mxu0 0.0
    %2381 = vmatpush1.msra.mxu0 0.0
    %2382 = vmatprep.subr.mxu0 0.0
    %2383 = vmatpush1.msra.mxu0 0.0
    %2384 = vmatprep.subr.mxu0 0.0
    %2385 = vmatpush1.msra.mxu0 0.0
    %2386 = vmatprep.subr.mxu0 0.0
    %2387 = vmatpush1.msra.mxu0 0.0
    %2388 = vmatprep.subr.mxu0 0.0
    %2389 = vmatpush1.msra.mxu0 0.0
    %2390 = vmatprep.subr.mxu0 0.0
    %2391 = vmatpush1.msra.mxu0 0.0
    %2392 = vmatprep.subr.mxu0 0.0
    %2393 = vmatpush1.msra.mxu0 0.0
    %2394 = vmatprep.mubr.f32.mxu0 0.0
    %2395 = vmatmul.mubr.f32.gmra.mrb[0].mxu0 %v2328
    %v2396 = vpop.f32.mrb[0].mxu0
    %v2397 = vadd.f32 0.0, %v2396
    %v2398 = vpop.f32.mrb[0].mxu0
    %2399 = vdwg.mxu0
    %2400 = vrot.lane.b32.xlu0 %v276, 48
    %v2401 = vpop.permute.xlu0 %2400
    %v2404 = vsel %vm282, %v1706, 0
    %2406 = vmatprep.subr.mxu0 0.0
    %2407 = vmatpush1.msra.mxu0 %v2401
    %2408 = vmatprep.subr.mxu0 0.0
    %2409 = vmatpush1.msra.mxu0 0.0
    %2410 = vmatprep.subr.mxu0 0.0
    %2411 = vmatpush1.msra.mxu0 0.0
    %2412 = vmatprep.subr.mxu0 0.0
    %2413 = vmatpush1.msra.mxu0 0.0
    %2414 = vmatprep.subr.mxu0 0.0
    %2415 = vmatpush1.msra.mxu0 0.0
    %2416 = vmatprep.subr.mxu0 0.0
    %2417 = vmatpush1.msra.mxu0 0.0
    %2418 = vmatprep.subr.mxu0 0.0
    %2419 = vmatpush1.msra.mxu0 0.0
    %2420 = vmatprep.subr.mxu0 0.0
    %2421 = vmatpush1.msra.mxu0 0.0
    %2422 = vmatprep.subr.mxu0 0.0
    %2423 = vmatpush1.msra.mxu0 0.0
    %2424 = vmatprep.subr.mxu0 0.0
    %2425 = vmatpush1.msra.mxu0 0.0
    %2426 = vmatprep.subr.mxu0 0.0
    %2427 = vmatpush1.msra.mxu0 0.0
    %2428 = vmatprep.subr.mxu0 0.0
    %2429 = vmatpush1.msra.mxu0 0.0
    %2430 = vmatprep.subr.mxu0 0.0
    %2431 = vmatpush1.msra.mxu0 0.0
    %2432 = vmatprep.subr.mxu0 0.0
    %2433 = vmatpush1.msra.mxu0 0.0
    %2434 = vmatprep.subr.mxu0 0.0
    %2435 = vmatpush1.msra.mxu0 0.0
    %2436 = vmatprep.subr.mxu0 0.0
    %2437 = vmatpush1.msra.mxu0 0.0
    %2438 = vmatprep.subr.mxu0 0.0
    %2439 = vmatpush1.msra.mxu0 0.0
    %2440 = vmatprep.subr.mxu0 0.0
    %2441 = vmatpush1.msra.mxu0 0.0
    %2442 = vmatprep.subr.mxu0 0.0
    %2443 = vmatpush1.msra.mxu0 0.0
    %2444 = vmatprep.subr.mxu0 0.0
    %2445 = vmatpush1.msra.mxu0 0.0
    %2446 = vmatprep.subr.mxu0 0.0
    %2447 = vmatpush1.msra.mxu0 0.0
    %2448 = vmatprep.subr.mxu0 0.0
    %2449 = vmatpush1.msra.mxu0 0.0
    %2450 = vmatprep.subr.mxu0 0.0
    %2451 = vmatpush1.msra.mxu0 0.0
    %2452 = vmatprep.subr.mxu0 0.0
    %2453 = vmatpush1.msra.mxu0 0.0
    %2454 = vmatprep.subr.mxu0 0.0
    %2455 = vmatpush1.msra.mxu0 0.0
    %2456 = vmatprep.subr.mxu0 0.0
    %2457 = vmatpush1.msra.mxu0 0.0
    %2458 = vmatprep.subr.mxu0 0.0
    %2459 = vmatpush1.msra.mxu0 0.0
    %2460 = vmatprep.subr.mxu0 0.0
    %2461 = vmatpush1.msra.mxu0 0.0
    %2462 = vmatprep.subr.mxu0 0.0
    %2463 = vmatpush1.msra.mxu0 0.0
    %2464 = vmatprep.subr.mxu0 0.0
    %2465 = vmatpush1.msra.mxu0 0.0
    %2466 = vmatprep.subr.mxu0 0.0
    %2467 = vmatpush1.msra.mxu0 0.0
    %2468 = vmatprep.subr.mxu0 0.0
    %2469 = vmatpush1.msra.mxu0 0.0
    %2470 = vmatprep.mubr.f32.mxu0 0.0
    %2471 = vmatmul.mubr.f32.gmra.mrb[0].mxu0 %v2404
    %v2472 = vpop.f32.mrb[0].mxu0
    %v2473 = vadd.f32 0.0, %v2472
    %v2474 = vpop.f32.mrb[0].mxu0
    %2475 = vdwg.mxu0
    %2476 = vrot.lane.b32.xlu0 %v277, 48
    %v2477 = vpop.permute.xlu0 %2476
    %v2480 = vsel %vm282, %v1710, 0
    %2482 = vmatprep.subr.mxu0 0.0
    %2483 = vmatpush1.msra.mxu0 %v2477
    %2484 = vmatprep.subr.mxu0 0.0
    %2485 = vmatpush1.msra.mxu0 0.0
    %2486 = vmatprep.subr.mxu0 0.0
    %2487 = vmatpush1.msra.mxu0 0.0
    %2488 = vmatprep.subr.mxu0 0.0
    %2489 = vmatpush1.msra.mxu0 0.0
    %2490 = vmatprep.subr.mxu0 0.0
    %2491 = vmatpush1.msra.mxu0 0.0
    %2492 = vmatprep.subr.mxu0 0.0
    %2493 = vmatpush1.msra.mxu0 0.0
    %2494 = vmatprep.subr.mxu0 0.0
    %2495 = vmatpush1.msra.mxu0 0.0
    %2496 = vmatprep.subr.mxu0 0.0
    %2497 = vmatpush1.msra.mxu0 0.0
    %2498 = vmatprep.subr.mxu0 0.0
    %2499 = vmatpush1.msra.mxu0 0.0
    %2500 = vmatprep.subr.mxu0 0.0
    %2501 = vmatpush1.msra.mxu0 0.0
    %2502 = vmatprep.subr.mxu0 0.0
    %2503 = vmatpush1.msra.mxu0 0.0
    %2504 = vmatprep.subr.mxu0 0.0
    %2505 = vmatpush1.msra.mxu0 0.0
    %2506 = vmatprep.subr.mxu0 0.0
    %2507 = vmatpush1.msra.mxu0 0.0
    %2508 = vmatprep.subr.mxu0 0.0
    %2509 = vmatpush1.msra.mxu0 0.0
    %2510 = vmatprep.subr.mxu0 0.0
    %2511 = vmatpush1.msra.mxu0 0.0
    %2512 = vmatprep.subr.mxu0 0.0
    %2513 = vmatpush1.msra.mxu0 0.0
    %2514 = vmatprep.subr.mxu0 0.0
    %2515 = vmatpush1.msra.mxu0 0.0
    %2516 = vmatprep.subr.mxu0 0.0
    %2517 = vmatpush1.msra.mxu0 0.0
    %2518 = vmatprep.subr.mxu0 0.0
    %2519 = vmatpush1.msra.mxu0 0.0
    %2520 = vmatprep.subr.mxu0 0.0
    %2521 = vmatpush1.msra.mxu0 0.0
    %2522 = vmatprep.subr.mxu0 0.0
    %2523 = vmatpush1.msra.mxu0 0.0
    %2524 = vmatprep.subr.mxu0 0.0
    %2525 = vmatpush1.msra.mxu0 0.0
    %2526 = vmatprep.subr.mxu0 0.0
    %2527 = vmatpush1.msra.mxu0 0.0
    %2528 = vmatprep.subr.mxu0 0.0
    %2529 = vmatpush1.msra.mxu0 0.0
    %2530 = vmatprep.subr.mxu0 0.0
    %2531 = vmatpush1.msra.mxu0 0.0
    %2532 = vmatprep.subr.mxu0 0.0
    %2533 = vmatpush1.msra.mxu0 0.0
    %2534 = vmatprep.subr.mxu0 0.0
    %2535 = vmatpush1.msra.mxu0 0.0
    %2536 = vmatprep.subr.mxu0 0.0
    %2537 = vmatpush1.msra.mxu0 0.0
    %2538 = vmatprep.subr.mxu0 0.0
    %2539 = vmatpush1.msra.mxu0 0.0
    %2540 = vmatprep.subr.mxu0 0.0
    %2541 = vmatpush1.msra.mxu0 0.0
    %2542 = vmatprep.subr.mxu0 0.0
    %2543 = vmatpush1.msra.mxu0 0.0
    %2544 = vmatprep.subr.mxu0 0.0
    %2545 = vmatpush1.msra.mxu0 0.0
    %2546 = vmatprep.mubr.f32.mxu0 0.0
    %2547 = vmatmul.mubr.f32.gmra.mrb[0].mxu0 %v2480
    %v2548 = vpop.f32.mrb[0].mxu0
    %v2549 = vadd.f32 0.0, %v2548
    %v2550 = vpop.f32.mrb[0].mxu0
    %2551 = vdwg.mxu0
    %2552 = vrot.lane.b32.xlu0 %v278, 48
    %v2553 = vpop.permute.xlu0 %2552
    %v2556 = vsel %vm282, %v1714, 0
    %2558 = vmatprep.subr.mxu0 0.0
    %2559 = vmatpush1.msra.mxu0 %v2553
    %2560 = vmatprep.subr.mxu0 0.0
    %2561 = vmatpush1.msra.mxu0 0.0
    %2562 = vmatprep.subr.mxu0 0.0
    %2563 = vmatpush1.msra.mxu0 0.0
    %2564 = vmatprep.subr.mxu0 0.0
    %2565 = vmatpush1.msra.mxu0 0.0
    %2566 = vmatprep.subr.mxu0 0.0
    %2567 = vmatpush1.msra.mxu0 0.0
    %2568 = vmatprep.subr.mxu0 0.0
    %2569 = vmatpush1.msra.mxu0 0.0
    %2570 = vmatprep.subr.mxu0 0.0
    %2571 = vmatpush1.msra.mxu0 0.0
    %2572 = vmatprep.subr.mxu0 0.0
    %2573 = vmatpush1.msra.mxu0 0.0
    %2574 = vmatprep.subr.mxu0 0.0
    %2575 = vmatpush1.msra.mxu0 0.0
    %2576 = vmatprep.subr.mxu0 0.0
    %2577 = vmatpush1.msra.mxu0 0.0
    %2578 = vmatprep.subr.mxu0 0.0
    %2579 = vmatpush1.msra.mxu0 0.0
    %2580 = vmatprep.subr.mxu0 0.0
    %2581 = vmatpush1.msra.mxu0 0.0
    %2582 = vmatprep.subr.mxu0 0.0
    %2583 = vmatpush1.msra.mxu0 0.0
    %2584 = vmatprep.subr.mxu0 0.0
    %2585 = vmatpush1.msra.mxu0 0.0
    %2586 = vmatprep.subr.mxu0 0.0
    %2587 = vmatpush1.msra.mxu0 0.0
    %2588 = vmatprep.subr.mxu0 0.0
    %2589 = vmatpush1.msra.mxu0 0.0
    %2590 = vmatprep.subr.mxu0 0.0
    %2591 = vmatpush1.msra.mxu0 0.0
    %2592 = vmatprep.subr.mxu0 0.0
    %2593 = vmatpush1.msra.mxu0 0.0
    %2594 = vmatprep.subr.mxu0 0.0
    %2595 = vmatpush1.msra.mxu0 0.0
    %2596 = vmatprep.subr.mxu0 0.0
    %2597 = vmatpush1.msra.mxu0 0.0
    %2598 = vmatprep.subr.mxu0 0.0
    %2599 = vmatpush1.msra.mxu0 0.0
    %2600 = vmatprep.subr.mxu0 0.0
    %2601 = vmatpush1.msra.mxu0 0.0
    %2602 = vmatprep.subr.mxu0 0.0
    %2603 = vmatpush1.msra.mxu0 0.0
    %2604 = vmatprep.subr.mxu0 0.0
    %2605 = vmatpush1.msra.mxu0 0.0
    %2606 = vmatprep.subr.mxu0 0.0
    %2607 = vmatpush1.msra.mxu0 0.0
    %2608 = vmatprep.subr.mxu0 0.0
    %2609 = vmatpush1.msra.mxu0 0.0
    %2610 = vmatprep.subr.mxu0 0.0
    %2611 = vmatpush1.msra.mxu0 0.0
    %2612 = vmatprep.subr.mxu0 0.0
    %2613 = vmatpush1.msra.mxu0 0.0
    %2614 = vmatprep.subr.mxu0 0.0
    %2615 = vmatpush1.msra.mxu0 0.0
    %2616 = vmatprep.subr.mxu0 0.0
    %2617 = vmatpush1.msra.mxu0 0.0
    %2618 = vmatprep.subr.mxu0 0.0
    %2619 = vmatpush1.msra.mxu0 0.0
    %2620 = vmatprep.subr.mxu0 0.0
    %2621 = vmatpush1.msra.mxu0 0.0
    %2622 = vmatprep.mubr.f32.mxu0 0.0
    %2623 = vmatmul.mubr.f32.gmra.mrb[0].mxu0 %v2556
    %v2624 = vpop.f32.mrb[0].mxu0
    %v2625 = vadd.f32 0.0, %v2624
    %v2626 = vpop.f32.mrb[0].mxu0
    %2627 = vdwg.mxu0
    %2628 = vrot.lane.b32.xlu0 %v275, 40
    %v2629 = vpop.permute.xlu0 %2628
    %v2632 = vsel %vm282, %v1703, 0
    %2634 = vmatprep.subr.mxu0 0.0
    %2635 = vmatpush1.msra.mxu0 %v2629
    %2636 = vmatprep.subr.mxu0 0.0
    %2637 = vmatpush1.msra.mxu0 0.0
    %2638 = vmatprep.subr.mxu0 0.0
    %2639 = vmatpush1.msra.mxu0 0.0
    %2640 = vmatprep.subr.mxu0 0.0
    %2641 = vmatpush1.msra.mxu0 0.0
    %2642 = vmatprep.subr.mxu0 0.0
    %2643 = vmatpush1.msra.mxu0 0.0
    %2644 = vmatprep.subr.mxu0 0.0
    %2645 = vmatpush1.msra.mxu0 0.0
    %2646 = vmatprep.subr.mxu0 0.0
    %2647 = vmatpush1.msra.mxu0 0.0
    %2648 = vmatprep.subr.mxu0 0.0
    %2649 = vmatpush1.msra.mxu0 0.0
    %2650 = vmatprep.subr.mxu0 0.0
    %2651 = vmatpush1.msra.mxu0 0.0
    %2652 = vmatprep.subr.mxu0 0.0
    %2653 = vmatpush1.msra.mxu0 0.0
    %2654 = vmatprep.subr.mxu0 0.0
    %2655 = vmatpush1.msra.mxu0 0.0
    %2656 = vmatprep.subr.mxu0 0.0
    %2657 = vmatpush1.msra.mxu0 0.0
    %2658 = vmatprep.subr.mxu0 0.0
    %2659 = vmatpush1.msra.mxu0 0.0
    %2660 = vmatprep.subr.mxu0 0.0
    %2661 = vmatpush1.msra.mxu0 0.0
    %2662 = vmatprep.subr.mxu0 0.0
    %2663 = vmatpush1.msra.mxu0 0.0
    %2664 = vmatprep.subr.mxu0 0.0
    %2665 = vmatpush1.msra.mxu0 0.0
    %2666 = vmatprep.subr.mxu0 0.0
    %2667 = vmatpush1.msra.mxu0 0.0
    %2668 = vmatprep.subr.mxu0 0.0
    %2669 = vmatpush1.msra.mxu0 0.0
    %2670 = vmatprep.subr.mxu0 0.0
    %2671 = vmatpush1.msra.mxu0 0.0
    %2672 = vmatprep.subr.mxu0 0.0
    %2673 = vmatpush1.msra.mxu0 0.0
    %2674 = vmatprep.subr.mxu0 0.0
    %2675 = vmatpush1.msra.mxu0 0.0
    %2676 = vmatprep.subr.mxu0 0.0
    %2677 = vmatpush1.msra.mxu0 0.0
    %2678 = vmatprep.subr.mxu0 0.0
    %2679 = vmatpush1.msra.mxu0 0.0
    %2680 = vmatprep.subr.mxu0 0.0
    %2681 = vmatpush1.msra.mxu0 0.0
    %2682 = vmatprep.subr.mxu0 0.0
    %2683 = vmatpush1.msra.mxu0 0.0
    %2684 = vmatprep.subr.mxu0 0.0
    %2685 = vmatpush1.msra.mxu0 0.0
    %2686 = vmatprep.subr.mxu0 0.0
    %2687 = vmatpush1.msra.mxu0 0.0
    %2688 = vmatprep.subr.mxu0 0.0
    %2689 = vmatpush1.msra.mxu0 0.0
    %2690 = vmatprep.subr.mxu0 0.0
    %2691 = vmatpush1.msra.mxu0 0.0
    %2692 = vmatprep.subr.mxu0 0.0
    %2693 = vmatpush1.msra.mxu0 0.0
    %2694 = vmatprep.subr.mxu0 0.0
    %2695 = vmatpush1.msra.mxu0 0.0
    %2696 = vmatprep.subr.mxu0 0.0
    %2697 = vmatpush1.msra.mxu0 0.0
    %2698 = vmatprep.mubr.f32.mxu0 0.0
    %2699 = vmatmul.mubr.f32.gmra.mrb[0].mxu0 %v2632
    %v2700 = vpop.f32.mrb[0].mxu0
    %v2701 = vadd.f32 0.0, %v2700
    %v2702 = vpop.f32.mrb[0].mxu0
    %2703 = vdwg.mxu0
    %2704 = vrot.lane.b32.xlu0 %v276, 40
    %v2705 = vpop.permute.xlu0 %2704
    %v2708 = vsel %vm282, %v1707, 0
    %2710 = vmatprep.subr.mxu0 0.0
    %2711 = vmatpush1.msra.mxu0 %v2705
    %2712 = vmatprep.subr.mxu0 0.0
    %2713 = vmatpush1.msra.mxu0 0.0
    %2714 = vmatprep.subr.mxu0 0.0
    %2715 = vmatpush1.msra.mxu0 0.0
    %2716 = vmatprep.subr.mxu0 0.0
    %2717 = vmatpush1.msra.mxu0 0.0
    %2718 = vmatprep.subr.mxu0 0.0
    %2719 = vmatpush1.msra.mxu0 0.0
    %2720 = vmatprep.subr.mxu0 0.0
    %2721 = vmatpush1.msra.mxu0 0.0
    %2722 = vmatprep.subr.mxu0 0.0
    %2723 = vmatpush1.msra.mxu0 0.0
    %2724 = vmatprep.subr.mxu0 0.0
    %2725 = vmatpush1.msra.mxu0 0.0
    %2726 = vmatprep.subr.mxu0 0.0
    %2727 = vmatpush1.msra.mxu0 0.0
    %2728 = vmatprep.subr.mxu0 0.0
    %2729 = vmatpush1.msra.mxu0 0.0
    %2730 = vmatprep.subr.mxu0 0.0
    %2731 = vmatpush1.msra.mxu0 0.0
    %2732 = vmatprep.subr.mxu0 0.0
    %2733 = vmatpush1.msra.mxu0 0.0
    %2734 = vmatprep.subr.mxu0 0.0
    %2735 = vmatpush1.msra.mxu0 0.0
    %2736 = vmatprep.subr.mxu0 0.0
    %2737 = vmatpush1.msra.mxu0 0.0
    %2738 = vmatprep.subr.mxu0 0.0
    %2739 = vmatpush1.msra.mxu0 0.0
    %2740 = vmatprep.subr.mxu0 0.0
    %2741 = vmatpush1.msra.mxu0 0.0
    %2742 = vmatprep.subr.mxu0 0.0
    %2743 = vmatpush1.msra.mxu0 0.0
    %2744 = vmatprep.subr.mxu0 0.0
    %2745 = vmatpush1.msra.mxu0 0.0
    %2746 = vmatprep.subr.mxu0 0.0
    %2747 = vmatpush1.msra.mxu0 0.0
    %2748 = vmatprep.subr.mxu0 0.0
    %2749 = vmatpush1.msra.mxu0 0.0
    %2750 = vmatprep.subr.mxu0 0.0
    %2751 = vmatpush1.msra.mxu0 0.0
    %2752 = vmatprep.subr.mxu0 0.0
    %2753 = vmatpush1.msra.mxu0 0.0
    %2754 = vmatprep.subr.mxu0 0.0
    %2755 = vmatpush1.msra.mxu0 0.0
    %2756 = vmatprep.subr.mxu0 0.0
    %2757 = vmatpush1.msra.mxu0 0.0
    %2758 = vmatprep.subr.mxu0 0.0
    %2759 = vmatpush1.msra.mxu0 0.0
    %2760 = vmatprep.subr.mxu0 0.0
    %2761 = vmatpush1.msra.mxu0 0.0
    %2762 = vmatprep.subr.mxu0 0.0
    %2763 = vmatpush1.msra.mxu0 0.0
    %2764 = vmatprep.subr.mxu0 0.0
    %2765 = vmatpush1.msra.mxu0 0.0
    %2766 = vmatprep.subr.mxu0 0.0
    %2767 = vmatpush1.msra.mxu0 0.0
    %2768 = vmatprep.subr.mxu0 0.0
    %2769 = vmatpush1.msra.mxu0 0.0
    %2770 = vmatprep.subr.mxu0 0.0
    %2771 = vmatpush1.msra.mxu0 0.0
    %2772 = vmatprep.subr.mxu0 0.0
    %2773 = vmatpush1.msra.mxu0 0.0
    %2774 = vmatprep.mubr.f32.mxu0 0.0
    %2775 = vmatmul.mubr.f32.gmra.mrb[0].mxu0 %v2708
    %v2776 = vpop.f32.mrb[0].mxu0
    %v2777 = vadd.f32 0.0, %v2776
    %v2778 = vpop.f32.mrb[0].mxu0
    %2779 = vdwg.mxu0
    %2780 = vrot.lane.b32.xlu0 %v277, 40
    %v2781 = vpop.permute.xlu0 %2780
    %v2784 = vsel %vm282, %v1711, 0
    %2786 = vmatprep.subr.mxu0 0.0
    %2787 = vmatpush1.msra.mxu0 %v2781
    %2788 = vmatprep.subr.mxu0 0.0
    %2789 = vmatpush1.msra.mxu0 0.0
    %2790 = vmatprep.subr.mxu0 0.0
    %2791 = vmatpush1.msra.mxu0 0.0
    %2792 = vmatprep.subr.mxu0 0.0
    %2793 = vmatpush1.msra.mxu0 0.0
    %2794 = vmatprep.subr.mxu0 0.0
    %2795 = vmatpush1.msra.mxu0 0.0
    %2796 = vmatprep.subr.mxu0 0.0
    %2797 = vmatpush1.msra.mxu0 0.0
    %2798 = vmatprep.subr.mxu0 0.0
    %2799 = vmatpush1.msra.mxu0 0.0
    %2800 = vmatprep.subr.mxu0 0.0
    %2801 = vmatpush1.msra.mxu0 0.0
    %2802 = vmatprep.subr.mxu0 0.0
    %2803 = vmatpush1.msra.mxu0 0.0
    %2804 = vmatprep.subr.mxu0 0.0
    %2805 = vmatpush1.msra.mxu0 0.0
    %2806 = vmatprep.subr.mxu0 0.0
    %2807 = vmatpush1.msra.mxu0 0.0
    %2808 = vmatprep.subr.mxu0 0.0
    %2809 = vmatpush1.msra.mxu0 0.0
    %2810 = vmatprep.subr.mxu0 0.0
    %2811 = vmatpush1.msra.mxu0 0.0
    %2812 = vmatprep.subr.mxu0 0.0
    %2813 = vmatpush1.msra.mxu0 0.0
    %2814 = vmatprep.subr.mxu0 0.0
    %2815 = vmatpush1.msra.mxu0 0.0
    %2816 = vmatprep.subr.mxu0 0.0
    %2817 = vmatpush1.msra.mxu0 0.0
    %2818 = vmatprep.subr.mxu0 0.0
    %2819 = vmatpush1.msra.mxu0 0.0
    %2820 = vmatprep.subr.mxu0 0.0
    %2821 = vmatpush1.msra.mxu0 0.0
    %2822 = vmatprep.subr.mxu0 0.0
    %2823 = vmatpush1.msra.mxu0 0.0
    %2824 = vmatprep.subr.mxu0 0.0
    %2825 = vmatpush1.msra.mxu0 0.0
    %2826 = vmatprep.subr.mxu0 0.0
    %2827 = vmatpush1.msra.mxu0 0.0
    %2828 = vmatprep.subr.mxu0 0.0
    %2829 = vmatpush1.msra.mxu0 0.0
    %2830 = vmatprep.subr.mxu0 0.0
    %2831 = vmatpush1.msra.mxu0 0.0
    %2832 = vmatprep.subr.mxu0 0.0
    %2833 = vmatpush1.msra.mxu0 0.0
    %2834 = vmatprep.subr.mxu0 0.0
    %2835 = vmatpush1.msra.mxu0 0.0
    %2836 = vmatprep.subr.mxu0 0.0
    %2837 = vmatpush1.msra.mxu0 0.0
    %2838 = vmatprep.subr.mxu0 0.0
    %2839 = vmatpush1.msra.mxu0 0.0
    %2840 = vmatprep.subr.mxu0 0.0
    %2841 = vmatpush1.msra.mxu0 0.0
    %2842 = vmatprep.subr.mxu0 0.0
    %2843 = vmatpush1.msra.mxu0 0.0
    %2844 = vmatprep.subr.mxu0 0.0
    %2845 = vmatpush1.msra.mxu0 0.0
    %2846 = vmatprep.subr.mxu0 0.0
    %2847 = vmatpush1.msra.mxu0 0.0
    %2848 = vmatprep.subr.mxu0 0.0
    %2849 = vmatpush1.msra.mxu0 0.0
    %2850 = vmatprep.mubr.f32.mxu0 0.0
    %2851 = vmatmul.mubr.f32.gmra.mrb[0].mxu0 %v2784
    %v2852 = vpop.f32.mrb[0].mxu0
    %v2853 = vadd.f32 0.0, %v2852
    %v2854 = vpop.f32.mrb[0].mxu0
    %2855 = vdwg.mxu0
    %2856 = vrot.lane.b32.xlu0 %v278, 40
    %v2857 = vpop.permute.xlu0 %2856
    %v2860 = vsel %vm282, %v1715, 0
    %2862 = vmatprep.subr.mxu0 0.0
    %2863 = vmatpush1.msra.mxu0 %v2857
    %2864 = vmatprep.subr.mxu0 0.0
    %2865 = vmatpush1.msra.mxu0 0.0
    %2866 = vmatprep.subr.mxu0 0.0
    %2867 = vmatpush1.msra.mxu0 0.0
    %2868 = vmatprep.subr.mxu0 0.0
    %2869 = vmatpush1.msra.mxu0 0.0
    %2870 = vmatprep.subr.mxu0 0.0
    %2871 = vmatpush1.msra.mxu0 0.0
    %2872 = vmatprep.subr.mxu0 0.0
    %2873 = vmatpush1.msra.mxu0 0.0
    %2874 = vmatprep.subr.mxu0 0.0
    %2875 = vmatpush1.msra.mxu0 0.0
    %2876 = vmatprep.subr.mxu0 0.0
    %2877 = vmatpush1.msra.mxu0 0.0
    %2878 = vmatprep.subr.mxu0 0.0
    %2879 = vmatpush1.msra.mxu0 0.0
    %2880 = vmatprep.subr.mxu0 0.0
    %2881 = vmatpush1.msra.mxu0 0.0
    %2882 = vmatprep.subr.mxu0 0.0
    %2883 = vmatpush1.msra.mxu0 0.0
    %2884 = vmatprep.subr.mxu0 0.0
    %2885 = vmatpush1.msra.mxu0 0.0
    %2886 = vmatprep.subr.mxu0 0.0
    %2887 = vmatpush1.msra.mxu0 0.0
    %2888 = vmatprep.subr.mxu0 0.0
    %2889 = vmatpush1.msra.mxu0 0.0
    %2890 = vmatprep.subr.mxu0 0.0
    %2891 = vmatpush1.msra.mxu0 0.0
    %2892 = vmatprep.subr.mxu0 0.0
    %2893 = vmatpush1.msra.mxu0 0.0
    %2894 = vmatprep.subr.mxu0 0.0
    %2895 = vmatpush1.msra.mxu0 0.0
    %2896 = vmatprep.subr.mxu0 0.0
    %2897 = vmatpush1.msra.mxu0 0.0
    %2898 = vmatprep.subr.mxu0 0.0
    %2899 = vmatpush1.msra.mxu0 0.0
    %2900 = vmatprep.subr.mxu0 0.0
    %2901 = vmatpush1.msra.mxu0 0.0
    %2902 = vmatprep.subr.mxu0 0.0
    %2903 = vmatpush1.msra.mxu0 0.0
    %2904 = vmatprep.subr.mxu0 0.0
    %2905 = vmatpush1.msra.mxu0 0.0
    %2906 = vmatprep.subr.mxu0 0.0
    %2907 = vmatpush1.msra.mxu0 0.0
    %2908 = vmatprep.subr.mxu0 0.0
    %2909 = vmatpush1.msra.mxu0 0.0
    %2910 = vmatprep.subr.mxu0 0.0
    %2911 = vmatpush1.msra.mxu0 0.0
    %2912 = vmatprep.subr.mxu0 0.0
    %2913 = vmatpush1.msra.mxu0 0.0
    %2914 = vmatprep.subr.mxu0 0.0
    %2915 = vmatpush1.msra.mxu0 0.0
    %2916 = vmatprep.subr.mxu0 0.0
    %2917 = vmatpush1.msra.mxu0 0.0
    %2918 = vmatprep.subr.mxu0 0.0
    %2919 = vmatpush1.msra.mxu0 0.0
    %2920 = vmatprep.subr.mxu0 0.0
    %2921 = vmatpush1.msra.mxu0 0.0
    %2922 = vmatprep.subr.mxu0 0.0
    %2923 = vmatpush1.msra.mxu0 0.0
    %2924 = vmatprep.subr.mxu0 0.0
    %2925 = vmatpush1.msra.mxu0 0.0
    %2926 = vmatprep.mubr.f32.mxu0 0.0
    %2927 = vmatmul.mubr.f32.gmra.mrb[0].mxu0 %v2860
    %v2928 = vpop.f32.mrb[0].mxu0
    %v2929 = vadd.f32 0.0, %v2928
    %v2930 = vpop.f32.mrb[0].mxu0
    %2931 = vdwg.mxu0
    %2936 = vrot.lane.b32.xlu0 %v2093, 8
    %v2937 = vpop.permute.xlu0 %2936
    %2938 = vrot.lane.b32.xlu0 %v2169, 8
    %v2939 = vpop.permute.xlu0 %2938
    %2940 = vrot.lane.b32.xlu0 %v2245, 8
    %v2941 = vpop.permute.xlu0 %2940
    %2942 = vrot.lane.b32.xlu0 %v2321, 8
    %v2943 = vpop.permute.xlu0 %2942
    %2952 = vrot.lane.b32.xlu0 %v2397, 16
    %v2953 = vpop.permute.xlu0 %2952
    %2954 = vrot.lane.b32.xlu0 %v2473, 16
    %v2955 = vpop.permute.xlu0 %2954
    %2956 = vrot.lane.b32.xlu0 %v2549, 16
    %v2957 = vpop.permute.xlu0 %2956
    %2958 = vrot.lane.b32.xlu0 %v2625, 16
    %v2959 = vpop.permute.xlu0 %2958
    %2968 = vrot.lane.b32.xlu0 %v2701, 24
    %v2969 = vpop.permute.xlu0 %2968
    %2970 = vrot.lane.b32.xlu0 %v2777, 24
    %v2971 = vpop.permute.xlu0 %2970
    %2972 = vrot.lane.b32.xlu0 %v2853, 24
    %v2973 = vpop.permute.xlu0 %2972
    %2974 = vrot.lane.b32.xlu0 %v2929, 24
    %v2975 = vpop.permute.xlu0 %2974
    %v2980 = vsel %vm282, %v1789, %v2937
    %v2981 = vsel %vm282, %v1865, %v2939
    %v2982 = vsel %vm282, %v1941, %v2941
    %v2983 = vsel %vm282, %v2017, %v2943
    %vm2984 = vcmask 130048
    %v2985 = vsel %vm2984, %v2980, %v2953
    %v2986 = vsel %vm2984, %v2981, %v2955
    %v2987 = vsel %vm2984, %v2982, %v2957
    %v2988 = vsel %vm2984, %v2983, %v2959
    %vm2989 = vcmask 195584
    %v2990 = vsel %vm2989, %v2985, %v2969
    %v2991 = vsel %vm2989, %v2986, %v2971
    %v2992 = vsel %vm2989, %v2987, %v2973
    %v2993 = vsel %vm2989, %v2988, %v2975
    %v2994 = vld [vmem:[#allocation2 + $0x80] sm:$0xff]
    %v2995 = vld [vmem:[#allocation2 + $0x88] sm:$0xff]
    %v2996 = vld [vmem:[#allocation2 + $0x90] sm:$0xff]
    %v2997 = vld [vmem:[#allocation2 + $0x98] sm:$0xff]
    %v2998 = vlaneseq
    %v2999 = vshrl.u32 %v2998, 7
    %v3000 = vsub.s32 1, %v2999
    %v3001 = vrot.slane %v31, %v3000
    %vm3002 = vcmask 261120
    %v3004 = vsel %vm3002, %v2990, 0
    %v3007 = vsel %vm3002, %v2991, 0
    %v3010 = vsel %vm3002, %v2992, 0
    %v3013 = vsel %vm3002, %v2993, 0
    %3015 = vmatprep.subr.mxu0 0.0
    %3016 = vmatpush1.msra.mxu0 %v2994
    %3017 = vmatprep.subr.mxu0 0.0
    %3018 = vmatpush1.msra.mxu0 %v2995
    %3019 = vmatprep.subr.mxu0 0.0
    %3020 = vmatpush1.msra.mxu0 %v2996
    %3021 = vmatprep.subr.mxu0 0.0
    %3022 = vmatpush1.msra.mxu0 %v2997
    %3023 = vmatprep.subr.mxu0 0.0
    %3024 = vmatpush1.msra.mxu0 0.0
    %3025 = vmatprep.subr.mxu0 0.0
    %3026 = vmatpush1.msra.mxu0 0.0
    %3027 = vmatprep.subr.mxu0 0.0
    %3028 = vmatpush1.msra.mxu0 0.0
    %3029 = vmatprep.subr.mxu0 0.0
    %3030 = vmatpush1.msra.mxu0 0.0
    %3031 = vmatprep.subr.mxu0 0.0
    %3032 = vmatpush1.msra.mxu0 0.0
    %3033 = vmatprep.subr.mxu0 0.0
    %3034 = vmatpush1.msra.mxu0 0.0
    %3035 = vmatprep.subr.mxu0 0.0
    %3036 = vmatpush1.msra.mxu0 0.0
    %3037 = vmatprep.subr.mxu0 0.0
    %3038 = vmatpush1.msra.mxu0 0.0
    %3039 = vmatprep.subr.mxu0 0.0
    %3040 = vmatpush1.msra.mxu0 0.0
    %3041 = vmatprep.subr.mxu0 0.0
    %3042 = vmatpush1.msra.mxu0 0.0
    %3043 = vmatprep.subr.mxu0 0.0
    %3044 = vmatpush1.msra.mxu0 0.0
    %3045 = vmatprep.subr.mxu0 0.0
    %3046 = vmatpush1.msra.mxu0 0.0
    %3047 = vmatprep.subr.mxu0 0.0
    %3048 = vmatpush1.msra.mxu0 0.0
    %3049 = vmatprep.subr.mxu0 0.0
    %3050 = vmatpush1.msra.mxu0 0.0
    %3051 = vmatprep.subr.mxu0 0.0
    %3052 = vmatpush1.msra.mxu0 0.0
    %3053 = vmatprep.subr.mxu0 0.0
    %3054 = vmatpush1.msra.mxu0 0.0
    %3055 = vmatprep.subr.mxu0 0.0
    %3056 = vmatpush1.msra.mxu0 0.0
    %3057 = vmatprep.subr.mxu0 0.0
    %3058 = vmatpush1.msra.mxu0 0.0
    %3059 = vmatprep.subr.mxu0 0.0
    %3060 = vmatpush1.msra.mxu0 0.0
    %3061 = vmatprep.subr.mxu0 0.0
    %3062 = vmatpush1.msra.mxu0 0.0
    %3063 = vmatprep.subr.mxu0 0.0
    %3064 = vmatpush1.msra.mxu0 0.0
    %3065 = vmatprep.subr.mxu0 0.0
    %3066 = vmatpush1.msra.mxu0 0.0
    %3067 = vmatprep.subr.mxu0 0.0
    %3068 = vmatpush1.msra.mxu0 0.0
    %3069 = vmatprep.subr.mxu0 0.0
    %3070 = vmatpush1.msra.mxu0 0.0
    %3071 = vmatprep.subr.mxu0 0.0
    %3072 = vmatpush1.msra.mxu0 0.0
    %3073 = vmatprep.subr.mxu0 0.0
    %3074 = vmatpush1.msra.mxu0 0.0
    %3075 = vmatprep.subr.mxu0 0.0
    %3076 = vmatpush1.msra.mxu0 0.0
    %3077 = vmatprep.subr.mxu0 0.0
    %3078 = vmatpush1.msra.mxu0 0.0
    %3079 = vmatprep.mubr.f32.mxu0 0.0
    %3080 = vmatmul.mubr.f32.gmra.mrb[0].mxu0 %v3004
    %v3081 = vpop.f32.mrb[0].mxu0
    %v3082 = vadd.f32 %v3001, %v3081
    %v3083 = vpop.f32.mrb[0].mxu0
    %3084 = vmatprep.mubr.f32.mxu0 0.0
    %3085 = vmatmul.mubr.f32.gmra.mrb[0].mxu0 %v3007
    %v3086 = vpop.f32.mrb[0].mxu0
    %v3087 = vadd.f32 %v3001, %v3086
    %v3088 = vpop.f32.mrb[0].mxu0
    %3089 = vmatprep.mubr.f32.mxu0 0.0
    %3090 = vmatmul.mubr.f32.gmra.mrb[0].mxu0 %v3010
    %v3091 = vpop.f32.mrb[0].mxu0
    %v3092 = vadd.f32 %v3001, %v3091
    %v3093 = vpop.f32.mrb[0].mxu0
    %3094 = vmatprep.mubr.f32.mxu0 0.0
    %3095 = vmatmul.mubr.f32.gmra.mrb[0].mxu0 %v3013
    %v3096 = vpop.f32.mrb[0].mxu0
    %v3097 = vadd.f32 %v3001, %v3096
    %v3098 = vpop.f32.mrb[0].mxu0
    %3099 = vdwg.mxu0
    %v3100 = vadd.f32 %v3082, %v263
    %v3101 = vadd.f32 %v3087, %v264
    %v3102 = vadd.f32 %v3092, %v265
    %v3103 = vadd.f32 %v3097, %v266
    %vm3104 = vcmp.lt.s32.totalorder %v39, 32
    %3105 = vadd.xlane.f32.xlu0 %v3100
    %v3106 = vpop.xlane.xlu0 %3105
    %3107 = vadd.xlane.f32.xlu0 %v3101
    %v3108 = vpop.xlane.xlu0 %3107
    %3109 = vadd.xlane.f32.xlu0 %v3102
    %v3110 = vpop.xlane.xlu0 %3109
    %3111 = vadd.xlane.f32.xlu0 %v3103
    %v3112 = vpop.xlane.xlu0 %3111
    %v3113 = vmul.f32 %v3106, 0.03125
    %v3114 = vmul.f32 %v3108, 0.03125
    %v3115 = vmul.f32 %v3110, 0.03125
    %v3116 = vmul.f32 %v3112, 0.03125
    %v3117 = vsub.f32 %v3100, %v3113
    %v3118 = vsub.f32 %v3101, %v3114
    %v3119 = vsub.f32 %v3102, %v3115
    %v3120 = vsub.f32 %v3103, %v3116
    %v3121 = vsel %vm3104, 1, 0
    %vm3122 = vcmp.eq.s32.totalorder %v3121, 1
    %v3123 = vsel %vm3122, %v3117, 0.0
    %v3124 = vsel %vm3122, %v3118, 0.0
    %v3125 = vsel %vm3122, %v3119, 0.0
    %v3126 = vsel %vm3122, %v3120, 0.0
    %v3127 = vmul.f32 %v3123, %v3123
    %v3128 = vmul.f32 %v3124, %v3124
    %v3129 = vmul.f32 %v3125, %v3125
    %v3130 = vmul.f32 %v3126, %v3126
    %3131 = vadd.xlane.f32.xlu0 %v3127
    %v3132 = vpop.xlane.xlu0 %3131
    %3133 = vadd.xlane.f32.xlu0 %v3128
    %v3134 = vpop.xlane.xlu0 %3133
    %3135 = vadd.xlane.f32.xlu0 %v3129
    %v3136 = vpop.xlane.xlu0 %3135
    %3137 = vadd.xlane.f32.xlu0 %v3130
    %v3138 = vpop.xlane.xlu0 %3137
    %v3139 = vmul.f32 %v3132, 0.03125
    %v3140 = vmul.f32 %v3134, 0.03125
    %v3141 = vmul.f32 %v3136, 0.03125
    %v3142 = vmul.f32 %v3138, 0.03125
    %v3143 = vadd.f32 %v3139, 1e-05
    %v3144 = vadd.f32 %v3140, 1e-05
    %v3145 = vadd.f32 %v3141, 1e-05
    %v3146 = vadd.f32 %v3142, 1e-05
    %v3147 = vrsqrt.pop %v3143
    %v3148 = vrsqrt.pop %v3144
    %v3149 = vrsqrt.pop %v3145
    %v3150 = vrsqrt.pop %v3146
    %v3151 = vmul.f32 %v3123, %v3147
    %v3152 = vmul.f32 %v3124, %v3148
    %v3153 = vmul.f32 %v3125, %v3149
    %v3154 = vmul.f32 %v3126, %v3150
    %v3155 = vlaneseq
    %v3156 = vshrl.u32 %v3155, 7
    %v3157 = vsub.s32 2, %v3156
    %v3158 = vrot.slane %v31, %v3157
    %v3159 = vmul.f32 %v3151, %v3158
    %v3160 = vmul.f32 %v3152, %v3158
    %v3161 = vmul.f32 %v3153, %v3158
    %v3162 = vmul.f32 %v3154, %v3158
    %v3163 = vlaneseq
    %v3164 = vshrl.u32 %v3163, 7
    %v3165 = vsub.s32 3, %v3164
    %v3166 = vrot.slane %v31, %v3165
    %v3167 = vadd.f32 %v3159, %v3166
    %v3168 = vadd.f32 %v3160, %v3166
    %v3169 = vadd.f32 %v3161, %v3166
    %v3170 = vadd.f32 %v3162, %v3166
    %v3171 = vld [vmem:[#allocation2 + $0xa0] sm:$0xff]
    %v3172 = vld [vmem:[#allocation2 + $0xa8] sm:$0xff]
    %v3173 = vld [vmem:[#allocation2 + $0xb0] sm:$0xff]
    %v3174 = vld [vmem:[#allocation2 + $0xb8] sm:$0xff]
    %v3175 = vld [vmem:[#allocation2 + $0xc0] sm:$0xff]
    %v3176 = vld [vmem:[#allocation2 + $0xc8] sm:$0xff]
    %v3177 = vld [vmem:[#allocation2 + $0xd0] sm:$0xff]
    %v3178 = vld [vmem:[#allocation2 + $0xd8] sm:$0xff]
    %v3179 = vld [vmem:[#allocation2 + $0xe0] sm:$0xff]
    %v3180 = vld [vmem:[#allocation2 + $0xe8] sm:$0xff]
    %v3181 = vld [vmem:[#allocation2 + $0xf0] sm:$0xff]
    %v3182 = vld [vmem:[#allocation2 + $0xf8] sm:$0xff]
    %v3183 = vld [vmem:[#allocation2 + $0x100] sm:$0xff]
    %v3184 = vld [vmem:[#allocation2 + $0x108] sm:$0xff]
    %v3185 = vld [vmem:[#allocation2 + $0x110] sm:$0xff]
    %v3186 = vld [vmem:[#allocation2 + $0x118] sm:$0xff]
    %v3187 = vlaneseq
    %v3188 = vshrl.u32 %v3187, 7
    %v3189 = vsub.s32 4, %v3188
    %v3190 = vrot.slane %v31, %v3189
    %3191 = vmatprep.subr.mxu0 0.0
    %3192 = vmatpush1.msra.mxu0 %v3171
    %3193 = vmatprep.subr.mxu0 0.0
    %3194 = vmatpush1.msra.mxu0 %v3172
    %3195 = vmatprep.subr.mxu0 0.0
    %3196 = vmatpush1.msra.mxu0 %v3173
    %3197 = vmatprep.subr.mxu0 0.0
    %3198 = vmatpush1.msra.mxu0 %v3174
    %3199 = vmatprep.subr.mxu0 0.0
    %3200 = vmatpush1.msra.mxu0 %v3175
    %3201 = vmatprep.subr.mxu0 0.0
    %3202 = vmatpush1.msra.mxu0 %v3176
    %3203 = vmatprep.subr.mxu0 0.0
    %3204 = vmatpush1.msra.mxu0 %v3177
    %3205 = vmatprep.subr.mxu0 0.0
    %3206 = vmatpush1.msra.mxu0 %v3178
    %3207 = vmatprep.subr.mxu0 0.0
    %3208 = vmatpush1.msra.mxu0 %v3179
    %3209 = vmatprep.subr.mxu0 0.0
    %3210 = vmatpush1.msra.mxu0 %v3180
    %3211 = vmatprep.subr.mxu0 0.0
    %3212 = vmatpush1.msra.mxu0 %v3181
    %3213 = vmatprep.subr.mxu0 0.0
    %3214 = vmatpush1.msra.mxu0 %v3182
    %3215 = vmatprep.subr.mxu0 0.0
    %3216 = vmatpush1.msra.mxu0 %v3183
    %3217 = vmatprep.subr.mxu0 0.0
    %3218 = vmatpush1.msra.mxu0 %v3184
    %3219 = vmatprep.subr.mxu0 0.0
    %3220 = vmatpush1.msra.mxu0 %v3185
    %3221 = vmatprep.subr.mxu0 0.0
    %3222 = vmatpush1.msra.mxu0 %v3186
    %3223 = vmatprep.subr.mxu0 0.0
    %3224 = vmatpush1.msra.mxu0 0.0
    %3225 = vmatprep.subr.mxu0 0.0
    %3226 = vmatpush1.msra.mxu0 0.0
    %3227 = vmatprep.subr.mxu0 0.0
    %3228 = vmatpush1.msra.mxu0 0.0
    %3229 = vmatprep.subr.mxu0 0.0
    %3230 = vmatpush1.msra.mxu0 0.0
    %3231 = vmatprep.subr.mxu0 0.0
    %3232 = vmatpush1.msra.mxu0 0.0
    %3233 = vmatprep.subr.mxu0 0.0
    %3234 = vmatpush1.msra.mxu0 0.0
    %3235 = vmatprep.subr.mxu0 0.0
    %3236 = vmatpush1.msra.mxu0 0.0
    %3237 = vmatprep.subr.mxu0 0.0
    %3238 = vmatpush1.msra.mxu0 0.0
    %3239 = vmatprep.subr.mxu0 0.0
    %3240 = vmatpush1.msra.mxu0 0.0
    %3241 = vmatprep.subr.mxu0 0.0
    %3242 = vmatpush1.msra.mxu0 0.0
    %3243 = vmatprep.subr.mxu0 0.0
    %3244 = vmatpush1.msra.mxu0 0.0
    %3245 = vmatprep.subr.mxu0 0.0
    %3246 = vmatpush1.msra.mxu0 0.0
    %3247 = vmatprep.subr.mxu0 0.0
    %3248 = vmatpush1.msra.mxu0 0.0
    %3249 = vmatprep.subr.mxu0 0.0
    %3250 = vmatpush1.msra.mxu0 0.0
    %3251 = vmatprep.subr.mxu0 0.0
    %3252 = vmatpush1.msra.mxu0 0.0
    %3253 = vmatprep.subr.mxu0 0.0
    %3254 = vmatpush1.msra.mxu0 0.0
    %3255 = vmatprep.mubr.f32.mxu0 0.0
    %3256 = vmatmul.mubr.f32.gmra.mrb[0].mxu0 %v3167
    %v3257 = vpop.f32.mrb[0].mxu0
    %v3258 = vadd.f32 %v3190, %v3257
    %v3259 = vpop.f32.mrb[0].mxu0
    %3260 = vmatprep.mubr.f32.mxu0 0.0
    %3261 = vmatmul.mubr.f32.gmra.mrb[0].mxu0 %v3168
    %v3262 = vpop.f32.mrb[0].mxu0
    %v3263 = vadd.f32 %v3190, %v3262
    %v3264 = vpop.f32.mrb[0].mxu0
    %3265 = vmatprep.mubr.f32.mxu0 0.0
    %3266 = vmatmul.mubr.f32.gmra.mrb[0].mxu0 %v3169
    %v3267 = vpop.f32.mrb[0].mxu0
    %v3268 = vadd.f32 %v3190, %v3267
    %v3269 = vpop.f32.mrb[0].mxu0
    %3270 = vmatprep.mubr.f32.mxu0 0.0
    %3271 = vmatmul.mubr.f32.gmra.mrb[0].mxu0 %v3170
    %v3272 = vpop.f32.mrb[0].mxu0
    %v3273 = vadd.f32 %v3190, %v3272
    %v3274 = vpop.f32.mrb[0].mxu0
    %3275 = vdwg.mxu0
    %v3276 = vmax.f32 %v3258, 0.0
    %v3277 = vmax.f32 %v3263, 0.0
    %v3278 = vmax.f32 %v3268, 0.0
    %v3279 = vmax.f32 %v3273, 0.0
    %v3280 = vld [vmem:[#allocation2 + $0x120] sm:$0xff]
    %v3281 = vld [vmem:[#allocation2 + $0x128] sm:$0xff]
    %v3282 = vld [vmem:[#allocation2 + $0x130] sm:$0xff]
    %v3283 = vld [vmem:[#allocation2 + $0x138] sm:$0xff]
    %v3284 = vld [vmem:[#allocation2 + $0x140] sm:$0xff]
    %v3285 = vld [vmem:[#allocation2 + $0x148] sm:$0xff]
    %v3286 = vld [vmem:[#allocation2 + $0x150] sm:$0xff]
    %v3287 = vld [vmem:[#allocation2 + $0x158] sm:$0xff]
    %v3288 = vld [vmem:[#allocation2 + $0x160] sm:$0xff]
    %v3289 = vld [vmem:[#allocation2 + $0x168] sm:$0xff]
    %v3290 = vld [vmem:[#allocation2 + $0x170] sm:$0xff]
    %v3291 = vld [vmem:[#allocation2 + $0x178] sm:$0xff]
    %v3292 = vld [vmem:[#allocation2 + $0x180] sm:$0xff]
    %v3293 = vld [vmem:[#allocation2 + $0x188] sm:$0xff]
    %v3294 = vld [vmem:[#allocation2 + $0x190] sm:$0xff]
    %v3295 = vld [vmem:[#allocation2 + $0x198] sm:$0xff]
    %v3296 = vlaneseq
    %v3297 = vshrl.u32 %v3296, 7
    %v3298 = vsub.s32 5, %v3297
    %v3299 = vrot.slane %v31, %v3298
    %3300 = vmatprep.subr.mxu0 0.0
    %3301 = vmatpush1.msra.mxu0 %v3280
    %3302 = vmatprep.subr.mxu0 0.0
    %3303 = vmatpush1.msra.mxu0 %v3281
    %3304 = vmatprep.subr.mxu0 0.0
    %3305 = vmatpush1.msra.mxu0 %v3282
    %3306 = vmatprep.subr.mxu0 0.0
    %3307 = vmatpush1.msra.mxu0 %v3283
    %3308 = vmatprep.subr.mxu0 0.0
    %3309 = vmatpush1.msra.mxu0 %v3284
    %3310 = vmatprep.subr.mxu0 0.0
    %3311 = vmatpush1.msra.mxu0 %v3285
    %3312 = vmatprep.subr.mxu0 0.0
    %3313 = vmatpush1.msra.mxu0 %v3286
    %3314 = vmatprep.subr.mxu0 0.0
    %3315 = vmatpush1.msra.mxu0 %v3287
    %3316 = vmatprep.subr.mxu0 0.0
    %3317 = vmatpush1.msra.mxu0 %v3288
    %3318 = vmatprep.subr.mxu0 0.0
    %3319 = vmatpush1.msra.mxu0 %v3289
    %3320 = vmatprep.subr.mxu0 0.0
    %3321 = vmatpush1.msra.mxu0 %v3290
    %3322 = vmatprep.subr.mxu0 0.0
    %3323 = vmatpush1.msra.mxu0 %v3291
    %3324 = vmatprep.subr.mxu0 0.0
    %3325 = vmatpush1.msra.mxu0 %v3292
    %3326 = vmatprep.subr.mxu0 0.0
    %3327 = vmatpush1.msra.mxu0 %v3293
    %3328 = vmatprep.subr.mxu0 0.0
    %3329 = vmatpush1.msra.mxu0 %v3294
    %3330 = vmatprep.subr.mxu0 0.0
    %3331 = vmatpush1.msra.mxu0 %v3295
    %3332 = vmatprep.subr.mxu0 0.0
    %3333 = vmatpush1.msra.mxu0 0.0
    %3334 = vmatprep.subr.mxu0 0.0
    %3335 = vmatpush1.msra.mxu0 0.0
    %3336 = vmatprep.subr.mxu0 0.0
    %3337 = vmatpush1.msra.mxu0 0.0
    %3338 = vmatprep.subr.mxu0 0.0
    %3339 = vmatpush1.msra.mxu0 0.0
    %3340 = vmatprep.subr.mxu0 0.0
    %3341 = vmatpush1.msra.mxu0 0.0
    %3342 = vmatprep.subr.mxu0 0.0
    %3343 = vmatpush1.msra.mxu0 0.0
    %3344 = vmatprep.subr.mxu0 0.0
    %3345 = vmatpush1.msra.mxu0 0.0
    %3346 = vmatprep.subr.mxu0 0.0
    %3347 = vmatpush1.msra.mxu0 0.0
    %3348 = vmatprep.subr.mxu0 0.0
    %3349 = vmatpush1.msra.mxu0 0.0
    %3350 = vmatprep.subr.mxu0 0.0
    %3351 = vmatpush1.msra.mxu0 0.0
    %3352 = vmatprep.subr.mxu0 0.0
    %3353 = vmatpush1.msra.mxu0 0.0
    %3354 = vmatprep.subr.mxu0 0.0
    %3355 = vmatpush1.msra.mxu0 0.0
    %3356 = vmatprep.subr.mxu0 0.0
    %3357 = vmatpush1.msra.mxu0 0.0
    %3358 = vmatprep.subr.mxu0 0.0
    %3359 = vmatpush1.msra.mxu0 0.0
    %3360 = vmatprep.subr.mxu0 0.0
    %3361 = vmatpush1.msra.mxu0 0.0
    %3362 = vmatprep.subr.mxu0 0.0
    %3363 = vmatpush1.msra.mxu0 0.0
    %3364 = vmatprep.mubr.f32.mxu0 0.0
    %3365 = vmatmul.mubr.f32.gmra.mrb[0].mxu0 %v3276
    %v3366 = vpop.f32.mrb[0].mxu0
    %v3367 = vadd.f32 %v3299, %v3366
    %v3368 = vpop.f32.mrb[0].mxu0
    %3369 = vmatprep.mubr.f32.mxu0 0.0
    %3370 = vmatmul.mubr.f32.gmra.mrb[0].mxu0 %v3277
    %v3371 = vpop.f32.mrb[0].mxu0
    %v3372 = vadd.f32 %v3299, %v3371
    %v3373 = vpop.f32.mrb[0].mxu0
    %3374 = vmatprep.mubr.f32.mxu0 0.0
    %3375 = vmatmul.mubr.f32.gmra.mrb[0].mxu0 %v3278
    %v3376 = vpop.f32.mrb[0].mxu0
    %v3377 = vadd.f32 %v3299, %v3376
    %v3378 = vpop.f32.mrb[0].mxu0
    %3379 = vmatprep.mubr.f32.mxu0 0.0
    %3380 = vmatmul.mubr.f32.gmra.mrb[0].mxu0 %v3279
    %v3381 = vpop.f32.mrb[0].mxu0
    %v3382 = vadd.f32 %v3299, %v3381
    %v3383 = vpop.f32.mrb[0].mxu0
    %3384 = vdwg.mxu0
    %3385 = vrot.lane.b32.xlu0 %v3377, 64
    %v3386 = vpop.permute.xlu0 %3385
    %3387 = vrot.lane.b32.xlu0 %v3382, 64
    %v3388 = vpop.permute.xlu0 %3387
    %v3389 = vadd.f32 %v3367, %v3386
    %v3390 = vadd.f32 %v3372, %v3388
    %3391 = vst [vmem:[%s4] sm:$0xff] %v3389
    %3392 = vst [vmem:[%s4 + $0x8] sm:$0xff] %v3390
    // Predicated region
    $region22: #{language_model_forward.1} parent=1 // pred_check
      _
    $region23: #{language_model_forward.1} parent=1 // pred_check_branch
      %3394 = sbr.rel (0) target = $region25
    $region24: #{language_model_forward.1} parent=1 // pred_region
      _
    $region25: #{language_model_forward.1} parent=1 // pred_fallthru
      _
    // Predicated region
    $region26: #{language_model_forward.1} parent=1 // pred_check
      _
    $region27: #{language_model_forward.1} parent=1 // pred_check_branch
      %3396 = sbr.rel (0) target = $region29
    $region28: #{language_model_forward.1} parent=1 // pred_region
      _
    $region29: #{language_model_forward.1} parent=1 // pred_fallthru
      _
    %3397 = vsyncpa [#allocation3], 1

</llo_original>
